<compile_context>
chip_gen: v7x
topology: tpu7x:2x2x1
jax: 0.10.0
libtpu: 0.0.40
codegen_flags: <defaults>
</compile_context>

<pallas_src>
import functools

import numpy as np

import jax
import jax.numpy as jnp
from jax import lax
from jax.experimental import pallas as pl
from jax.experimental.pallas import tpu as pltpu


# Leading-axis layout of act_pack: [a0, a2, a0_perm(11), a4_shift(11), a3_shift(11)]
_A0_IDX = 0
_A2_IDX = 1
_A0P_OFF = 2
_A4S_OFF = 13
_A3S_OFF = 24


# ----------------------------------------------------------------------------
# Fused kernel: total resident data < ~300 KB, single gridless invocation.
# ----------------------------------------------------------------------------
def _total_loss_kernel(cls_ref, sd_ref, cp_ref, act_ref, out_ref, *,
                       num_s, sigma, e_theta, e_alpha, e_g, theta, inv_temp):
    f32 = jnp.float32

    # ------------- ActionLoss: BCE(video_scores, label / label.sum) ---------
    cls_pack = cls_ref[...].astype(f32)          # (2, B, NC)
    scores = cls_pack[0]
    label = cls_pack[1]
    lab = label / jnp.sum(label, axis=1, keepdims=True)
    log_p = jnp.maximum(jnp.log(scores), -100.0)            # PyTorch BCELoss clamp
    log_1mp = jnp.maximum(jnp.log(1.0 - scores), -100.0)
    loss_cls = -jnp.mean(lab * log_p + (1.0 - lab) * log_1mp)

    # ------------- SniCoLoss: two InfoNCE branches in one body --------------
    eps2 = 1e-24                                              # (F.normalize eps)^2

    def nce(pa, pb, neg):
        q = jnp.mean(pa, axis=1)                              # (N, C)
        k = jnp.mean(pb, axis=1)                              # (N, C)
        qn = q * lax.rsqrt(jnp.maximum(jnp.sum(q * q, axis=1, keepdims=True), eps2))
        kn = k * lax.rsqrt(jnp.maximum(jnp.sum(k * k, axis=1, keepdims=True), eps2))
        # permute(0,2,1) + normalize(dim=1) == normalize over the channel axis
        negn = neg * lax.rsqrt(
            jnp.maximum(jnp.sum(neg * neg, axis=2, keepdims=True), eps2))
        l_pos = jnp.sum(qn * kn, axis=1, keepdims=True) * inv_temp       # (N, 1)
        # tiny (N,T,C) contraction — keep on the VPU, not the MXU
        l_neg = jnp.sum(qn[:, None, :] * negn, axis=2) * inv_temp        # (N, T)
        # CrossEntropy with target class 0 == mean(logsumexp - logits[:, 0])
        m = jnp.maximum(jnp.max(l_neg, axis=1, keepdims=True), l_pos)
        sumexp = jnp.exp(l_pos - m) + jnp.sum(jnp.exp(l_neg - m), axis=1,
                                              keepdims=True)
        lse = jnp.log(sumexp) + m
        return jnp.mean(lse - l_pos)

    cp = cp_ref[...].astype(f32)                              # (4, B, T, C)
    ha, ea, hb, eb = cp[0], cp[1], cp[2], cp[3]
    loss_snico = nce(ha, ea, eb) + nce(hb, eb, ea)

    # ------------- RelationLoss ----------------------------------------------
    # Lists were stacked in the wrapper (equal shapes), so
    # sum_k mean((1-s_k)^2)/len == mean over the whole stack.
    sd = sd_ref[...].astype(f32)                              # (NS+ND, B, DS)
    s = sd[:num_s]
    d = sd[num_s:]
    loss_rel = jnp.mean((1.0 - s) * (1.0 - s)) + jnp.mean(d * d)

    # ------------- ActELoss_v3 ------------------------------------------------
    a0 = act_ref[_A0_IDX].astype(f32)            # (B, L)  actioness (detached)
    a2 = act_ref[_A2_IDX].astype(f32)            # (B, L)  actioness_2
    bsz = a0.shape[0]
    inv_2s2 = 1.0 / (2.0 * sigma * sigma)

    # pass 1: max_w[b, i] = max_{j'} ( rep[b, j'] - a4[b, i + j'] )
    # rep[b, j'] = a0[(11*b + j') % B, i]  (the repeat(1,11).reshape quirk),
    # pre-stacked as a0_perm / a4_shift slabs — contiguous leading-axis loads.
    def p1_body(jp, mw):
        return jnp.maximum(
            mw, act_ref[_A0P_OFF + jp].astype(f32) - act_ref[_A4S_OFF + jp].astype(f32))

    mw0 = act_ref[_A0P_OFF].astype(f32) - act_ref[_A4S_OFF].astype(f32)
    mw = lax.fori_loop(1, 11, p1_body, mw0, unroll=True)      # (B, L)
    g = e_g * mw * mw                                         # (B, L)

    # pass 2: elementwise (B, L) accumulator over the 11 taps; one final sum.
    def p2_body(j, acc):
        a4s = act_ref[_A4S_OFF + j].astype(f32)               # (B, L)
        a3s = act_ref[_A3S_OFF + j].astype(f32)               # (B, L)
        diff0 = a0 - a4s
        # ||a0[:, i] - a4[:, i+j]||_2^2 over the batch dim (scalar per (i, j))
        d2 = jnp.sum(diff0 * diff0, axis=0, keepdims=True)    # (1, L)
        # relu(d2 - e_g*mw^2) + e_g*mw^2  ==  max(d2, e_g*mw^2)
        w = jnp.exp(-jnp.maximum(d2, g) * inv_2s2)            # (B, L)
        return acc + w * jnp.abs(a2 - a3s)

    acc = lax.fori_loop(0, 11, p2_body, jnp.zeros_like(a0), unroll=True)
    term = jnp.sum(acc) / bsz                  # == sum_{i,j} mean_b( w * |.| )

    dl = a0 - a2
    l2sq = jnp.sum(dl * dl) / bsz              # == mean_b ||a0 - a2||_2^2
    loss_act = (term + e_theta * l2sq) * e_alpha

    # ------------- totals ------------------------------------------------------
    out_ref[0] = loss_cls
    out_ref[1] = loss_snico
    out_ref[2] = loss_act
    out_ref[3] = loss_rel
    out_ref[4] = loss_cls + 0.01 * loss_snico + loss_act + theta * loss_rel


# ----------------------------------------------------------------------------
# Wrapper
# ----------------------------------------------------------------------------
def _pad_edges(x):
    # Matches the reference assignment order: 6 copies of x[:, 0] on the left,
    # x in the middle, 5 effective copies of x[:, -1] on the right (the
    # [:, 6:-5] write overwrites index L+5 with x[:, -1]); total length L + 11.
    left = jnp.repeat(x[:, :1], 6, axis=1)
    right = jnp.repeat(x[:, -1:], 5, axis=1)
    return jnp.concatenate([left, x, right], axis=1)


def total_loss_13(video_scores, label, contrast_pairs, re_s_scores, re_d_scores,
                  actioness, actioness_2, *, sigma, e_theta, e_alpha, e_g,
                  theta, temperature=0.07):
    f32 = jnp.float32
    a0 = jax.lax.stop_gradient(actioness).astype(f32)     # .detach()
    a2 = actioness_2.astype(f32)
    bsz, seq_len = a0.shape
    # NOTE: the PyTorch reference hard-codes `for i in range(750)`; the kernel
    # covers the full sequence, so call it with seq_len == 750.
    a4 = _pad_edges(a0)                                   # (B, L + 11)
    a3 = _pad_edges(a2)                                   # (B, L + 11)

    # Pre-shifted tap views (11, B, L): shift[j] = padded[:, j:j+L].  Done once
    # in the wrapper so every in-kernel tap is a 128-aligned contiguous load.
    a4_sh = jnp.stack([a4[:, j:j + seq_len] for j in range(11)], axis=0)
    a3_sh = jnp.stack([a3[:, j:j + seq_len] for j in range(11)], axis=0)

    # rep[b, j] = a0[(11*b + j) % B, i]  — the repeat(1,11).reshape(B,11) quirk,
    # materialized once so the kernel needs no cross-sublane gathers.
    perm_idx = (11 * jnp.arange(bsz)[None, :] + jnp.arange(11)[:, None]) % bsz
    a0_perm = jnp.take(a0, perm_idx, axis=0)              # (11, B, L)

    # One (35, B, L) slab: [a0, a2, a0_perm, a4_shifts, a3_shifts]
    act_pack = jnp.concatenate([a0[None], a2[None], a0_perm, a4_sh, a3_sh], axis=0)

    cls_pack = jnp.stack([video_scores.astype(f32), label.astype(f32)], axis=0)
    s_stack = jnp.stack(re_s_scores, axis=0).astype(f32)
    d_stack = jnp.stack(re_d_scores, axis=0).astype(f32)
    sd_pack = jnp.concatenate([s_stack, d_stack], axis=0)
    cp_pack = jnp.stack([contrast_pairs["HA"], contrast_pairs["EA"],
                         contrast_pairs["HB"], contrast_pairs["EB"]],
                        axis=0).astype(f32)

    inputs = (cls_pack, sd_pack, cp_pack, act_pack)
    num_s = len(re_s_scores)

    in_bytes = sum(int(np.prod(x.shape)) * x.dtype.itemsize for x in inputs)
    cost = pl.CostEstimate(
        flops=int(30 * 11 * bsz * seq_len
                  + 100 * video_scores.size
                  + 60 * sum(contrast_pairs[k].size for k in contrast_pairs)),
        transcendentals=int(11 * bsz * seq_len + 4 * video_scores.size
                            + 4 * contrast_pairs["HA"].size),
        bytes_accessed=int(in_bytes + 5 * 4),
    )

    out = pl.pallas_call(
        functools.partial(_total_loss_kernel, num_s=num_s,
                          sigma=float(sigma), e_theta=float(e_theta),
                          e_alpha=float(e_alpha), e_g=float(e_g),
                          theta=float(theta),
                          inv_temp=float(1.0 / temperature)),
        out_shape=jax.ShapeDtypeStruct((5,), jnp.float32),
        in_specs=[pl.BlockSpec(memory_space=pltpu.MemorySpace.VMEM)] * len(inputs),
        out_specs=pl.BlockSpec(memory_space=pltpu.MemorySpace.SMEM),
        cost_estimate=cost,
    )(*inputs)

    loss_cls, loss_snico, loss_act, loss_rel, loss_total = (
        out[0], out[1], out[2], out[3], out[4])
    loss_dict = {"Loss/Action": loss_cls, "Loss/SniCo": loss_snico,
                 "Loss/ActE": loss_act, "Loss/Relation": loss_rel,
                 "Loss/Total": loss_total}
    return loss_total, loss_dict


# ----------------------------------------------------------------------------
# Literal numpy reference (mirrors the PyTorch loops) for a sanity check.
# ----------------------------------------------------------------------------
def _reference(video_scores, label, cp, re_s, re_d, actioness, actioness_2,
               *, sigma, e_theta, e_alpha, e_g, theta):
    g = lambda x: np.asarray(jax.device_get(x), dtype=np.float64)
    vs, lab = g(video_scores), g(label)
    labn = lab / lab.sum(axis=1, keepdims=True)
    bce = -np.mean(labn * np.log(vs) + (1.0 - labn) * np.log(1.0 - vs))

    def nce(pa, pb, neg, T=0.07):
        q, k = pa.mean(1), pb.mean(1)
        qn = q / np.linalg.norm(q, axis=1, keepdims=True)
        kn = k / np.linalg.norm(k, axis=1, keepdims=True)
        nn_ = neg / np.linalg.norm(neg, axis=2, keepdims=True)
        lp = np.sum(qn * kn, axis=1) / T
        ln = np.einsum("nc,ntc->nt", qn, nn_) / T
        logits = np.concatenate([lp[:, None], ln], axis=1)
        m = logits.max(axis=1)
        lse = np.log(np.exp(logits - m[:, None]).sum(axis=1)) + m
        return np.mean(lse - lp)

    snico = (nce(g(cp["HA"]), g(cp["EA"]), g(cp["EB"]))
             + nce(g(cp["HB"]), g(cp["EB"]), g(cp["EA"])))

    rel = 0.0
    for s in re_s:
        rel += np.mean((1.0 - g(s)) ** 2) / len(re_s)
    for d in re_d:
        rel += np.mean(g(d) ** 2) / len(re_d)

    a0, a2 = g(actioness), g(actioness_2)
    B = a0.shape[0]

    def pad(x):
        return np.concatenate([np.repeat(x[:, :1], 6, axis=1), x,
                               np.repeat(x[:, -1:], 5, axis=1)], axis=1)

    a4, a3 = pad(a0), pad(a2)
    loss = 0.0
    for i in range(750):
        rep = np.tile(a0[:, i], 11).reshape(B, 11)         # .repeat(1,11).reshape
        max_w = (rep - a4[:, i:i + 11]).max(axis=1)        # (B,), indep. of j
        for j in range(11):
            nrm = np.linalg.norm(a0[:, i] - a4[:, i + j])  # scalar (over batch)
            w = np.exp(-(np.maximum(nrm * nrm - e_g * max_w * max_w, 0.0)
                         + e_g * max_w * max_w) / 2.0 / sigma / sigma)
            loss += np.mean(w * np.abs(a2[:, i] - a3[:, i + j]))
    loss += np.mean(e_theta * np.sum((a0 - a2) ** 2, axis=1))
    acte = loss * e_alpha

    return bce + 0.01 * snico + acte + theta * rel


if __name__ == "__main__":
    # cfg (deterministic, synthetic)
    SIGMA, E_THETA, E_ALPHA, E_G, THETA = 1.0, 0.1, 5e-4, 0.5, 0.1

    B, NUM_CLASSES, T, C, L = 2, 20, 8, 32, 750
    NS = ND = 2
    DS = 16

    key = jax.random.PRNGKey(0)
    ks = jax.random.split(key, 12)

    video_scores = jax.nn.sigmoid(
        jax.random.normal(ks[0], (B, NUM_CLASSES), jnp.float32))
    label = (jax.random.uniform(ks[1], (B, NUM_CLASSES)) > 0.7).astype(jnp.float32)
    label = label.at[:, 0].set(1.0)  # ensure non-zero row sums

    contrast_pairs = {
        "HA": jax.random.normal(ks[2], (B, T, C), jnp.float32),
        "EA": jax.random.normal(ks[3], (B, T, C), jnp.float32),
        "HB": jax.random.normal(ks[4], (B, T, C), jnp.float32),
        "EB": jax.random.normal(ks[5], (B, T, C), jnp.float32),
    }

    re_s_scores = [jax.nn.sigmoid(jax.random.normal(ks[6 + i], (B, DS), jnp.float32))
                   for i in range(NS)]
    re_d_scores = [jax.nn.sigmoid(jax.random.normal(ks[8 + i], (B, DS), jnp.float32))
                   for i in range(ND)]

    actioness = jax.nn.sigmoid(jax.random.normal(ks[10], (B, L), jnp.float32))
    actioness_2 = jax.nn.sigmoid(jax.random.normal(ks[11], (B, L), jnp.float32))

    loss_total, loss_dict = total_loss_13(
        video_scores, label, contrast_pairs, re_s_scores, re_d_scores,
        actioness, actioness_2,
        sigma=SIGMA, e_theta=E_THETA, e_alpha=E_ALPHA, e_g=E_G, theta=THETA)
    loss_total = jax.block_until_ready(loss_total)

    ref = _reference(video_scores, label, contrast_pairs, re_s_scores,
                     re_d_scores, actioness, actioness_2, sigma=SIGMA,
                     e_theta=E_THETA, e_alpha=E_ALPHA, e_g=E_G, theta=THETA)
    assert np.isfinite(float(loss_total))
    assert abs(float(loss_total) - float(ref)) <= 2e-3 * max(1.0, abs(float(ref))), \
        (float(loss_total), float(ref))

    print("KERNEL_OK")
</pallas_src>

<mosaic_0001>
module attributes {stable_mosaic.version = 11 : i64} {
  func.func @_total_loss_kernel(%arg0: memref<2x2x20xf32, #tpu.memory_space<vmem>>, %arg1: memref<4x2x16xf32, #tpu.memory_space<vmem>>, %arg2: memref<4x2x8x32xf32, #tpu.memory_space<vmem>>, %arg3: memref<35x2x750xf32, #tpu.memory_space<vmem>>, %arg4: memref<5xf32, #tpu.memory_space<smem>>) attributes {dimension_semantics = [], scalar_prefetch = 0 : i64, scratch_operands = 0 : i64, tpu.core_type = #tpu.core_type<tc>} {
    %c0 = arith.constant 0 : index
    %c0_0 = arith.constant 0 : index
    %c0_1 = arith.constant 0 : index
    %0 = vector.load %arg0[%c0, %c0_0, %c0_1] : memref<2x2x20xf32, #tpu.memory_space<vmem>>, vector<2x2x20xf32>
    %1 = vector.extract_strided_slice %0 {offsets = [0, 0, 0], sizes = [1, 2, 20], strides = [1, 1, 1]} : vector<2x2x20xf32> to vector<1x2x20xf32>
    %2 = vector.shape_cast %1 : vector<1x2x20xf32> to vector<2x20xf32>
    %3 = vector.extract_strided_slice %0 {offsets = [1, 0, 0], sizes = [1, 2, 20], strides = [1, 1, 1]} : vector<2x2x20xf32> to vector<1x2x20xf32>
    %4 = vector.shape_cast %3 : vector<1x2x20xf32> to vector<2x20xf32>
    %cst = arith.constant dense<0.000000e+00> : vector<2xf32>
    %5 = vector.multi_reduction <add>, %4, %cst [1] : vector<2x20xf32> to vector<2xf32>
    %6 = vector.shape_cast %5 : vector<2xf32> to vector<2x1xf32>
    %7 = vector.broadcast %6 : vector<2x1xf32> to vector<2x20xf32>
    %8 = arith.divf %4, %7 : vector<2x20xf32>
    %9 = math.log %2 : vector<2x20xf32>
    %cst_2 = arith.constant -1.000000e+02 : f32
    %10 = vector.broadcast %cst_2 : f32 to vector<2x20xf32>
    %11 = arith.maximumf %9, %10 : vector<2x20xf32>
    %cst_3 = arith.constant 1.000000e+00 : f32
    %12 = vector.broadcast %cst_3 : f32 to vector<2x20xf32>
    %13 = arith.subf %12, %2 : vector<2x20xf32>
    %14 = math.log %13 : vector<2x20xf32>
    %cst_4 = arith.constant -1.000000e+02 : f32
    %15 = vector.broadcast %cst_4 : f32 to vector<2x20xf32>
    %16 = arith.maximumf %14, %15 : vector<2x20xf32>
    %17 = arith.mulf %8, %11 : vector<2x20xf32>
    %cst_5 = arith.constant 1.000000e+00 : f32
    %18 = vector.broadcast %cst_5 : f32 to vector<2x20xf32>
    %19 = arith.subf %18, %8 : vector<2x20xf32>
    %20 = arith.mulf %19, %16 : vector<2x20xf32>
    %21 = arith.addf %17, %20 : vector<2x20xf32>
    %22 = vector.shape_cast %21 : vector<2x20xf32> to vector<1x2x20xf32>
    %cst_6 = arith.constant dense<0.000000e+00> : vector<1xf32>
    %23 = vector.multi_reduction <add>, %22, %cst_6 [1, 2] : vector<1x2x20xf32> to vector<1xf32>
    %24 = vector.shape_cast %23 : vector<1xf32> to vector<1x1x1xf32>
    %25 = vector.extract %24[0, 0, 0] : f32 from vector<1x1x1xf32>
    %cst_7 = arith.constant 4.000000e+01 : f32
    %26 = arith.divf %25, %cst_7 : f32
    %cst_8 = arith.constant 0.000000e+00 : f32
    %27 = arith.subf %cst_8, %26 : f32
    %c0_9 = arith.constant 0 : index
    %c0_10 = arith.constant 0 : index
    %c0_11 = arith.constant 0 : index
    %c0_12 = arith.constant 0 : index
    %28 = vector.load %arg2[%c0_9, %c0_10, %c0_11, %c0_12] : memref<4x2x8x32xf32, #tpu.memory_space<vmem>>, vector<4x2x8x32xf32>
    %29 = vector.extract_strided_slice %28 {offsets = [0, 0, 0, 0], sizes = [1, 2, 8, 32], strides = [1, 1, 1, 1]} : vector<4x2x8x32xf32> to vector<1x2x8x32xf32>
    %30 = vector.shape_cast %29 : vector<1x2x8x32xf32> to vector<2x8x32xf32>
    %31 = vector.extract_strided_slice %28 {offsets = [1, 0, 0, 0], sizes = [1, 2, 8, 32], strides = [1, 1, 1, 1]} : vector<4x2x8x32xf32> to vector<1x2x8x32xf32>
    %32 = vector.shape_cast %31 : vector<1x2x8x32xf32> to vector<2x8x32xf32>
    %33 = vector.extract_strided_slice %28 {offsets = [2, 0, 0, 0], sizes = [1, 2, 8, 32], strides = [1, 1, 1, 1]} : vector<4x2x8x32xf32> to vector<1x2x8x32xf32>
    %34 = vector.shape_cast %33 : vector<1x2x8x32xf32> to vector<2x8x32xf32>
    %35 = vector.extract_strided_slice %28 {offsets = [3, 0, 0, 0], sizes = [1, 2, 8, 32], strides = [1, 1, 1, 1]} : vector<4x2x8x32xf32> to vector<1x2x8x32xf32>
    %36 = vector.shape_cast %35 : vector<1x2x8x32xf32> to vector<2x8x32xf32>
    %cst_13 = arith.constant dense<0.000000e+00> : vector<2x32xf32>
    %37 = vector.multi_reduction <add>, %30, %cst_13 [1] : vector<2x8x32xf32> to vector<2x32xf32>
    %cst_14 = arith.constant 8.000000e+00 : f32
    %38 = vector.broadcast %cst_14 : f32 to vector<2x32xf32>
    %39 = arith.divf %37, %38 : vector<2x32xf32>
    %cst_15 = arith.constant dense<0.000000e+00> : vector<2x32xf32>
    %40 = vector.multi_reduction <add>, %32, %cst_15 [1] : vector<2x8x32xf32> to vector<2x32xf32>
    %cst_16 = arith.constant 8.000000e+00 : f32
    %41 = vector.broadcast %cst_16 : f32 to vector<2x32xf32>
    %42 = arith.divf %40, %41 : vector<2x32xf32>
    %43 = arith.mulf %39, %39 : vector<2x32xf32>
    %cst_17 = arith.constant dense<0.000000e+00> : vector<2xf32>
    %44 = vector.multi_reduction <add>, %43, %cst_17 [1] : vector<2x32xf32> to vector<2xf32>
    %45 = vector.shape_cast %44 : vector<2xf32> to vector<2x1xf32>
    %cst_18 = arith.constant 1.000000e-24 : f32
    %46 = vector.broadcast %cst_18 : f32 to vector<2x1xf32>
    %47 = arith.maximumf %45, %46 : vector<2x1xf32>
    %48 = math.rsqrt %47 : vector<2x1xf32>
    %49 = vector.broadcast %48 : vector<2x1xf32> to vector<2x32xf32>
    %50 = arith.mulf %39, %49 : vector<2x32xf32>
    %51 = arith.mulf %42, %42 : vector<2x32xf32>
    %cst_19 = arith.constant dense<0.000000e+00> : vector<2xf32>
    %52 = vector.multi_reduction <add>, %51, %cst_19 [1] : vector<2x32xf32> to vector<2xf32>
    %53 = vector.shape_cast %52 : vector<2xf32> to vector<2x1xf32>
    %cst_20 = arith.constant 1.000000e-24 : f32
    %54 = vector.broadcast %cst_20 : f32 to vector<2x1xf32>
    %55 = arith.maximumf %53, %54 : vector<2x1xf32>
    %56 = math.rsqrt %55 : vector<2x1xf32>
    %57 = vector.broadcast %56 : vector<2x1xf32> to vector<2x32xf32>
    %58 = arith.mulf %42, %57 : vector<2x32xf32>
    %59 = arith.mulf %36, %36 : vector<2x8x32xf32>
    %cst_21 = arith.constant dense<0.000000e+00> : vector<2x8xf32>
    %60 = vector.multi_reduction <add>, %59, %cst_21 [2] : vector<2x8x32xf32> to vector<2x8xf32>
    %61 = vector.shape_cast %60 : vector<2x8xf32> to vector<2x8x1xf32>
    %cst_22 = arith.constant 1.000000e-24 : f32
    %62 = vector.broadcast %cst_22 : f32 to vector<2x8x1xf32>
    %63 = arith.maximumf %61, %62 : vector<2x8x1xf32>
    %64 = math.rsqrt %63 : vector<2x8x1xf32>
    %65 = vector.broadcast %64 : vector<2x8x1xf32> to vector<2x8x32xf32>
    %66 = arith.mulf %36, %65 : vector<2x8x32xf32>
    %67 = arith.mulf %50, %58 : vector<2x32xf32>
    %cst_23 = arith.constant dense<0.000000e+00> : vector<2xf32>
    %68 = vector.multi_reduction <add>, %67, %cst_23 [1] : vector<2x32xf32> to vector<2xf32>
    %69 = vector.shape_cast %68 : vector<2xf32> to vector<2x1xf32>
    %cst_24 = arith.constant 14.2857141 : f32
    %70 = vector.broadcast %cst_24 : f32 to vector<2x1xf32>
    %71 = arith.mulf %69, %70 : vector<2x1xf32>
    %72 = vector.shape_cast %50 : vector<2x32xf32> to vector<2x1x32xf32>
    %73 = vector.broadcast %72 : vector<2x1x32xf32> to vector<2x8x32xf32>
    %74 = arith.mulf %73, %66 : vector<2x8x32xf32>
    %cst_25 = arith.constant dense<0.000000e+00> : vector<2x8xf32>
    %75 = vector.multi_reduction <add>, %74, %cst_25 [2] : vector<2x8x32xf32> to vector<2x8xf32>
    %cst_26 = arith.constant 14.2857141 : f32
    %76 = vector.broadcast %cst_26 : f32 to vector<2x8xf32>
    %77 = arith.mulf %75, %76 : vector<2x8xf32>
    %cst_27 = arith.constant dense<0xFF800000> : vector<2xf32>
    %78 = vector.multi_reduction <maximumf>, %77, %cst_27 [1] : vector<2x8xf32> to vector<2xf32>
    %79 = vector.shape_cast %78 : vector<2xf32> to vector<2x1xf32>
    %80 = arith.maximumf %79, %71 : vector<2x1xf32>
    %81 = arith.subf %71, %80 : vector<2x1xf32>
    %82 = math.exp %81 : vector<2x1xf32>
    %83 = vector.broadcast %80 : vector<2x1xf32> to vector<2x8xf32>
    %84 = arith.subf %77, %83 : vector<2x8xf32>
    %85 = math.exp %84 : vector<2x8xf32>
    %cst_28 = arith.constant dense<0.000000e+00> : vector<2xf32>
    %86 = vector.multi_reduction <add>, %85, %cst_28 [1] : vector<2x8xf32> to vector<2xf32>
    %87 = vector.shape_cast %86 : vector<2xf32> to vector<2x1xf32>
    %88 = arith.addf %82, %87 : vector<2x1xf32>
    %89 = math.log %88 : vector<2x1xf32>
    %90 = arith.addf %89, %80 : vector<2x1xf32>
    %91 = arith.subf %90, %71 : vector<2x1xf32>
    %92 = vector.shape_cast %91 : vector<2x1xf32> to vector<1x2x1xf32>
    %cst_29 = arith.constant dense<0.000000e+00> : vector<1xf32>
    %93 = vector.multi_reduction <add>, %92, %cst_29 [1, 2] : vector<1x2x1xf32> to vector<1xf32>
    %94 = vector.shape_cast %93 : vector<1xf32> to vector<1x1x1xf32>
    %95 = vector.extract %94[0, 0, 0] : f32 from vector<1x1x1xf32>
    %cst_30 = arith.constant 2.000000e+00 : f32
    %96 = arith.divf %95, %cst_30 : f32
    %cst_31 = arith.constant dense<0.000000e+00> : vector<2x32xf32>
    %97 = vector.multi_reduction <add>, %34, %cst_31 [1] : vector<2x8x32xf32> to vector<2x32xf32>
    %cst_32 = arith.constant 8.000000e+00 : f32
    %98 = vector.broadcast %cst_32 : f32 to vector<2x32xf32>
    %99 = arith.divf %97, %98 : vector<2x32xf32>
    %cst_33 = arith.constant dense<0.000000e+00> : vector<2x32xf32>
    %100 = vector.multi_reduction <add>, %36, %cst_33 [1] : vector<2x8x32xf32> to vector<2x32xf32>
    %cst_34 = arith.constant 8.000000e+00 : f32
    %101 = vector.broadcast %cst_34 : f32 to vector<2x32xf32>
    %102 = arith.divf %100, %101 : vector<2x32xf32>
    %103 = arith.mulf %99, %99 : vector<2x32xf32>
    %cst_35 = arith.constant dense<0.000000e+00> : vector<2xf32>
    %104 = vector.multi_reduction <add>, %103, %cst_35 [1] : vector<2x32xf32> to vector<2xf32>
    %105 = vector.shape_cast %104 : vector<2xf32> to vector<2x1xf32>
    %cst_36 = arith.constant 1.000000e-24 : f32
    %106 = vector.broadcast %cst_36 : f32 to vector<2x1xf32>
    %107 = arith.maximumf %105, %106 : vector<2x1xf32>
    %108 = math.rsqrt %107 : vector<2x1xf32>
    %109 = vector.broadcast %108 : vector<2x1xf32> to vector<2x32xf32>
    %110 = arith.mulf %99, %109 : vector<2x32xf32>
    %111 = arith.mulf %102, %102 : vector<2x32xf32>
    %cst_37 = arith.constant dense<0.000000e+00> : vector<2xf32>
    %112 = vector.multi_reduction <add>, %111, %cst_37 [1] : vector<2x32xf32> to vector<2xf32>
    %113 = vector.shape_cast %112 : vector<2xf32> to vector<2x1xf32>
    %cst_38 = arith.constant 1.000000e-24 : f32
    %114 = vector.broadcast %cst_38 : f32 to vector<2x1xf32>
    %115 = arith.maximumf %113, %114 : vector<2x1xf32>
    %116 = math.rsqrt %115 : vector<2x1xf32>
    %117 = vector.broadcast %116 : vector<2x1xf32> to vector<2x32xf32>
    %118 = arith.mulf %102, %117 : vector<2x32xf32>
    %119 = arith.mulf %32, %32 : vector<2x8x32xf32>
    %cst_39 = arith.constant dense<0.000000e+00> : vector<2x8xf32>
    %120 = vector.multi_reduction <add>, %119, %cst_39 [2] : vector<2x8x32xf32> to vector<2x8xf32>
    %121 = vector.shape_cast %120 : vector<2x8xf32> to vector<2x8x1xf32>
    %cst_40 = arith.constant 1.000000e-24 : f32
    %122 = vector.broadcast %cst_40 : f32 to vector<2x8x1xf32>
    %123 = arith.maximumf %121, %122 : vector<2x8x1xf32>
    %124 = math.rsqrt %123 : vector<2x8x1xf32>
    %125 = vector.broadcast %124 : vector<2x8x1xf32> to vector<2x8x32xf32>
    %126 = arith.mulf %32, %125 : vector<2x8x32xf32>
    %127 = arith.mulf %110, %118 : vector<2x32xf32>
    %cst_41 = arith.constant dense<0.000000e+00> : vector<2xf32>
    %128 = vector.multi_reduction <add>, %127, %cst_41 [1] : vector<2x32xf32> to vector<2xf32>
    %129 = vector.shape_cast %128 : vector<2xf32> to vector<2x1xf32>
    %cst_42 = arith.constant 14.2857141 : f32
    %130 = vector.broadcast %cst_42 : f32 to vector<2x1xf32>
    %131 = arith.mulf %129, %130 : vector<2x1xf32>
    %132 = vector.shape_cast %110 : vector<2x32xf32> to vector<2x1x32xf32>
    %133 = vector.broadcast %132 : vector<2x1x32xf32> to vector<2x8x32xf32>
    %134 = arith.mulf %133, %126 : vector<2x8x32xf32>
    %cst_43 = arith.constant dense<0.000000e+00> : vector<2x8xf32>
    %135 = vector.multi_reduction <add>, %134, %cst_43 [2] : vector<2x8x32xf32> to vector<2x8xf32>
    %cst_44 = arith.constant 14.2857141 : f32
    %136 = vector.broadcast %cst_44 : f32 to vector<2x8xf32>
    %137 = arith.mulf %135, %136 : vector<2x8xf32>
    %cst_45 = arith.constant dense<0xFF800000> : vector<2xf32>
    %138 = vector.multi_reduction <maximumf>, %137, %cst_45 [1] : vector<2x8xf32> to vector<2xf32>
    %139 = vector.shape_cast %138 : vector<2xf32> to vector<2x1xf32>
    %140 = arith.maximumf %139, %131 : vector<2x1xf32>
    %141 = arith.subf %131, %140 : vector<2x1xf32>
    %142 = math.exp %141 : vector<2x1xf32>
    %143 = vector.broadcast %140 : vector<2x1xf32> to vector<2x8xf32>
    %144 = arith.subf %137, %143 : vector<2x8xf32>
    %145 = math.exp %144 : vector<2x8xf32>
    %cst_46 = arith.constant dense<0.000000e+00> : vector<2xf32>
    %146 = vector.multi_reduction <add>, %145, %cst_46 [1] : vector<2x8xf32> to vector<2xf32>
    %147 = vector.shape_cast %146 : vector<2xf32> to vector<2x1xf32>
    %148 = arith.addf %142, %147 : vector<2x1xf32>
    %149 = math.log %148 : vector<2x1xf32>
    %150 = arith.addf %149, %140 : vector<2x1xf32>
    %151 = arith.subf %150, %131 : vector<2x1xf32>
    %152 = vector.shape_cast %151 : vector<2x1xf32> to vector<1x2x1xf32>
    %cst_47 = arith.constant dense<0.000000e+00> : vector<1xf32>
    %153 = vector.multi_reduction <add>, %152, %cst_47 [1, 2] : vector<1x2x1xf32> to vector<1xf32>
    %154 = vector.shape_cast %153 : vector<1xf32> to vector<1x1x1xf32>
    %155 = vector.extract %154[0, 0, 0] : f32 from vector<1x1x1xf32>
    %cst_48 = arith.constant 2.000000e+00 : f32
    %156 = arith.divf %155, %cst_48 : f32
    %157 = arith.addf %96, %156 : f32
    %c0_49 = arith.constant 0 : index
    %c0_50 = arith.constant 0 : index
    %c0_51 = arith.constant 0 : index
    %158 = vector.load %arg1[%c0_49, %c0_50, %c0_51] : memref<4x2x16xf32, #tpu.memory_space<vmem>>, vector<4x2x16xf32>
    %159 = vector.extract_strided_slice %158 {offsets = [0, 0, 0], sizes = [2, 2, 16], strides = [1, 1, 1]} : vector<4x2x16xf32> to vector<2x2x16xf32>
    %160 = vector.extract_strided_slice %158 {offsets = [2, 0, 0], sizes = [2, 2, 16], strides = [1, 1, 1]} : vector<4x2x16xf32> to vector<2x2x16xf32>
    %cst_52 = arith.constant 1.000000e+00 : f32
    %161 = vector.broadcast %cst_52 : f32 to vector<2x2x16xf32>
    %162 = arith.subf %161, %159 : vector<2x2x16xf32>
    %cst_53 = arith.constant 1.000000e+00 : f32
    %163 = vector.broadcast %cst_53 : f32 to vector<2x2x16xf32>
    %164 = arith.subf %163, %159 : vector<2x2x16xf32>
    %165 = arith.mulf %162, %164 : vector<2x2x16xf32>
    %166 = vector.shape_cast %165 : vector<2x2x16xf32> to vector<1x2x2x16xf32>
    %cst_54 = arith.constant dense<0.000000e+00> : vector<1xf32>
    %167 = vector.multi_reduction <add>, %166, %cst_54 [1, 2, 3] : vector<1x2x2x16xf32> to vector<1xf32>
    %168 = vector.shape_cast %167 : vector<1xf32> to vector<1x1x1x1xf32>
    %169 = vector.extract %168[0, 0, 0, 0] : f32 from vector<1x1x1x1xf32>
    %cst_55 = arith.constant 6.400000e+01 : f32
    %170 = arith.divf %169, %cst_55 : f32
    %171 = arith.mulf %160, %160 : vector<2x2x16xf32>
    %172 = vector.shape_cast %171 : vector<2x2x16xf32> to vector<1x2x2x16xf32>
    %cst_56 = arith.constant dense<0.000000e+00> : vector<1xf32>
    %173 = vector.multi_reduction <add>, %172, %cst_56 [1, 2, 3] : vector<1x2x2x16xf32> to vector<1xf32>
    %174 = vector.shape_cast %173 : vector<1xf32> to vector<1x1x1x1xf32>
    %175 = vector.extract %174[0, 0, 0, 0] : f32 from vector<1x1x1x1xf32>
    %cst_57 = arith.constant 6.400000e+01 : f32
    %176 = arith.divf %175, %cst_57 : f32
    %177 = arith.addf %170, %176 : f32
    %c0_58 = arith.constant 0 : index
    %c0_59 = arith.constant 0 : index
    %c0_60 = arith.constant 0 : index
    %178 = vector.load %arg3[%c0_58, %c0_59, %c0_60] : memref<35x2x750xf32, #tpu.memory_space<vmem>>, vector<1x2x750xf32>
    %179 = vector.shape_cast %178 : vector<1x2x750xf32> to vector<2x750xf32>
    %c1 = arith.constant 1 : index
    %c0_61 = arith.constant 0 : index
    %c0_62 = arith.constant 0 : index
    %180 = vector.load %arg3[%c1, %c0_61, %c0_62] : memref<35x2x750xf32, #tpu.memory_space<vmem>>, vector<1x2x750xf32>
    %181 = vector.shape_cast %180 : vector<1x2x750xf32> to vector<2x750xf32>
    %c2 = arith.constant 2 : index
    %c0_63 = arith.constant 0 : index
    %c0_64 = arith.constant 0 : index
    %182 = vector.load %arg3[%c2, %c0_63, %c0_64] : memref<35x2x750xf32, #tpu.memory_space<vmem>>, vector<1x2x750xf32>
    %183 = vector.shape_cast %182 : vector<1x2x750xf32> to vector<2x750xf32>
    %c13 = arith.constant 13 : index
    %c0_65 = arith.constant 0 : index
    %c0_66 = arith.constant 0 : index
    %184 = vector.load %arg3[%c13, %c0_65, %c0_66] : memref<35x2x750xf32, #tpu.memory_space<vmem>>, vector<1x2x750xf32>
    %185 = vector.shape_cast %184 : vector<1x2x750xf32> to vector<2x750xf32>
    %186 = arith.subf %183, %185 : vector<2x750xf32>
    %c1_i32 = arith.constant 1 : i32
    %c2_i32 = arith.constant 2 : i32
    %187 = arith.addi %c2_i32, %c1_i32 : i32
    %188 = arith.index_cast %187 : i32 to index
    %c0_67 = arith.constant 0 : index
    %c0_68 = arith.constant 0 : index
    %189 = vector.load %arg3[%188, %c0_67, %c0_68] : memref<35x2x750xf32, #tpu.memory_space<vmem>>, vector<1x2x750xf32>
    %190 = vector.shape_cast %189 : vector<1x2x750xf32> to vector<2x750xf32>
    %c13_i32 = arith.constant 13 : i32
    %191 = arith.addi %c13_i32, %c1_i32 : i32
    %192 = arith.index_cast %191 : i32 to index
    %c0_69 = arith.constant 0 : index
    %c0_70 = arith.constant 0 : index
    %193 = vector.load %arg3[%192, %c0_69, %c0_70] : memref<35x2x750xf32, #tpu.memory_space<vmem>>, vector<1x2x750xf32>
    %194 = vector.shape_cast %193 : vector<1x2x750xf32> to vector<2x750xf32>
    %195 = arith.subf %190, %194 : vector<2x750xf32>
    %196 = arith.maximumf %186, %195 : vector<2x750xf32>
    %c2_i32_71 = arith.constant 2 : i32
    %c2_i32_72 = arith.constant 2 : i32
    %197 = arith.addi %c2_i32_72, %c2_i32_71 : i32
    %198 = arith.index_cast %197 : i32 to index
    %c0_73 = arith.constant 0 : index
    %c0_74 = arith.constant 0 : index
    %199 = vector.load %arg3[%198, %c0_73, %c0_74] : memref<35x2x750xf32, #tpu.memory_space<vmem>>, vector<1x2x750xf32>
    %200 = vector.shape_cast %199 : vector<1x2x750xf32> to vector<2x750xf32>
    %c13_i32_75 = arith.constant 13 : i32
    %201 = arith.addi %c13_i32_75, %c2_i32_71 : i32
    %202 = arith.index_cast %201 : i32 to index
    %c0_76 = arith.constant 0 : index
    %c0_77 = arith.constant 0 : index
    %203 = vector.load %arg3[%202, %c0_76, %c0_77] : memref<35x2x750xf32, #tpu.memory_space<vmem>>, vector<1x2x750xf32>
    %204 = vector.shape_cast %203 : vector<1x2x750xf32> to vector<2x750xf32>
    %205 = arith.subf %200, %204 : vector<2x750xf32>
    %206 = arith.maximumf %196, %205 : vector<2x750xf32>
    %c3_i32 = arith.constant 3 : i32
    %c2_i32_78 = arith.constant 2 : i32
    %207 = arith.addi %c2_i32_78, %c3_i32 : i32
    %208 = arith.index_cast %207 : i32 to index
    %c0_79 = arith.constant 0 : index
    %c0_80 = arith.constant 0 : index
    %209 = vector.load %arg3[%208, %c0_79, %c0_80] : memref<35x2x750xf32, #tpu.memory_space<vmem>>, vector<1x2x750xf32>
    %210 = vector.shape_cast %209 : vector<1x2x750xf32> to vector<2x750xf32>
    %c13_i32_81 = arith.constant 13 : i32
    %211 = arith.addi %c13_i32_81, %c3_i32 : i32
    %212 = arith.index_cast %211 : i32 to index
    %c0_82 = arith.constant 0 : index
    %c0_83 = arith.constant 0 : index
    %213 = vector.load %arg3[%212, %c0_82, %c0_83] : memref<35x2x750xf32, #tpu.memory_space<vmem>>, vector<1x2x750xf32>
    %214 = vector.shape_cast %213 : vector<1x2x750xf32> to vector<2x750xf32>
    %215 = arith.subf %210, %214 : vector<2x750xf32>
    %216 = arith.maximumf %206, %215 : vector<2x750xf32>
    %c4_i32 = arith.constant 4 : i32
    %c2_i32_84 = arith.constant 2 : i32
    %217 = arith.addi %c2_i32_84, %c4_i32 : i32
    %218 = arith.index_cast %217 : i32 to index
    %c0_85 = arith.constant 0 : index
    %c0_86 = arith.constant 0 : index
    %219 = vector.load %arg3[%218, %c0_85, %c0_86] : memref<35x2x750xf32, #tpu.memory_space<vmem>>, vector<1x2x750xf32>
    %220 = vector.shape_cast %219 : vector<1x2x750xf32> to vector<2x750xf32>
    %c13_i32_87 = arith.constant 13 : i32
    %221 = arith.addi %c13_i32_87, %c4_i32 : i32
    %222 = arith.index_cast %221 : i32 to index
    %c0_88 = arith.constant 0 : index
    %c0_89 = arith.constant 0 : index
    %223 = vector.load %arg3[%222, %c0_88, %c0_89] : memref<35x2x750xf32, #tpu.memory_space<vmem>>, vector<1x2x750xf32>
    %224 = vector.shape_cast %223 : vector<1x2x750xf32> to vector<2x750xf32>
    %225 = arith.subf %220, %224 : vector<2x750xf32>
    %226 = arith.maximumf %216, %225 : vector<2x750xf32>
    %c5_i32 = arith.constant 5 : i32
    %c2_i32_90 = arith.constant 2 : i32
    %227 = arith.addi %c2_i32_90, %c5_i32 : i32
    %228 = arith.index_cast %227 : i32 to index
    %c0_91 = arith.constant 0 : index
    %c0_92 = arith.constant 0 : index
    %229 = vector.load %arg3[%228, %c0_91, %c0_92] : memref<35x2x750xf32, #tpu.memory_space<vmem>>, vector<1x2x750xf32>
    %230 = vector.shape_cast %229 : vector<1x2x750xf32> to vector<2x750xf32>
    %c13_i32_93 = arith.constant 13 : i32
    %231 = arith.addi %c13_i32_93, %c5_i32 : i32
    %232 = arith.index_cast %231 : i32 to index
    %c0_94 = arith.constant 0 : index
    %c0_95 = arith.constant 0 : index
    %233 = vector.load %arg3[%232, %c0_94, %c0_95] : memref<35x2x750xf32, #tpu.memory_space<vmem>>, vector<1x2x750xf32>
    %234 = vector.shape_cast %233 : vector<1x2x750xf32> to vector<2x750xf32>
    %235 = arith.subf %230, %234 : vector<2x750xf32>
    %236 = arith.maximumf %226, %235 : vector<2x750xf32>
    %c6_i32 = arith.constant 6 : i32
    %c2_i32_96 = arith.constant 2 : i32
    %237 = arith.addi %c2_i32_96, %c6_i32 : i32
    %238 = arith.index_cast %237 : i32 to index
    %c0_97 = arith.constant 0 : index
    %c0_98 = arith.constant 0 : index
    %239 = vector.load %arg3[%238, %c0_97, %c0_98] : memref<35x2x750xf32, #tpu.memory_space<vmem>>, vector<1x2x750xf32>
    %240 = vector.shape_cast %239 : vector<1x2x750xf32> to vector<2x750xf32>
    %c13_i32_99 = arith.constant 13 : i32
    %241 = arith.addi %c13_i32_99, %c6_i32 : i32
    %242 = arith.index_cast %241 : i32 to index
    %c0_100 = arith.constant 0 : index
    %c0_101 = arith.constant 0 : index
    %243 = vector.load %arg3[%242, %c0_100, %c0_101] : memref<35x2x750xf32, #tpu.memory_space<vmem>>, vector<1x2x750xf32>
    %244 = vector.shape_cast %243 : vector<1x2x750xf32> to vector<2x750xf32>
    %245 = arith.subf %240, %244 : vector<2x750xf32>
    %246 = arith.maximumf %236, %245 : vector<2x750xf32>
    %c7_i32 = arith.constant 7 : i32
    %c2_i32_102 = arith.constant 2 : i32
    %247 = arith.addi %c2_i32_102, %c7_i32 : i32
    %248 = arith.index_cast %247 : i32 to index
    %c0_103 = arith.constant 0 : index
    %c0_104 = arith.constant 0 : index
    %249 = vector.load %arg3[%248, %c0_103, %c0_104] : memref<35x2x750xf32, #tpu.memory_space<vmem>>, vector<1x2x750xf32>
    %250 = vector.shape_cast %249 : vector<1x2x750xf32> to vector<2x750xf32>
    %c13_i32_105 = arith.constant 13 : i32
    %251 = arith.addi %c13_i32_105, %c7_i32 : i32
    %252 = arith.index_cast %251 : i32 to index
    %c0_106 = arith.constant 0 : index
    %c0_107 = arith.constant 0 : index
    %253 = vector.load %arg3[%252, %c0_106, %c0_107] : memref<35x2x750xf32, #tpu.memory_space<vmem>>, vector<1x2x750xf32>
    %254 = vector.shape_cast %253 : vector<1x2x750xf32> to vector<2x750xf32>
    %255 = arith.subf %250, %254 : vector<2x750xf32>
    %256 = arith.maximumf %246, %255 : vector<2x750xf32>
    %c8_i32 = arith.constant 8 : i32
    %c2_i32_108 = arith.constant 2 : i32
    %257 = arith.addi %c2_i32_108, %c8_i32 : i32
    %258 = arith.index_cast %257 : i32 to index
    %c0_109 = arith.constant 0 : index
    %c0_110 = arith.constant 0 : index
    %259 = vector.load %arg3[%258, %c0_109, %c0_110] : memref<35x2x750xf32, #tpu.memory_space<vmem>>, vector<1x2x750xf32>
    %260 = vector.shape_cast %259 : vector<1x2x750xf32> to vector<2x750xf32>
    %c13_i32_111 = arith.constant 13 : i32
    %261 = arith.addi %c13_i32_111, %c8_i32 : i32
    %262 = arith.index_cast %261 : i32 to index
    %c0_112 = arith.constant 0 : index
    %c0_113 = arith.constant 0 : index
    %263 = vector.load %arg3[%262, %c0_112, %c0_113] : memref<35x2x750xf32, #tpu.memory_space<vmem>>, vector<1x2x750xf32>
    %264 = vector.shape_cast %263 : vector<1x2x750xf32> to vector<2x750xf32>
    %265 = arith.subf %260, %264 : vector<2x750xf32>
    %266 = arith.maximumf %256, %265 : vector<2x750xf32>
    %c9_i32 = arith.constant 9 : i32
    %c2_i32_114 = arith.constant 2 : i32
    %267 = arith.addi %c2_i32_114, %c9_i32 : i32
    %268 = arith.index_cast %267 : i32 to index
    %c0_115 = arith.constant 0 : index
    %c0_116 = arith.constant 0 : index
    %269 = vector.load %arg3[%268, %c0_115, %c0_116] : memref<35x2x750xf32, #tpu.memory_space<vmem>>, vector<1x2x750xf32>
    %270 = vector.shape_cast %269 : vector<1x2x750xf32> to vector<2x750xf32>
    %c13_i32_117 = arith.constant 13 : i32
    %271 = arith.addi %c13_i32_117, %c9_i32 : i32
    %272 = arith.index_cast %271 : i32 to index
    %c0_118 = arith.constant 0 : index
    %c0_119 = arith.constant 0 : index
    %273 = vector.load %arg3[%272, %c0_118, %c0_119] : memref<35x2x750xf32, #tpu.memory_space<vmem>>, vector<1x2x750xf32>
    %274 = vector.shape_cast %273 : vector<1x2x750xf32> to vector<2x750xf32>
    %275 = arith.subf %270, %274 : vector<2x750xf32>
    %276 = arith.maximumf %266, %275 : vector<2x750xf32>
    %c10_i32 = arith.constant 10 : i32
    %c2_i32_120 = arith.constant 2 : i32
    %277 = arith.addi %c2_i32_120, %c10_i32 : i32
    %278 = arith.index_cast %277 : i32 to index
    %c0_121 = arith.constant 0 : index
    %c0_122 = arith.constant 0 : index
    %279 = vector.load %arg3[%278, %c0_121, %c0_122] : memref<35x2x750xf32, #tpu.memory_space<vmem>>, vector<1x2x750xf32>
    %280 = vector.shape_cast %279 : vector<1x2x750xf32> to vector<2x750xf32>
    %c13_i32_123 = arith.constant 13 : i32
    %281 = arith.addi %c13_i32_123, %c10_i32 : i32
    %282 = arith.index_cast %281 : i32 to index
    %c0_124 = arith.constant 0 : index
    %c0_125 = arith.constant 0 : index
    %283 = vector.load %arg3[%282, %c0_124, %c0_125] : memref<35x2x750xf32, #tpu.memory_space<vmem>>, vector<1x2x750xf32>
    %284 = vector.shape_cast %283 : vector<1x2x750xf32> to vector<2x750xf32>
    %285 = arith.subf %280, %284 : vector<2x750xf32>
    %286 = arith.maximumf %276, %285 : vector<2x750xf32>
    %c10_i32_126 = arith.constant 10 : i32
    %cst_127 = arith.constant 5.000000e-01 : f32
    %287 = vector.broadcast %cst_127 : f32 to vector<2x750xf32>
    %288 = arith.mulf %287, %286 : vector<2x750xf32>
    %289 = arith.mulf %288, %286 : vector<2x750xf32>
    %cst_128 = arith.constant 0.000000e+00 : f32
    %290 = vector.broadcast %cst_128 : f32 to vector<2x750xf32>
    %c0_i32 = arith.constant 0 : i32
    %c13_i32_129 = arith.constant 13 : i32
    %291 = arith.addi %c13_i32_129, %c0_i32 : i32
    %292 = arith.index_cast %291 : i32 to index
    %c0_130 = arith.constant 0 : index
    %c0_131 = arith.constant 0 : index
    %293 = vector.load %arg3[%292, %c0_130, %c0_131] : memref<35x2x750xf32, #tpu.memory_space<vmem>>, vector<1x2x750xf32>
    %294 = vector.shape_cast %293 : vector<1x2x750xf32> to vector<2x750xf32>
    %c24_i32 = arith.constant 24 : i32
    %295 = arith.addi %c24_i32, %c0_i32 : i32
    %296 = arith.index_cast %295 : i32 to index
    %c0_132 = arith.constant 0 : index
    %c0_133 = arith.constant 0 : index
    %297 = vector.load %arg3[%296, %c0_132, %c0_133] : memref<35x2x750xf32, #tpu.memory_space<vmem>>, vector<1x2x750xf32>
    %298 = vector.shape_cast %297 : vector<1x2x750xf32> to vector<2x750xf32>
    %299 = arith.subf %179, %294 : vector<2x750xf32>
    %300 = arith.mulf %299, %299 : vector<2x750xf32>
    %cst_134 = arith.constant dense<0.000000e+00> : vector<750xf32>
    %301 = vector.multi_reduction <add>, %300, %cst_134 [0] : vector<2x750xf32> to vector<750xf32>
    %302 = vector.shape_cast %301 : vector<750xf32> to vector<1x750xf32>
    %303 = vector.broadcast %302 : vector<1x750xf32> to vector<2x750xf32>
    %304 = arith.maximumf %303, %289 : vector<2x750xf32>
    %cst_135 = arith.constant 0.000000e+00 : f32
    %305 = vector.broadcast %cst_135 : f32 to vector<2x750xf32>
    %306 = arith.subf %305, %304 : vector<2x750xf32>
    %cst_136 = arith.constant 5.000000e-01 : f32
    %307 = vector.broadcast %cst_136 : f32 to vector<2x750xf32>
    %308 = arith.mulf %306, %307 : vector<2x750xf32>
    %309 = math.exp %308 : vector<2x750xf32>
    %310 = arith.subf %181, %298 : vector<2x750xf32>
    %311 = math.absf %310 : vector<2x750xf32>
    %312 = arith.mulf %309, %311 : vector<2x750xf32>
    %313 = arith.addf %290, %312 : vector<2x750xf32>
    %c1_i32_137 = arith.constant 1 : i32
    %c13_i32_138 = arith.constant 13 : i32
    %314 = arith.addi %c13_i32_138, %c1_i32_137 : i32
    %315 = arith.index_cast %314 : i32 to index
    %c0_139 = arith.constant 0 : index
    %c0_140 = arith.constant 0 : index
    %316 = vector.load %arg3[%315, %c0_139, %c0_140] : memref<35x2x750xf32, #tpu.memory_space<vmem>>, vector<1x2x750xf32>
    %317 = vector.shape_cast %316 : vector<1x2x750xf32> to vector<2x750xf32>
    %c24_i32_141 = arith.constant 24 : i32
    %318 = arith.addi %c24_i32_141, %c1_i32_137 : i32
    %319 = arith.index_cast %318 : i32 to index
    %c0_142 = arith.constant 0 : index
    %c0_143 = arith.constant 0 : index
    %320 = vector.load %arg3[%319, %c0_142, %c0_143] : memref<35x2x750xf32, #tpu.memory_space<vmem>>, vector<1x2x750xf32>
    %321 = vector.shape_cast %320 : vector<1x2x750xf32> to vector<2x750xf32>
    %322 = arith.subf %179, %317 : vector<2x750xf32>
    %323 = arith.mulf %322, %322 : vector<2x750xf32>
    %cst_144 = arith.constant dense<0.000000e+00> : vector<750xf32>
    %324 = vector.multi_reduction <add>, %323, %cst_144 [0] : vector<2x750xf32> to vector<750xf32>
    %325 = vector.shape_cast %324 : vector<750xf32> to vector<1x750xf32>
    %326 = vector.broadcast %325 : vector<1x750xf32> to vector<2x750xf32>
    %327 = arith.maximumf %326, %289 : vector<2x750xf32>
    %cst_145 = arith.constant 0.000000e+00 : f32
    %328 = vector.broadcast %cst_145 : f32 to vector<2x750xf32>
    %329 = arith.subf %328, %327 : vector<2x750xf32>
    %cst_146 = arith.constant 5.000000e-01 : f32
    %330 = vector.broadcast %cst_146 : f32 to vector<2x750xf32>
    %331 = arith.mulf %329, %330 : vector<2x750xf32>
    %332 = math.exp %331 : vector<2x750xf32>
    %333 = arith.subf %181, %321 : vector<2x750xf32>
    %334 = math.absf %333 : vector<2x750xf32>
    %335 = arith.mulf %332, %334 : vector<2x750xf32>
    %336 = arith.addf %313, %335 : vector<2x750xf32>
    %c2_i32_147 = arith.constant 2 : i32
    %c13_i32_148 = arith.constant 13 : i32
    %337 = arith.addi %c13_i32_148, %c2_i32_147 : i32
    %338 = arith.index_cast %337 : i32 to index
    %c0_149 = arith.constant 0 : index
    %c0_150 = arith.constant 0 : index
    %339 = vector.load %arg3[%338, %c0_149, %c0_150] : memref<35x2x750xf32, #tpu.memory_space<vmem>>, vector<1x2x750xf32>
    %340 = vector.shape_cast %339 : vector<1x2x750xf32> to vector<2x750xf32>
    %c24_i32_151 = arith.constant 24 : i32
    %341 = arith.addi %c24_i32_151, %c2_i32_147 : i32
    %342 = arith.index_cast %341 : i32 to index
    %c0_152 = arith.constant 0 : index
    %c0_153 = arith.constant 0 : index
    %343 = vector.load %arg3[%342, %c0_152, %c0_153] : memref<35x2x750xf32, #tpu.memory_space<vmem>>, vector<1x2x750xf32>
    %344 = vector.shape_cast %343 : vector<1x2x750xf32> to vector<2x750xf32>
    %345 = arith.subf %179, %340 : vector<2x750xf32>
    %346 = arith.mulf %345, %345 : vector<2x750xf32>
    %cst_154 = arith.constant dense<0.000000e+00> : vector<750xf32>
    %347 = vector.multi_reduction <add>, %346, %cst_154 [0] : vector<2x750xf32> to vector<750xf32>
    %348 = vector.shape_cast %347 : vector<750xf32> to vector<1x750xf32>
    %349 = vector.broadcast %348 : vector<1x750xf32> to vector<2x750xf32>
    %350 = arith.maximumf %349, %289 : vector<2x750xf32>
    %cst_155 = arith.constant 0.000000e+00 : f32
    %351 = vector.broadcast %cst_155 : f32 to vector<2x750xf32>
    %352 = arith.subf %351, %350 : vector<2x750xf32>
    %cst_156 = arith.constant 5.000000e-01 : f32
    %353 = vector.broadcast %cst_156 : f32 to vector<2x750xf32>
    %354 = arith.mulf %352, %353 : vector<2x750xf32>
    %355 = math.exp %354 : vector<2x750xf32>
    %356 = arith.subf %181, %344 : vector<2x750xf32>
    %357 = math.absf %356 : vector<2x750xf32>
    %358 = arith.mulf %355, %357 : vector<2x750xf32>
    %359 = arith.addf %336, %358 : vector<2x750xf32>
    %c3_i32_157 = arith.constant 3 : i32
    %c13_i32_158 = arith.constant 13 : i32
    %360 = arith.addi %c13_i32_158, %c3_i32_157 : i32
    %361 = arith.index_cast %360 : i32 to index
    %c0_159 = arith.constant 0 : index
    %c0_160 = arith.constant 0 : index
    %362 = vector.load %arg3[%361, %c0_159, %c0_160] : memref<35x2x750xf32, #tpu.memory_space<vmem>>, vector<1x2x750xf32>
    %363 = vector.shape_cast %362 : vector<1x2x750xf32> to vector<2x750xf32>
    %c24_i32_161 = arith.constant 24 : i32
    %364 = arith.addi %c24_i32_161, %c3_i32_157 : i32
    %365 = arith.index_cast %364 : i32 to index
    %c0_162 = arith.constant 0 : index
    %c0_163 = arith.constant 0 : index
    %366 = vector.load %arg3[%365, %c0_162, %c0_163] : memref<35x2x750xf32, #tpu.memory_space<vmem>>, vector<1x2x750xf32>
    %367 = vector.shape_cast %366 : vector<1x2x750xf32> to vector<2x750xf32>
    %368 = arith.subf %179, %363 : vector<2x750xf32>
    %369 = arith.mulf %368, %368 : vector<2x750xf32>
    %cst_164 = arith.constant dense<0.000000e+00> : vector<750xf32>
    %370 = vector.multi_reduction <add>, %369, %cst_164 [0] : vector<2x750xf32> to vector<750xf32>
    %371 = vector.shape_cast %370 : vector<750xf32> to vector<1x750xf32>
    %372 = vector.broadcast %371 : vector<1x750xf32> to vector<2x750xf32>
    %373 = arith.maximumf %372, %289 : vector<2x750xf32>
    %cst_165 = arith.constant 0.000000e+00 : f32
    %374 = vector.broadcast %cst_165 : f32 to vector<2x750xf32>
    %375 = arith.subf %374, %373 : vector<2x750xf32>
    %cst_166 = arith.constant 5.000000e-01 : f32
    %376 = vector.broadcast %cst_166 : f32 to vector<2x750xf32>
    %377 = arith.mulf %375, %376 : vector<2x750xf32>
    %378 = math.exp %377 : vector<2x750xf32>
    %379 = arith.subf %181, %367 : vector<2x750xf32>
    %380 = math.absf %379 : vector<2x750xf32>
    %381 = arith.mulf %378, %380 : vector<2x750xf32>
    %382 = arith.addf %359, %381 : vector<2x750xf32>
    %c4_i32_167 = arith.constant 4 : i32
    %c13_i32_168 = arith.constant 13 : i32
    %383 = arith.addi %c13_i32_168, %c4_i32_167 : i32
    %384 = arith.index_cast %383 : i32 to index
    %c0_169 = arith.constant 0 : index
    %c0_170 = arith.constant 0 : index
    %385 = vector.load %arg3[%384, %c0_169, %c0_170] : memref<35x2x750xf32, #tpu.memory_space<vmem>>, vector<1x2x750xf32>
    %386 = vector.shape_cast %385 : vector<1x2x750xf32> to vector<2x750xf32>
    %c24_i32_171 = arith.constant 24 : i32
    %387 = arith.addi %c24_i32_171, %c4_i32_167 : i32
    %388 = arith.index_cast %387 : i32 to index
    %c0_172 = arith.constant 0 : index
    %c0_173 = arith.constant 0 : index
    %389 = vector.load %arg3[%388, %c0_172, %c0_173] : memref<35x2x750xf32, #tpu.memory_space<vmem>>, vector<1x2x750xf32>
    %390 = vector.shape_cast %389 : vector<1x2x750xf32> to vector<2x750xf32>
    %391 = arith.subf %179, %386 : vector<2x750xf32>
    %392 = arith.mulf %391, %391 : vector<2x750xf32>
    %cst_174 = arith.constant dense<0.000000e+00> : vector<750xf32>
    %393 = vector.multi_reduction <add>, %392, %cst_174 [0] : vector<2x750xf32> to vector<750xf32>
    %394 = vector.shape_cast %393 : vector<750xf32> to vector<1x750xf32>
    %395 = vector.broadcast %394 : vector<1x750xf32> to vector<2x750xf32>
    %396 = arith.maximumf %395, %289 : vector<2x750xf32>
    %cst_175 = arith.constant 0.000000e+00 : f32
    %397 = vector.broadcast %cst_175 : f32 to vector<2x750xf32>
    %398 = arith.subf %397, %396 : vector<2x750xf32>
    %cst_176 = arith.constant 5.000000e-01 : f32
    %399 = vector.broadcast %cst_176 : f32 to vector<2x750xf32>
    %400 = arith.mulf %398, %399 : vector<2x750xf32>
    %401 = math.exp %400 : vector<2x750xf32>
    %402 = arith.subf %181, %390 : vector<2x750xf32>
    %403 = math.absf %402 : vector<2x750xf32>
    %404 = arith.mulf %401, %403 : vector<2x750xf32>
    %405 = arith.addf %382, %404 : vector<2x750xf32>
    %c5_i32_177 = arith.constant 5 : i32
    %c13_i32_178 = arith.constant 13 : i32
    %406 = arith.addi %c13_i32_178, %c5_i32_177 : i32
    %407 = arith.index_cast %406 : i32 to index
    %c0_179 = arith.constant 0 : index
    %c0_180 = arith.constant 0 : index
    %408 = vector.load %arg3[%407, %c0_179, %c0_180] : memref<35x2x750xf32, #tpu.memory_space<vmem>>, vector<1x2x750xf32>
    %409 = vector.shape_cast %408 : vector<1x2x750xf32> to vector<2x750xf32>
    %c24_i32_181 = arith.constant 24 : i32
    %410 = arith.addi %c24_i32_181, %c5_i32_177 : i32
    %411 = arith.index_cast %410 : i32 to index
    %c0_182 = arith.constant 0 : index
    %c0_183 = arith.constant 0 : index
    %412 = vector.load %arg3[%411, %c0_182, %c0_183] : memref<35x2x750xf32, #tpu.memory_space<vmem>>, vector<1x2x750xf32>
    %413 = vector.shape_cast %412 : vector<1x2x750xf32> to vector<2x750xf32>
    %414 = arith.subf %179, %409 : vector<2x750xf32>
    %415 = arith.mulf %414, %414 : vector<2x750xf32>
    %cst_184 = arith.constant dense<0.000000e+00> : vector<750xf32>
    %416 = vector.multi_reduction <add>, %415, %cst_184 [0] : vector<2x750xf32> to vector<750xf32>
    %417 = vector.shape_cast %416 : vector<750xf32> to vector<1x750xf32>
    %418 = vector.broadcast %417 : vector<1x750xf32> to vector<2x750xf32>
    %419 = arith.maximumf %418, %289 : vector<2x750xf32>
    %cst_185 = arith.constant 0.000000e+00 : f32
    %420 = vector.broadcast %cst_185 : f32 to vector<2x750xf32>
    %421 = arith.subf %420, %419 : vector<2x750xf32>
    %cst_186 = arith.constant 5.000000e-01 : f32
    %422 = vector.broadcast %cst_186 : f32 to vector<2x750xf32>
    %423 = arith.mulf %421, %422 : vector<2x750xf32>
    %424 = math.exp %423 : vector<2x750xf32>
    %425 = arith.subf %181, %413 : vector<2x750xf32>
    %426 = math.absf %425 : vector<2x750xf32>
    %427 = arith.mulf %424, %426 : vector<2x750xf32>
    %428 = arith.addf %405, %427 : vector<2x750xf32>
    %c6_i32_187 = arith.constant 6 : i32
    %c13_i32_188 = arith.constant 13 : i32
    %429 = arith.addi %c13_i32_188, %c6_i32_187 : i32
    %430 = arith.index_cast %429 : i32 to index
    %c0_189 = arith.constant 0 : index
    %c0_190 = arith.constant 0 : index
    %431 = vector.load %arg3[%430, %c0_189, %c0_190] : memref<35x2x750xf32, #tpu.memory_space<vmem>>, vector<1x2x750xf32>
    %432 = vector.shape_cast %431 : vector<1x2x750xf32> to vector<2x750xf32>
    %c24_i32_191 = arith.constant 24 : i32
    %433 = arith.addi %c24_i32_191, %c6_i32_187 : i32
    %434 = arith.index_cast %433 : i32 to index
    %c0_192 = arith.constant 0 : index
    %c0_193 = arith.constant 0 : index
    %435 = vector.load %arg3[%434, %c0_192, %c0_193] : memref<35x2x750xf32, #tpu.memory_space<vmem>>, vector<1x2x750xf32>
    %436 = vector.shape_cast %435 : vector<1x2x750xf32> to vector<2x750xf32>
    %437 = arith.subf %179, %432 : vector<2x750xf32>
    %438 = arith.mulf %437, %437 : vector<2x750xf32>
    %cst_194 = arith.constant dense<0.000000e+00> : vector<750xf32>
    %439 = vector.multi_reduction <add>, %438, %cst_194 [0] : vector<2x750xf32> to vector<750xf32>
    %440 = vector.shape_cast %439 : vector<750xf32> to vector<1x750xf32>
    %441 = vector.broadcast %440 : vector<1x750xf32> to vector<2x750xf32>
    %442 = arith.maximumf %441, %289 : vector<2x750xf32>
    %cst_195 = arith.constant 0.000000e+00 : f32
    %443 = vector.broadcast %cst_195 : f32 to vector<2x750xf32>
    %444 = arith.subf %443, %442 : vector<2x750xf32>
    %cst_196 = arith.constant 5.000000e-01 : f32
    %445 = vector.broadcast %cst_196 : f32 to vector<2x750xf32>
    %446 = arith.mulf %444, %445 : vector<2x750xf32>
    %447 = math.exp %446 : vector<2x750xf32>
    %448 = arith.subf %181, %436 : vector<2x750xf32>
    %449 = math.absf %448 : vector<2x750xf32>
    %450 = arith.mulf %447, %449 : vector<2x750xf32>
    %451 = arith.addf %428, %450 : vector<2x750xf32>
    %c7_i32_197 = arith.constant 7 : i32
    %c13_i32_198 = arith.constant 13 : i32
    %452 = arith.addi %c13_i32_198, %c7_i32_197 : i32
    %453 = arith.index_cast %452 : i32 to index
    %c0_199 = arith.constant 0 : index
    %c0_200 = arith.constant 0 : index
    %454 = vector.load %arg3[%453, %c0_199, %c0_200] : memref<35x2x750xf32, #tpu.memory_space<vmem>>, vector<1x2x750xf32>
    %455 = vector.shape_cast %454 : vector<1x2x750xf32> to vector<2x750xf32>
    %c24_i32_201 = arith.constant 24 : i32
    %456 = arith.addi %c24_i32_201, %c7_i32_197 : i32
    %457 = arith.index_cast %456 : i32 to index
    %c0_202 = arith.constant 0 : index
    %c0_203 = arith.constant 0 : index
    %458 = vector.load %arg3[%457, %c0_202, %c0_203] : memref<35x2x750xf32, #tpu.memory_space<vmem>>, vector<1x2x750xf32>
    %459 = vector.shape_cast %458 : vector<1x2x750xf32> to vector<2x750xf32>
    %460 = arith.subf %179, %455 : vector<2x750xf32>
    %461 = arith.mulf %460, %460 : vector<2x750xf32>
    %cst_204 = arith.constant dense<0.000000e+00> : vector<750xf32>
    %462 = vector.multi_reduction <add>, %461, %cst_204 [0] : vector<2x750xf32> to vector<750xf32>
    %463 = vector.shape_cast %462 : vector<750xf32> to vector<1x750xf32>
    %464 = vector.broadcast %463 : vector<1x750xf32> to vector<2x750xf32>
    %465 = arith.maximumf %464, %289 : vector<2x750xf32>
    %cst_205 = arith.constant 0.000000e+00 : f32
    %466 = vector.broadcast %cst_205 : f32 to vector<2x750xf32>
    %467 = arith.subf %466, %465 : vector<2x750xf32>
    %cst_206 = arith.constant 5.000000e-01 : f32
    %468 = vector.broadcast %cst_206 : f32 to vector<2x750xf32>
    %469 = arith.mulf %467, %468 : vector<2x750xf32>
    %470 = math.exp %469 : vector<2x750xf32>
    %471 = arith.subf %181, %459 : vector<2x750xf32>
    %472 = math.absf %471 : vector<2x750xf32>
    %473 = arith.mulf %470, %472 : vector<2x750xf32>
    %474 = arith.addf %451, %473 : vector<2x750xf32>
    %c8_i32_207 = arith.constant 8 : i32
    %c13_i32_208 = arith.constant 13 : i32
    %475 = arith.addi %c13_i32_208, %c8_i32_207 : i32
    %476 = arith.index_cast %475 : i32 to index
    %c0_209 = arith.constant 0 : index
    %c0_210 = arith.constant 0 : index
    %477 = vector.load %arg3[%476, %c0_209, %c0_210] : memref<35x2x750xf32, #tpu.memory_space<vmem>>, vector<1x2x750xf32>
    %478 = vector.shape_cast %477 : vector<1x2x750xf32> to vector<2x750xf32>
    %c24_i32_211 = arith.constant 24 : i32
    %479 = arith.addi %c24_i32_211, %c8_i32_207 : i32
    %480 = arith.index_cast %479 : i32 to index
    %c0_212 = arith.constant 0 : index
    %c0_213 = arith.constant 0 : index
    %481 = vector.load %arg3[%480, %c0_212, %c0_213] : memref<35x2x750xf32, #tpu.memory_space<vmem>>, vector<1x2x750xf32>
    %482 = vector.shape_cast %481 : vector<1x2x750xf32> to vector<2x750xf32>
    %483 = arith.subf %179, %478 : vector<2x750xf32>
    %484 = arith.mulf %483, %483 : vector<2x750xf32>
    %cst_214 = arith.constant dense<0.000000e+00> : vector<750xf32>
    %485 = vector.multi_reduction <add>, %484, %cst_214 [0] : vector<2x750xf32> to vector<750xf32>
    %486 = vector.shape_cast %485 : vector<750xf32> to vector<1x750xf32>
    %487 = vector.broadcast %486 : vector<1x750xf32> to vector<2x750xf32>
    %488 = arith.maximumf %487, %289 : vector<2x750xf32>
    %cst_215 = arith.constant 0.000000e+00 : f32
    %489 = vector.broadcast %cst_215 : f32 to vector<2x750xf32>
    %490 = arith.subf %489, %488 : vector<2x750xf32>
    %cst_216 = arith.constant 5.000000e-01 : f32
    %491 = vector.broadcast %cst_216 : f32 to vector<2x750xf32>
    %492 = arith.mulf %490, %491 : vector<2x750xf32>
    %493 = math.exp %492 : vector<2x750xf32>
    %494 = arith.subf %181, %482 : vector<2x750xf32>
    %495 = math.absf %494 : vector<2x750xf32>
    %496 = arith.mulf %493, %495 : vector<2x750xf32>
    %497 = arith.addf %474, %496 : vector<2x750xf32>
    %c9_i32_217 = arith.constant 9 : i32
    %c13_i32_218 = arith.constant 13 : i32
    %498 = arith.addi %c13_i32_218, %c9_i32_217 : i32
    %499 = arith.index_cast %498 : i32 to index
    %c0_219 = arith.constant 0 : index
    %c0_220 = arith.constant 0 : index
    %500 = vector.load %arg3[%499, %c0_219, %c0_220] : memref<35x2x750xf32, #tpu.memory_space<vmem>>, vector<1x2x750xf32>
    %501 = vector.shape_cast %500 : vector<1x2x750xf32> to vector<2x750xf32>
    %c24_i32_221 = arith.constant 24 : i32
    %502 = arith.addi %c24_i32_221, %c9_i32_217 : i32
    %503 = arith.index_cast %502 : i32 to index
    %c0_222 = arith.constant 0 : index
    %c0_223 = arith.constant 0 : index
    %504 = vector.load %arg3[%503, %c0_222, %c0_223] : memref<35x2x750xf32, #tpu.memory_space<vmem>>, vector<1x2x750xf32>
    %505 = vector.shape_cast %504 : vector<1x2x750xf32> to vector<2x750xf32>
    %506 = arith.subf %179, %501 : vector<2x750xf32>
    %507 = arith.mulf %506, %506 : vector<2x750xf32>
    %cst_224 = arith.constant dense<0.000000e+00> : vector<750xf32>
    %508 = vector.multi_reduction <add>, %507, %cst_224 [0] : vector<2x750xf32> to vector<750xf32>
    %509 = vector.shape_cast %508 : vector<750xf32> to vector<1x750xf32>
    %510 = vector.broadcast %509 : vector<1x750xf32> to vector<2x750xf32>
    %511 = arith.maximumf %510, %289 : vector<2x750xf32>
    %cst_225 = arith.constant 0.000000e+00 : f32
    %512 = vector.broadcast %cst_225 : f32 to vector<2x750xf32>
    %513 = arith.subf %512, %511 : vector<2x750xf32>
    %cst_226 = arith.constant 5.000000e-01 : f32
    %514 = vector.broadcast %cst_226 : f32 to vector<2x750xf32>
    %515 = arith.mulf %513, %514 : vector<2x750xf32>
    %516 = math.exp %515 : vector<2x750xf32>
    %517 = arith.subf %181, %505 : vector<2x750xf32>
    %518 = math.absf %517 : vector<2x750xf32>
    %519 = arith.mulf %516, %518 : vector<2x750xf32>
    %520 = arith.addf %497, %519 : vector<2x750xf32>
    %c10_i32_227 = arith.constant 10 : i32
    %c13_i32_228 = arith.constant 13 : i32
    %521 = arith.addi %c13_i32_228, %c10_i32_227 : i32
    %522 = arith.index_cast %521 : i32 to index
    %c0_229 = arith.constant 0 : index
    %c0_230 = arith.constant 0 : index
    %523 = vector.load %arg3[%522, %c0_229, %c0_230] : memref<35x2x750xf32, #tpu.memory_space<vmem>>, vector<1x2x750xf32>
    %524 = vector.shape_cast %523 : vector<1x2x750xf32> to vector<2x750xf32>
    %c24_i32_231 = arith.constant 24 : i32
    %525 = arith.addi %c24_i32_231, %c10_i32_227 : i32
    %526 = arith.index_cast %525 : i32 to index
    %c0_232 = arith.constant 0 : index
    %c0_233 = arith.constant 0 : index
    %527 = vector.load %arg3[%526, %c0_232, %c0_233] : memref<35x2x750xf32, #tpu.memory_space<vmem>>, vector<1x2x750xf32>
    %528 = vector.shape_cast %527 : vector<1x2x750xf32> to vector<2x750xf32>
    %529 = arith.subf %179, %524 : vector<2x750xf32>
    %530 = arith.mulf %529, %529 : vector<2x750xf32>
    %cst_234 = arith.constant dense<0.000000e+00> : vector<750xf32>
    %531 = vector.multi_reduction <add>, %530, %cst_234 [0] : vector<2x750xf32> to vector<750xf32>
    %532 = vector.shape_cast %531 : vector<750xf32> to vector<1x750xf32>
    %533 = vector.broadcast %532 : vector<1x750xf32> to vector<2x750xf32>
    %534 = arith.maximumf %533, %289 : vector<2x750xf32>
    %cst_235 = arith.constant 0.000000e+00 : f32
    %535 = vector.broadcast %cst_235 : f32 to vector<2x750xf32>
    %536 = arith.subf %535, %534 : vector<2x750xf32>
    %cst_236 = arith.constant 5.000000e-01 : f32
    %537 = vector.broadcast %cst_236 : f32 to vector<2x750xf32>
    %538 = arith.mulf %536, %537 : vector<2x750xf32>
    %539 = math.exp %538 : vector<2x750xf32>
    %540 = arith.subf %181, %528 : vector<2x750xf32>
    %541 = math.absf %540 : vector<2x750xf32>
    %542 = arith.mulf %539, %541 : vector<2x750xf32>
    %543 = arith.addf %520, %542 : vector<2x750xf32>
    %c11_i32 = arith.constant 11 : i32
    %544 = vector.shape_cast %543 : vector<2x750xf32> to vector<1x2x750xf32>
    %cst_237 = arith.constant dense<0.000000e+00> : vector<1xf32>
    %545 = vector.multi_reduction <add>, %544, %cst_237 [1, 2] : vector<1x2x750xf32> to vector<1xf32>
    %546 = vector.shape_cast %545 : vector<1xf32> to vector<1x1x1xf32>
    %547 = vector.extract %546[0, 0, 0] : f32 from vector<1x1x1xf32>
    %cst_238 = arith.constant 2.000000e+00 : f32
    %548 = arith.divf %547, %cst_238 : f32
    %549 = arith.subf %179, %181 : vector<2x750xf32>
    %550 = arith.mulf %549, %549 : vector<2x750xf32>
    %551 = vector.shape_cast %550 : vector<2x750xf32> to vector<1x2x750xf32>
    %cst_239 = arith.constant dense<0.000000e+00> : vector<1xf32>
    %552 = vector.multi_reduction <add>, %551, %cst_239 [1, 2] : vector<1x2x750xf32> to vector<1xf32>
    %553 = vector.shape_cast %552 : vector<1xf32> to vector<1x1x1xf32>
    %554 = vector.extract %553[0, 0, 0] : f32 from vector<1x1x1xf32>
    %cst_240 = arith.constant 2.000000e+00 : f32
    %555 = arith.divf %554, %cst_240 : f32
    %cst_241 = arith.constant 1.000000e-01 : f32
    %556 = arith.mulf %cst_241, %555 : f32
    %557 = arith.addf %548, %556 : f32
    %cst_242 = arith.constant 5.000000e-04 : f32
    %558 = arith.mulf %557, %cst_242 : f32
    %c0_243 = arith.constant 0 : index
    %559 = memref.load %arg4[%c0_243] : memref<5xf32, #tpu.memory_space<smem>>
    memref.store %27, %arg4[%c0_243] : memref<5xf32, #tpu.memory_space<smem>>
    %c1_244 = arith.constant 1 : index
    %560 = memref.load %arg4[%c1_244] : memref<5xf32, #tpu.memory_space<smem>>
    memref.store %157, %arg4[%c1_244] : memref<5xf32, #tpu.memory_space<smem>>
    %c2_245 = arith.constant 2 : index
    %561 = memref.load %arg4[%c2_245] : memref<5xf32, #tpu.memory_space<smem>>
    memref.store %558, %arg4[%c2_245] : memref<5xf32, #tpu.memory_space<smem>>
    %c3 = arith.constant 3 : index
    %562 = memref.load %arg4[%c3] : memref<5xf32, #tpu.memory_space<smem>>
    memref.store %177, %arg4[%c3] : memref<5xf32, #tpu.memory_space<smem>>
    %cst_246 = arith.constant 0.00999999977 : f32
    %563 = arith.mulf %cst_246, %157 : f32
    %564 = arith.addf %27, %563 : f32
    %565 = arith.addf %564, %558 : f32
    %cst_247 = arith.constant 1.000000e-01 : f32
    %566 = arith.mulf %cst_247, %177 : f32
    %567 = arith.addf %565, %566 : f32
    %c4 = arith.constant 4 : index
    %568 = memref.load %arg4[%c4] : memref<5xf32, #tpu.memory_space<smem>>
    memref.store %567, %arg4[%c4] : memref<5xf32, #tpu.memory_space<smem>>
    return
  }
}

</mosaic_0001>

<llo_original>
// kernel: tpu_custom_call.1
$region0: #{tpu_custom_call.1}
  #allocation0 [shape = 'u32[]', space=smem, size = 0x4, offset = 0x4, fixed_abs, tag = 'smem constant byte address 0x4 - core index']
  #allocation1 [shape = 'u32[144,128]{1,0:T(1,128)}', space=vmem, size = 0x12000, scoped, tag = 'internal scratch']
  %s0 = inlined_call_operand.hbm [shape: f32[2,2,20], index: 0, kind: input, shape index: {}]
  %s1 = inlined_call_operand.hbm [shape: f32[4,2,16], index: 1, kind: input, shape index: {}]
  %s2 = inlined_call_operand.hbm [shape: f32[4,2,8,32], index: 2, kind: input, shape index: {}]
  %s3 = inlined_call_operand.hbm [shape: f32[35,2,750], index: 3, kind: input, shape index: {}]
  %s4 = inlined_call_operand.hbm [shape: f32[5], index: 4, kind: output, shape index: {}]
  %s5 = sld [smem:[#allocation0]]
  $region42: #{tpu_custom_call.1} parent=0
    _
  %s7 = ssub.s32 1, %s5
  %s8 = scalar_select 0, %s7, %s5
  $region1: #{tpu_custom_call.1} parent=0
    #allocation2 [shape = 'u8[2048]{0}', space=vmem, size = 0x800, scoped, tag = 'input window, operand 0, single buffered']
    #allocation3 [shape = 's32[1]{0}', space=sflag, size = 0x4, scoped, tag = 'scoped memory for tpu_custom_call.1']
    #allocation4 [shape = 's32[1]{0}', space=sflag, size = 0x4, scoped, tag = 'scoped memory for tpu_custom_call.1']
    #allocation5 [shape = 'u8[4096]{0}', space=vmem, size = 0x1000, scoped, tag = 'input window, operand 1, single buffered']
    #allocation6 [shape = 's32[1]{0}', space=sflag, size = 0x4, scoped, tag = 'scoped memory for tpu_custom_call.1']
    #allocation7 [shape = 'u8[32768]{0}', space=vmem, size = 0x8000, scoped, tag = 'input window, operand 2, single buffered']
    #allocation8 [shape = 'u8[215040]{0}', space=vmem, size = 0x34800, scoped, tag = 'input window, operand 3, single buffered']
    #allocation9 [shape = 's32[1]{0}', space=sflag, size = 0x4, scoped, tag = 'scoped memory for tpu_custom_call.1']
    #allocation10 [shape = 'u8[512]{0}', space=smem, size = 0x200, scoped, tag = 'output window, operand 0, single buffered']
    %9 = vsyncpa [#allocation3], 0
    %10 = vsyncpa [#allocation6], 0
    %11 = vsyncpa [#allocation9], 0
    %12 = vsyncpa [#allocation4], 0
    // Predicated region
    $region2: #{tpu_custom_call.1} parent=1 // pred_check
      _
    $region3: #{tpu_custom_call.1} parent=1 // pred_check_branch
      %14 = sbr.rel (0) target = $region5
    $region4: #{tpu_custom_call.1} parent=1 // pred_region
      %s16 = ssub.s32 64, 64
      %17 = vsyncadd [#allocation3], %s16
      %s18 = sshll.u32 [#allocation2], 4
      %s19 = int_to_ptr.vmem [resolvable:$true] %s18
      %24 = dma.hbm_to_vmem [thread:$0]  %s0, 64, %s19, [#allocation3], 32, 32, 2
    $region5: #{tpu_custom_call.1} parent=1 // pred_fallthru
      _
    // Predicated region
    $region6: #{tpu_custom_call.1} parent=1 // pred_check
      _
    $region7: #{tpu_custom_call.1} parent=1 // pred_check_branch
      %26 = sbr.rel (0) target = $region9
    $region8: #{tpu_custom_call.1} parent=1 // pred_region
      %s28 = ssub.s32 128, 128
      %29 = vsyncadd [#allocation6], %s28
      %s30 = sshll.u32 [#allocation5], 4
      %s31 = int_to_ptr.vmem [resolvable:$true] %s30
      %36 = dma.hbm_to_vmem [thread:$0]  %s1, 128, %s31, [#allocation6], 32, 32, 2
    $region9: #{tpu_custom_call.1} parent=1 // pred_fallthru
      _
    // Predicated region
    $region10: #{tpu_custom_call.1} parent=1 // pred_check
      _
    $region11: #{tpu_custom_call.1} parent=1 // pred_check_branch
      %38 = sbr.rel (0) target = $region13
    $region12: #{tpu_custom_call.1} parent=1 // pred_region
      %s40 = ssub.s32 1024, 1024
      %41 = vsyncadd [#allocation6], %s40
      %s42 = sshll.u32 [#allocation7], 4
      %s43 = int_to_ptr.vmem [resolvable:$true] %s42
      %48 = dma.hbm_to_vmem [thread:$0]  %s2, 1024, %s43, [#allocation6], 128, 128, 8
    $region13: #{tpu_custom_call.1} parent=1 // pred_fallthru
      _
    // Predicated region
    $region14: #{tpu_custom_call.1} parent=1 // pred_check
      _
    $region15: #{tpu_custom_call.1} parent=1 // pred_check_branch
      %50 = sbr.rel (0) target = $region17
    $region16: #{tpu_custom_call.1} parent=1 // pred_region
      %s52 = ssub.s32 6720, 6720
      %53 = vsyncadd [#allocation9], %s52
      %s54 = sshll.u32 [#allocation8], 4
      %s55 = int_to_ptr.vmem [resolvable:$true] %s54
      %60 = dma.hbm_to_vmem [thread:$0]  %s3, 6720, %s55, [#allocation9], 192, 192, 12
    $region17: #{tpu_custom_call.1} parent=1 // pred_fallthru
      _
    // Predicated region
    $region18: #{tpu_custom_call.1} parent=1 // pred_check
      _
    $region19: #{tpu_custom_call.1} parent=1 // pred_check_branch
      %62 = sbr.rel (0) target = $region21
    $region20: #{tpu_custom_call.1} parent=1 // pred_region
      %63 = dma.done [#allocation3], 64
    $region21: #{tpu_custom_call.1} parent=1 // pred_fallthru
      _
    // Predicated region
    $region22: #{tpu_custom_call.1} parent=1 // pred_check
      _
    $region23: #{tpu_custom_call.1} parent=1 // pred_check_branch
      %65 = sbr.rel (0) target = $region25
    $region24: #{tpu_custom_call.1} parent=1 // pred_region
      %66 = dma.done [#allocation6], 128
    $region25: #{tpu_custom_call.1} parent=1 // pred_fallthru
      _
    // Predicated region
    $region26: #{tpu_custom_call.1} parent=1 // pred_check
      _
    $region27: #{tpu_custom_call.1} parent=1 // pred_check_branch
      %68 = sbr.rel (0) target = $region29
    $region28: #{tpu_custom_call.1} parent=1 // pred_region
      %69 = dma.done [#allocation6], 1024
    $region29: #{tpu_custom_call.1} parent=1 // pred_fallthru
      _
    // Predicated region
    $region30: #{tpu_custom_call.1} parent=1 // pred_check
      _
    $region31: #{tpu_custom_call.1} parent=1 // pred_check_branch
      %71 = sbr.rel (0) target = $region33
    $region32: #{tpu_custom_call.1} parent=1 // pred_region
      %72 = dma.done [#allocation9], 6720
    $region33: #{tpu_custom_call.1} parent=1 // pred_fallthru
      _
    %v73 = vld [vmem:[#allocation2] sm:$0x3]
    %v74 = vld [vmem:[#allocation2 + $0x2] sm:$0x3]
    %vm75 = vcmask 156672
    %v76 = vsel %vm75, %v74, 0.0
    %77 = vadd.xlane.f32.xlu0 %v76
    %v78 = vpop.xlane.xlu0 %77
    %v79 = vrcp.pop %v78
    %v80 = vmul.f32 %v74, %v79
    %v81 = vlog2.pop %v73
    %v82 = vmul.f32 %v81, 0.6931472
    %v83 = vmax.f32 %v82, -100.0
    %v84 = vsub.f32 1.0, %v73
    %v85 = vlog2.pop %v84
    %v86 = vmul.f32 %v85, 0.6931472
    %v87 = vmax.f32 %v86, -100.0
    %v88 = vmul.f32 %v80, %v83
    %v89 = vsub.f32 1.0, %v80
    %v90 = vmul.f32 %v89, %v87
    %v91 = vadd.f32 %v88, %v90
    %v92 = vsel %vm75, %v91, 0.0
    %93 = vadd.xlane.f32.xlu0 %v92
    %v94 = vpop.xlane.xlu0 %93
    %v95 = vrot.slane %v94, 4
    %v96 = vadd.f32 %v94, %v95
    %v97 = vrot.slane %v96, 2
    %v98 = vadd.f32 %v96, %v97
    %v99 = vrot.slane %v98, 1
    %v100 = vadd.f32 %v98, %v99
    %s101 = vtos %v100
    %v102 = vrcp.pop 40.0
    %s103 = vtos %v102
    %s104 = smul.f32 %s101, %s103
    %s105 = ssub.f32 0.0, %s104
    %v106 = vld [vmem:[#allocation7] sm:$0xff]
    %v107 = vld [vmem:[#allocation7 + $0x8] sm:$0xff]
    %v108 = vld [vmem:[#allocation7 + $0x10] sm:$0xff]
    %v109 = vld [vmem:[#allocation7 + $0x18] sm:$0xff]
    %v110 = vld [vmem:[#allocation7 + $0x20] sm:$0xff]
    %v111 = vld [vmem:[#allocation7 + $0x28] sm:$0xff]
    %v112 = vld [vmem:[#allocation7 + $0x30] sm:$0xff]
    %v113 = vld [vmem:[#allocation7 + $0x38] sm:$0xff]
    %vm114 = vcmask 261120
    %v115 = vsel %vm114, %v106, 0.0
    %v116 = vrot.slane %v115, 4
    %v117 = vadd.f32 %v115, %v116
    %v118 = vrot.slane %v117, 2
    %v119 = vadd.f32 %v117, %v118
    %v120 = vrot.slane %v119, 1
    %v121 = vadd.f32 %v119, %v120
    %v122 = vsel %vm114, %v107, 0.0
    %v123 = vrot.slane %v122, 4
    %v124 = vadd.f32 %v122, %v123
    %v125 = vrot.slane %v124, 2
    %v126 = vadd.f32 %v124, %v125
    %v127 = vrot.slane %v126, 1
    %v128 = vadd.f32 %v126, %v127
    %v129 = vrcp.pop 8.0
    %v130 = vmul.f32 %v121, %v129
    %v131 = vmul.f32 %v128, %v129
    %v132 = vsel %vm114, %v108, 0.0
    %v133 = vrot.slane %v132, 4
    %v134 = vadd.f32 %v132, %v133
    %v135 = vrot.slane %v134, 2
    %v136 = vadd.f32 %v134, %v135
    %v137 = vrot.slane %v136, 1
    %v138 = vadd.f32 %v136, %v137
    %v139 = vsel %vm114, %v109, 0.0
    %v140 = vrot.slane %v139, 4
    %v141 = vadd.f32 %v139, %v140
    %v142 = vrot.slane %v141, 2
    %v143 = vadd.f32 %v141, %v142
    %v144 = vrot.slane %v143, 1
    %v145 = vadd.f32 %v143, %v144
    %v146 = vmul.f32 %v138, %v129
    %v147 = vmul.f32 %v145, %v129
    %v148 = vmul.f32 %v130, %v130
    %v149 = vmul.f32 %v131, %v131
    %vm152 = vcmask 1041409
    %v153 = vsel %vm152, %v149, %v148
    %vm155 = vcmask 254976
    %v156 = vsel %vm155, %v153, 0.0
    %157 = vadd.xlane.f32.xlu0 %v156
    %v158 = vpop.xlane.xlu0 %157
    %v159 = vmax.f32 %v158, 1e-24
    %v160 = vrsqrt.pop %v159
    %v162 = vrot.slane %v160, 1
    %v165 = vmul.f32 %v130, %v160
    %v166 = vmul.f32 %v131, %v162
    %v167 = vmul.f32 %v146, %v146
    %v168 = vmul.f32 %v147, %v147
    %v171 = vsel %vm152, %v168, %v167
    %v173 = vsel %vm155, %v171, 0.0
    %174 = vadd.xlane.f32.xlu0 %v173
    %v175 = vpop.xlane.xlu0 %174
    %v176 = vmax.f32 %v175, 1e-24
    %v177 = vrsqrt.pop %v176
    %v179 = vrot.slane %v177, 1
    %v182 = vmul.f32 %v146, %v177
    %v183 = vmul.f32 %v147, %v179
    %v184 = vmul.f32 %v112, %v112
    %v185 = vmul.f32 %v113, %v113
    %v186 = vsel %vm114, %v184, 0.0
    %187 = vadd.xlane.f32.xlu0 %v186
    %v188 = vpop.xlane.xlu0 %187
    %v189 = vsel %vm114, %v185, 0.0
    %190 = vadd.xlane.f32.xlu0 %v189
    %v191 = vpop.xlane.xlu0 %190
    %v192 = vmax.f32 %v188, 1e-24
    %v193 = vmax.f32 %v191, 1e-24
    %v194 = vrsqrt.pop %v192
    %v195 = vrsqrt.pop %v193
    %v196 = vmul.f32 %v112, %v194
    %v197 = vmul.f32 %v113, %v195
    %v198 = vmul.f32 %v165, %v182
    %v199 = vmul.f32 %v166, %v183
    %v202 = vrot.slane %v199, 7
    %v203 = vsel %vm152, %v202, %v198
    %v205 = vsel %vm155, %v203, 0.0
    %206 = vadd.xlane.f32.xlu0 %v205
    %v207 = vpop.xlane.xlu0 %206
    %v208 = vmul.f32 %v207, 14.285714
    %v209 = vlaneseq
    %v210 = vshrl.u32 %v209, 7
    %v211 = vsub.s32 0, %v210
    %v212 = vrot.slane %v165, %v211
    %v213 = vlaneseq
    %v214 = vshrl.u32 %v213, 7
    %v215 = vsub.s32 0, %v214
    %v216 = vrot.slane %v166, %v215
    %v217 = vmul.f32 %v212, %v196
    %v218 = vmul.f32 %v216, %v197
    %v219 = vsel %vm114, %v217, 0.0
    %220 = vadd.xlane.f32.xlu0 %v219
    %v221 = vpop.xlane.xlu0 %220
    %v222 = vsel %vm114, %v218, 0.0
    %223 = vadd.xlane.f32.xlu0 %v222
    %v224 = vpop.xlane.xlu0 %223
    %v225 = vmul.f32 %v221, 14.285714
    %v226 = vmul.f32 %v224, 14.285714
    %v229 = vlaneseq
    %v230 = vand.u32 %v229, 127
    %v231 = vlaneseq
    %v232 = vshrl.u32 %v231, 7
    %v233 = vsub.s32 %v230, %v232
    %v234 = vrot.slane %v225, %v233
    %v235 = vlaneseq
    %v236 = vshrl.u32 %v235, 7
    %v237 = vsub.s32 %v230, %v236
    %v238 = vrot.slane %v226, %v237
    %v239 = vsel %vm152, %v238, %v234
    %vm241 = vcmask 58368
    %v242 = vsel %vm241, %v239, -inf
    %243 = vmax.xlane.f32.xlu0 %v242
    %v244 = vpop.xlane.xlu0 %243
    %v245 = vmax.f32 %v244, %v208
    %v246 = vsub.f32 %v208, %v245
    %v247 = vmul.f32 %v246, 1.442695
    %v248 = vpow.pop %v247
    %v250 = vlaneseq
    %v251 = vshrl.u32 %v250, 7
    %v252 = vsub.s32 0, %v251
    %v253 = vrot.slane %v245, %v252
    %v254 = vlaneseq
    %v255 = vshrl.u32 %v254, 7
    %v256 = vsub.s32 1, %v255
    %v257 = vrot.slane %v245, %v256
    %v260 = vsub.f32 %v225, %v253
    %v261 = vsub.f32 %v226, %v257
    %v262 = vmul.f32 %v260, 1.442695
    %v263 = vpow.pop %v262
    %v264 = vmul.f32 %v261, 1.442695
    %v265 = vpow.pop %v264
    %268 = vset.pattern.permute.xlu0 0
    %269 = vperm.xlu0 %268, %v263
    %v270 = vpop.permute.xlu0 %269
    %271 = vset.pattern.permute.xlu0 0
    %272 = vperm.xlu0 %271, %v265
    %v273 = vpop.permute.xlu0 %272
    %v274 = vlaneseq
    %v275 = vshrl.u32 %v274, 7
    %v276 = vsub.s32 %v230, %v275
    %v277 = vrot.slane %v270, %v276
    %v278 = vlaneseq
    %v279 = vshrl.u32 %v278, 7
    %v280 = vsub.s32 %v230, %v279
    %v281 = vrot.slane %v273, %v280
    %v282 = vsel %vm152, %v281, %v277
    %v284 = vsel %vm241, %v282, 0.0
    %285 = vadd.xlane.f32.xlu0 %v284
    %v286 = vpop.xlane.xlu0 %285
    %v287 = vadd.f32 %v248, %v286
    %v288 = vlog2.pop %v287
    %v289 = vmul.f32 %v288, 0.6931472
    %v290 = vadd.f32 %v289, %v245
    %v291 = vsub.f32 %v290, %v208
    %vm292 = vcmask 1024
    %v293 = vsel %vm292, %v291, 0.0
    %294 = vadd.xlane.f32.xlu0 %v293
    %v295 = vpop.xlane.xlu0 %294
    %v296 = vrot.slane %v295, 4
    %v297 = vadd.f32 %v295, %v296
    %v298 = vrot.slane %v297, 2
    %v299 = vadd.f32 %v297, %v298
    %v300 = vrot.slane %v299, 1
    %v301 = vadd.f32 %v299, %v300
    %s302 = vtos %v301
    %v303 = vrcp.pop 2.0
    %s304 = vtos %v303
    %s305 = smul.f32 %s302, %s304
    %v306 = vsel %vm114, %v110, 0.0
    %v307 = vrot.slane %v306, 4
    %v308 = vadd.f32 %v306, %v307
    %v309 = vrot.slane %v308, 2
    %v310 = vadd.f32 %v308, %v309
    %v311 = vrot.slane %v310, 1
    %v312 = vadd.f32 %v310, %v311
    %v313 = vsel %vm114, %v111, 0.0
    %v314 = vrot.slane %v313, 4
    %v315 = vadd.f32 %v313, %v314
    %v316 = vrot.slane %v315, 2
    %v317 = vadd.f32 %v315, %v316
    %v318 = vrot.slane %v317, 1
    %v319 = vadd.f32 %v317, %v318
    %v320 = vmul.f32 %v312, %v129
    %v321 = vmul.f32 %v319, %v129
    %v322 = vsel %vm114, %v112, 0.0
    %v323 = vrot.slane %v322, 4
    %v324 = vadd.f32 %v322, %v323
    %v325 = vrot.slane %v324, 2
    %v326 = vadd.f32 %v324, %v325
    %v327 = vrot.slane %v326, 1
    %v328 = vadd.f32 %v326, %v327
    %v329 = vsel %vm114, %v113, 0.0
    %v330 = vrot.slane %v329, 4
    %v331 = vadd.f32 %v329, %v330
    %v332 = vrot.slane %v331, 2
    %v333 = vadd.f32 %v331, %v332
    %v334 = vrot.slane %v333, 1
    %v335 = vadd.f32 %v333, %v334
    %v336 = vmul.f32 %v328, %v129
    %v337 = vmul.f32 %v335, %v129
    %v338 = vmul.f32 %v320, %v320
    %v339 = vmul.f32 %v321, %v321
    %v342 = vsel %vm152, %v339, %v338
    %v344 = vsel %vm155, %v342, 0.0
    %345 = vadd.xlane.f32.xlu0 %v344
    %v346 = vpop.xlane.xlu0 %345
    %v347 = vmax.f32 %v346, 1e-24
    %v348 = vrsqrt.pop %v347
    %v350 = vrot.slane %v348, 1
    %v353 = vmul.f32 %v320, %v348
    %v354 = vmul.f32 %v321, %v350
    %v355 = vmul.f32 %v336, %v336
    %v356 = vmul.f32 %v337, %v337
    %v359 = vsel %vm152, %v356, %v355
    %v361 = vsel %vm155, %v359, 0.0
    %362 = vadd.xlane.f32.xlu0 %v361
    %v363 = vpop.xlane.xlu0 %362
    %v364 = vmax.f32 %v363, 1e-24
    %v365 = vrsqrt.pop %v364
    %v367 = vrot.slane %v365, 1
    %v370 = vmul.f32 %v336, %v365
    %v371 = vmul.f32 %v337, %v367
    %v372 = vmul.f32 %v108, %v108
    %v373 = vmul.f32 %v109, %v109
    %v374 = vsel %vm114, %v372, 0.0
    %375 = vadd.xlane.f32.xlu0 %v374
    %v376 = vpop.xlane.xlu0 %375
    %v377 = vsel %vm114, %v373, 0.0
    %378 = vadd.xlane.f32.xlu0 %v377
    %v379 = vpop.xlane.xlu0 %378
    %v380 = vmax.f32 %v376, 1e-24
    %v381 = vmax.f32 %v379, 1e-24
    %v382 = vrsqrt.pop %v380
    %v383 = vrsqrt.pop %v381
    %v384 = vmul.f32 %v108, %v382
    %v385 = vmul.f32 %v109, %v383
    %v386 = vmul.f32 %v353, %v370
    %v387 = vmul.f32 %v354, %v371
    %v390 = vrot.slane %v387, 7
    %v391 = vsel %vm152, %v390, %v386
    %v393 = vsel %vm155, %v391, 0.0
    %394 = vadd.xlane.f32.xlu0 %v393
    %v395 = vpop.xlane.xlu0 %394
    %v396 = vmul.f32 %v395, 14.285714
    %v397 = vlaneseq
    %v398 = vshrl.u32 %v397, 7
    %v399 = vsub.s32 0, %v398
    %v400 = vrot.slane %v353, %v399
    %v401 = vlaneseq
    %v402 = vshrl.u32 %v401, 7
    %v403 = vsub.s32 0, %v402
    %v404 = vrot.slane %v354, %v403
    %v405 = vmul.f32 %v400, %v384
    %v406 = vmul.f32 %v404, %v385
    %v407 = vsel %vm114, %v405, 0.0
    %408 = vadd.xlane.f32.xlu0 %v407
    %v409 = vpop.xlane.xlu0 %408
    %v410 = vsel %vm114, %v406, 0.0
    %411 = vadd.xlane.f32.xlu0 %v410
    %v412 = vpop.xlane.xlu0 %411
    %v413 = vmul.f32 %v409, 14.285714
    %v414 = vmul.f32 %v412, 14.285714
    %v417 = vlaneseq
    %v418 = vshrl.u32 %v417, 7
    %v419 = vsub.s32 %v230, %v418
    %v420 = vrot.slane %v413, %v419
    %v421 = vlaneseq
    %v422 = vshrl.u32 %v421, 7
    %v423 = vsub.s32 %v230, %v422
    %v424 = vrot.slane %v414, %v423
    %v425 = vsel %vm152, %v424, %v420
    %v427 = vsel %vm241, %v425, -inf
    %428 = vmax.xlane.f32.xlu0 %v427
    %v429 = vpop.xlane.xlu0 %428
    %v430 = vmax.f32 %v429, %v396
    %v431 = vsub.f32 %v396, %v430
    %v432 = vmul.f32 %v431, 1.442695
    %v433 = vpow.pop %v432
    %v435 = vlaneseq
    %v436 = vshrl.u32 %v435, 7
    %v437 = vsub.s32 0, %v436
    %v438 = vrot.slane %v430, %v437
    %v439 = vlaneseq
    %v440 = vshrl.u32 %v439, 7
    %v441 = vsub.s32 1, %v440
    %v442 = vrot.slane %v430, %v441
    %v445 = vsub.f32 %v413, %v438
    %v446 = vsub.f32 %v414, %v442
    %v447 = vmul.f32 %v445, 1.442695
    %v448 = vpow.pop %v447
    %v449 = vmul.f32 %v446, 1.442695
    %v450 = vpow.pop %v449
    %453 = vset.pattern.permute.xlu0 0
    %454 = vperm.xlu0 %453, %v448
    %v455 = vpop.permute.xlu0 %454
    %456 = vset.pattern.permute.xlu0 0
    %457 = vperm.xlu0 %456, %v450
    %v458 = vpop.permute.xlu0 %457
    %v459 = vlaneseq
    %v460 = vshrl.u32 %v459, 7
    %v461 = vsub.s32 %v230, %v460
    %v462 = vrot.slane %v455, %v461
    %v463 = vlaneseq
    %v464 = vshrl.u32 %v463, 7
    %v465 = vsub.s32 %v230, %v464
    %v466 = vrot.slane %v458, %v465
    %v467 = vsel %vm152, %v466, %v462
    %v469 = vsel %vm241, %v467, 0.0
    %470 = vadd.xlane.f32.xlu0 %v469
    %v471 = vpop.xlane.xlu0 %470
    %v472 = vadd.f32 %v433, %v471
    %v473 = vlog2.pop %v472
    %v474 = vmul.f32 %v473, 0.6931472
    %v475 = vadd.f32 %v474, %v430
    %v476 = vsub.f32 %v475, %v396
    %v477 = vsel %vm292, %v476, 0.0
    %478 = vadd.xlane.f32.xlu0 %v477
    %v479 = vpop.xlane.xlu0 %478
    %v480 = vrot.slane %v479, 4
    %v481 = vadd.f32 %v479, %v480
    %v482 = vrot.slane %v481, 2
    %v483 = vadd.f32 %v481, %v482
    %v484 = vrot.slane %v483, 1
    %v485 = vadd.f32 %v483, %v484
    %s486 = vtos %v485
    %v487 = vrcp.pop 2.0
    %s488 = vtos %v487
    %s489 = smul.f32 %s486, %s488
    %s490 = sadd.f32 %s305, %s489
    %v491 = vld [vmem:[#allocation5] sm:$0x3]
    %v492 = vld [vmem:[#allocation5 + $0x2] sm:$0x3]
    %v493 = vld [vmem:[#allocation5 + $0x4] sm:$0x3]
    %v494 = vld [vmem:[#allocation5 + $0x6] sm:$0x3]
    %v495 = vsub.f32 1.0, %v491
    %v496 = vsub.f32 1.0, %v492
    %v497 = vmul.f32 %v495, %v495
    %v498 = vmul.f32 %v496, %v496
    %vm499 = vcmask 123904
    %v500 = vsel %vm499, %v497, 0.0
    %v501 = vsel %vm499, %v498, 0.0
    %v502 = vadd.f32 %v500, %v501
    %503 = vadd.xlane.f32.xlu0 %v502
    %v504 = vpop.xlane.xlu0 %503
    %v505 = vrot.slane %v504, 4
    %v506 = vadd.f32 %v504, %v505
    %v507 = vrot.slane %v506, 2
    %v508 = vadd.f32 %v506, %v507
    %v509 = vrot.slane %v508, 1
    %v510 = vadd.f32 %v508, %v509
    %s511 = vtos %v510
    %v512 = vrcp.pop 64.0
    %s513 = vtos %v512
    %s514 = smul.f32 %s511, %s513
    %v515 = vmul.f32 %v493, %v493
    %v516 = vmul.f32 %v494, %v494
    %v517 = vsel %vm499, %v515, 0.0
    %v518 = vsel %vm499, %v516, 0.0
    %v519 = vadd.f32 %v517, %v518
    %520 = vadd.xlane.f32.xlu0 %v519
    %v521 = vpop.xlane.xlu0 %520
    %v522 = vrot.slane %v521, 4
    %v523 = vadd.f32 %v521, %v522
    %v524 = vrot.slane %v523, 2
    %v525 = vadd.f32 %v523, %v524
    %v526 = vrot.slane %v525, 1
    %v527 = vadd.f32 %v525, %v526
    %s528 = vtos %v527
    %v529 = vrcp.pop 64.0
    %s530 = vtos %v529
    %s531 = smul.f32 %s528, %s530
    %s532 = sadd.f32 %s514, %s531
    %v533 = vld [vmem:[#allocation8] sm:$0xff]
    %v534 = vld [vmem:[#allocation8 + $0x8] sm:$0xf]
    %s535 = scalar_lea.vmem [#allocation8], 12
    %v536 = vld [vmem:[%s535] sm:$0xff]
    %v537 = vld [vmem:[%s535 + $0x8] sm:$0xf]
    %s538 = scalar_lea.vmem [#allocation8], 24
    %v539 = vld [vmem:[%s538] sm:$0xff]
    %v540 = vld [vmem:[%s538 + $0x8] sm:$0xf]
    %s541 = scalar_lea.vmem [#allocation8], 156
    %v542 = vld [vmem:[%s541] sm:$0xff]
    %v543 = vld [vmem:[%s541 + $0x8] sm:$0xf]
    %v544 = vsub.f32 %v539, %v542
    %v545 = vsub.f32 %v540, %v543
    %s546 = scalar_lea.vmem [#allocation8], 36
    %v547 = vld [vmem:[%s546] sm:$0xff]
    %v548 = vld [vmem:[%s546 + $0x8] sm:$0xf]
    %s549 = scalar_lea.vmem [#allocation8], 168
    %v550 = vld [vmem:[%s549] sm:$0xff]
    %v551 = vld [vmem:[%s549 + $0x8] sm:$0xf]
    %v552 = vsub.f32 %v547, %v550
    %v553 = vsub.f32 %v548, %v551
    %v554 = vmax.f32 %v544, %v552
    %v555 = vmax.f32 %v545, %v553
    %s556 = scalar_lea.vmem [#allocation8], 48
    %v557 = vld [vmem:[%s556] sm:$0xff]
    %v558 = vld [vmem:[%s556 + $0x8] sm:$0xf]
    %s559 = scalar_lea.vmem [#allocation8], 180
    %v560 = vld [vmem:[%s559] sm:$0xff]
    %v561 = vld [vmem:[%s559 + $0x8] sm:$0xf]
    %v562 = vsub.f32 %v557, %v560
    %v563 = vsub.f32 %v558, %v561
    %v564 = vmax.f32 %v554, %v562
    %v565 = vmax.f32 %v555, %v563
    %s566 = scalar_lea.vmem [#allocation8], 60
    %v567 = vld [vmem:[%s566] sm:$0xff]
    %v568 = vld [vmem:[%s566 + $0x8] sm:$0xf]
    %s569 = scalar_lea.vmem [#allocation8], 192
    %v570 = vld [vmem:[%s569] sm:$0xff]
    %v571 = vld [vmem:[%s569 + $0x8] sm:$0xf]
    %v572 = vsub.f32 %v567, %v570
    %v573 = vsub.f32 %v568, %v571
    %v574 = vmax.f32 %v564, %v572
    %v575 = vmax.f32 %v565, %v573
    %s576 = scalar_lea.vmem [#allocation8], 72
    %v577 = vld [vmem:[%s576] sm:$0xff]
    %v578 = vld [vmem:[%s576 + $0x8] sm:$0xf]
    %s579 = scalar_lea.vmem [#allocation8], 204
    %v580 = vld [vmem:[%s579] sm:$0xff]
    %v581 = vld [vmem:[%s579 + $0x8] sm:$0xf]
    %v582 = vsub.f32 %v577, %v580
    %v583 = vsub.f32 %v578, %v581
    %v584 = vmax.f32 %v574, %v582
    %v585 = vmax.f32 %v575, %v583
    %s586 = scalar_lea.vmem [#allocation8], 84
    %v587 = vld [vmem:[%s586] sm:$0xff]
    %v588 = vld [vmem:[%s586 + $0x8] sm:$0xf]
    %s589 = scalar_lea.vmem [#allocation8], 216
    %v590 = vld [vmem:[%s589] sm:$0xff]
    %v591 = vld [vmem:[%s589 + $0x8] sm:$0xf]
    %v592 = vsub.f32 %v587, %v590
    %v593 = vsub.f32 %v588, %v591
    %v594 = vmax.f32 %v584, %v592
    %v595 = vmax.f32 %v585, %v593
    %s596 = scalar_lea.vmem [#allocation8], 96
    %v597 = vld [vmem:[%s596] sm:$0xff]
    %v598 = vld [vmem:[%s596 + $0x8] sm:$0xf]
    %s599 = scalar_lea.vmem [#allocation8], 228
    %v600 = vld [vmem:[%s599] sm:$0xff]
    %v601 = vld [vmem:[%s599 + $0x8] sm:$0xf]
    %v602 = vsub.f32 %v597, %v600
    %v603 = vsub.f32 %v598, %v601
    %v604 = vmax.f32 %v594, %v602
    %v605 = vmax.f32 %v595, %v603
    %s606 = scalar_lea.vmem [#allocation8], 108
    %v607 = vld [vmem:[%s606] sm:$0xff]
    %v608 = vld [vmem:[%s606 + $0x8] sm:$0xf]
    %s609 = scalar_lea.vmem [#allocation8], 240
    %v610 = vld [vmem:[%s609] sm:$0xff]
    %v611 = vld [vmem:[%s609 + $0x8] sm:$0xf]
    %v612 = vsub.f32 %v607, %v610
    %v613 = vsub.f32 %v608, %v611
    %v614 = vmax.f32 %v604, %v612
    %v615 = vmax.f32 %v605, %v613
    %s616 = scalar_lea.vmem [#allocation8], 120
    %v617 = vld [vmem:[%s616] sm:$0xff]
    %v618 = vld [vmem:[%s616 + $0x8] sm:$0xf]
    %s619 = scalar_lea.vmem [#allocation8], 252
    %v620 = vld [vmem:[%s619] sm:$0xff]
    %v621 = vld [vmem:[%s619 + $0x8] sm:$0xf]
    %v622 = vsub.f32 %v617, %v620
    %v623 = vsub.f32 %v618, %v621
    %v624 = vmax.f32 %v614, %v622
    %v625 = vmax.f32 %v615, %v623
    %s626 = scalar_lea.vmem [#allocation8], 132
    %v627 = vld [vmem:[%s626] sm:$0xff]
    %v628 = vld [vmem:[%s626 + $0x8] sm:$0xf]
    %s629 = scalar_lea.vmem [#allocation8], 264
    %v630 = vld [vmem:[%s629] sm:$0xff]
    %v631 = vld [vmem:[%s629 + $0x8] sm:$0xf]
    %v632 = vsub.f32 %v627, %v630
    %v633 = vsub.f32 %v628, %v631
    %v634 = vmax.f32 %v624, %v632
    %v635 = vmax.f32 %v625, %v633
    %s636 = scalar_lea.vmem [#allocation8], 144
    %v637 = vld [vmem:[%s636] sm:$0xff]
    %v638 = vld [vmem:[%s636 + $0x8] sm:$0xf]
    %s639 = scalar_lea.vmem [#allocation8], 276
    %v640 = vld [vmem:[%s639] sm:$0xff]
    %v641 = vld [vmem:[%s639 + $0x8] sm:$0xf]
    %v642 = vsub.f32 %v637, %v640
    %v643 = vsub.f32 %v638, %v641
    %v644 = vmax.f32 %v634, %v642
    %v645 = vmax.f32 %v635, %v643
    %v646 = vmul.f32 %v644, 0.5
    %v647 = vmul.f32 %v645, 0.5
    %v648 = vmul.f32 %v646, %v644
    %v649 = vmul.f32 %v647, %v645
    %s650 = scalar_lea.vmem [#allocation8], 288
    %v651 = vld [vmem:[%s650] sm:$0xff]
    %v652 = vld [vmem:[%s650 + $0x8] sm:$0xf]
    %v653 = vsub.f32 %v533, %v542
    %v654 = vsub.f32 %v534, %v543
    %v655 = vmul.f32 %v653, %v653
    %v656 = vmul.f32 %v654, %v654
    %v659 = vcombine.high %v655, %v655
    %v661 = vunpack.c.l.s4 1983009808
    %v662 = vunpack.c.0.s8 %v661
    %v663 = vlaneseq
    %v664 = vshrl.u32 %v663, 7
    %v665 = vsub.s32 %v662, %v664
    %v666 = vrot.slane %v655, %v665
    %v668 = vunpack.c.l.s4 1983009808
    %v669 = vunpack.c.0.s8 %v668
    %v670 = vlaneseq
    %v671 = vshrl.u32 %v670, 7
    %v672 = vsub.s32 %v669, %v671
    %v673 = vrot.slane %v659, %v672
    %v674 = vcombine.high %v666, %v666
    %v675 = vcombine.high %v673, %v673
    %v677 = vunpack.c.l.s4 1983009808
    %v678 = vunpack.c.0.s8 %v677
    %v679 = vlaneseq
    %v680 = vshrl.u32 %v679, 7
    %v681 = vsub.s32 %v678, %v680
    %v682 = vrot.slane %v656, %v681
    %v683 = vcombine.high %v682, %v682
    %vm690 = vcmask 1041408
    %v691 = vsel %vm690, %v666, 0.0
    %v692 = vrot.slane %v691, 4
    %v693 = vadd.f32 %v691, %v692
    %v694 = vrot.slane %v693, 2
    %v695 = vadd.f32 %v693, %v694
    %v696 = vrot.slane %v695, 1
    %v697 = vadd.f32 %v695, %v696
    %v698 = vsel %vm690, %v674, 0.0
    %v699 = vrot.slane %v698, 4
    %v700 = vadd.f32 %v698, %v699
    %v701 = vrot.slane %v700, 2
    %v702 = vadd.f32 %v700, %v701
    %v703 = vrot.slane %v702, 1
    %v704 = vadd.f32 %v702, %v703
    %v705 = vsel %vm690, %v673, 0.0
    %v706 = vrot.slane %v705, 4
    %v707 = vadd.f32 %v705, %v706
    %v708 = vrot.slane %v707, 2
    %v709 = vadd.f32 %v707, %v708
    %v710 = vrot.slane %v709, 1
    %v711 = vadd.f32 %v709, %v710
    %v712 = vsel %vm690, %v675, 0.0
    %v713 = vrot.slane %v712, 4
    %v714 = vadd.f32 %v712, %v713
    %v715 = vrot.slane %v714, 2
    %v716 = vadd.f32 %v714, %v715
    %v717 = vrot.slane %v716, 1
    %v718 = vadd.f32 %v716, %v717
    %v719 = vsel %vm690, %v682, 0.0
    %v720 = vrot.slane %v719, 4
    %v721 = vadd.f32 %v719, %v720
    %v722 = vrot.slane %v721, 2
    %v723 = vadd.f32 %v721, %v722
    %v724 = vrot.slane %v723, 1
    %v725 = vadd.f32 %v723, %v724
    %vm726 = vcmask 893952
    %v727 = vsel %vm726, %v683, 0.0
    %v728 = vrot.slane %v727, 4
    %v729 = vadd.f32 %v727, %v728
    %v730 = vrot.slane %v729, 2
    %v731 = vadd.f32 %v729, %v730
    %v732 = vrot.slane %v731, 1
    %v733 = vadd.f32 %v731, %v732
    %v736 = vcombine.high %v648, %v648
    %v738 = vunpack.c.l.s4 1983009808
    %v739 = vunpack.c.0.s8 %v738
    %v740 = vlaneseq
    %v741 = vshrl.u32 %v740, 7
    %v742 = vsub.s32 %v739, %v741
    %v743 = vrot.slane %v648, %v742
    %v745 = vunpack.c.l.s4 1983009808
    %v746 = vunpack.c.0.s8 %v745
    %v747 = vlaneseq
    %v748 = vshrl.u32 %v747, 7
    %v749 = vsub.s32 %v746, %v748
    %v750 = vrot.slane %v736, %v749
    %v751 = vcombine.high %v743, %v743
    %v752 = vcombine.high %v750, %v750
    %v754 = vunpack.c.l.s4 1983009808
    %v755 = vunpack.c.0.s8 %v754
    %v756 = vlaneseq
    %v757 = vshrl.u32 %v756, 7
    %v758 = vsub.s32 %v755, %v757
    %v759 = vrot.slane %v649, %v758
    %v760 = vcombine.high %v759, %v759
    %v767 = vmax.f32 %v697, %v743
    %v768 = vmax.f32 %v704, %v751
    %v769 = vmax.f32 %v711, %v750
    %v770 = vmax.f32 %v718, %v752
    %v771 = vmax.f32 %v725, %v759
    %v772 = vmax.f32 %v733, %v760
    %v773 = vsub.f32 0.0, %v767
    %v774 = vsub.f32 0.0, %v768
    %v775 = vsub.f32 0.0, %v769
    %v776 = vsub.f32 0.0, %v770
    %v777 = vsub.f32 0.0, %v771
    %v778 = vsub.f32 0.0, %v772
    %v779 = vmul.f32 %v773, 0.5
    %v780 = vmul.f32 %v774, 0.5
    %v781 = vmul.f32 %v775, 0.5
    %v782 = vmul.f32 %v776, 0.5
    %v783 = vmul.f32 %v777, 0.5
    %v784 = vmul.f32 %v778, 0.5
    %v785 = vmul.f32 %v779, 1.442695
    %v786 = vpow.pop %v785
    %v787 = vmul.f32 %v780, 1.442695
    %v788 = vpow.pop %v787
    %v789 = vmul.f32 %v781, 1.442695
    %v790 = vpow.pop %v789
    %v791 = vmul.f32 %v782, 1.442695
    %v792 = vpow.pop %v791
    %v793 = vmul.f32 %v783, 1.442695
    %v794 = vpow.pop %v793
    %v795 = vmul.f32 %v784, 1.442695
    %v796 = vpow.pop %v795
    %v797 = vsub.f32 %v536, %v651
    %v798 = vsub.f32 %v537, %v652
    %v799 = vand.u32 2147483647, %v797
    %v800 = vand.u32 2147483647, %v798
    %v803 = vcombine.high %v799, %v799
    %v805 = vunpack.c.l.s4 1983009808
    %v806 = vunpack.c.0.s8 %v805
    %v807 = vlaneseq
    %v808 = vshrl.u32 %v807, 7
    %v809 = vsub.s32 %v806, %v808
    %v810 = vrot.slane %v799, %v809
    %v812 = vunpack.c.l.s4 1983009808
    %v813 = vunpack.c.0.s8 %v812
    %v814 = vlaneseq
    %v815 = vshrl.u32 %v814, 7
    %v816 = vsub.s32 %v813, %v815
    %v817 = vrot.slane %v803, %v816
    %v818 = vcombine.high %v810, %v810
    %v819 = vcombine.high %v817, %v817
    %v821 = vunpack.c.l.s4 1983009808
    %v822 = vunpack.c.0.s8 %v821
    %v823 = vlaneseq
    %v824 = vshrl.u32 %v823, 7
    %v825 = vsub.s32 %v822, %v824
    %v826 = vrot.slane %v800, %v825
    %v827 = vcombine.high %v826, %v826
    %v834 = vmul.f32 %v786, %v810
    %v835 = vmul.f32 %v788, %v818
    %v836 = vmul.f32 %v790, %v817
    %v837 = vmul.f32 %v792, %v819
    %v838 = vmul.f32 %v794, %v826
    %v839 = vmul.f32 %v796, %v827
    %v840 = vadd.f32 %v834, 0.0
    %v841 = vadd.f32 %v835, 0.0
    %v842 = vadd.f32 %v836, 0.0
    %v843 = vadd.f32 %v837, 0.0
    %v844 = vadd.f32 %v838, 0.0
    %v845 = vadd.f32 %v839, 0.0
    %s846 = scalar_lea.vmem [#allocation8], 300
    %v847 = vld [vmem:[%s846] sm:$0xff]
    %v848 = vld [vmem:[%s846 + $0x8] sm:$0xf]
    %v849 = vsub.f32 %v533, %v550
    %v850 = vsub.f32 %v534, %v551
    %v851 = vmul.f32 %v849, %v849
    %v852 = vmul.f32 %v850, %v850
    %v855 = vcombine.high %v851, %v851
    %v857 = vunpack.c.l.s4 1983009808
    %v858 = vunpack.c.0.s8 %v857
    %v859 = vlaneseq
    %v860 = vshrl.u32 %v859, 7
    %v861 = vsub.s32 %v858, %v860
    %v862 = vrot.slane %v851, %v861
    %v864 = vunpack.c.l.s4 1983009808
    %v865 = vunpack.c.0.s8 %v864
    %v866 = vlaneseq
    %v867 = vshrl.u32 %v866, 7
    %v868 = vsub.s32 %v865, %v867
    %v869 = vrot.slane %v855, %v868
    %v870 = vcombine.high %v862, %v862
    %v871 = vcombine.high %v869, %v869
    %v873 = vunpack.c.l.s4 1983009808
    %v874 = vunpack.c.0.s8 %v873
    %v875 = vlaneseq
    %v876 = vshrl.u32 %v875, 7
    %v877 = vsub.s32 %v874, %v876
    %v878 = vrot.slane %v852, %v877
    %v879 = vcombine.high %v878, %v878
    %v886 = vsel %vm690, %v862, 0.0
    %v887 = vrot.slane %v886, 4
    %v888 = vadd.f32 %v886, %v887
    %v889 = vrot.slane %v888, 2
    %v890 = vadd.f32 %v888, %v889
    %v891 = vrot.slane %v890, 1
    %v892 = vadd.f32 %v890, %v891
    %v893 = vsel %vm690, %v870, 0.0
    %v894 = vrot.slane %v893, 4
    %v895 = vadd.f32 %v893, %v894
    %v896 = vrot.slane %v895, 2
    %v897 = vadd.f32 %v895, %v896
    %v898 = vrot.slane %v897, 1
    %v899 = vadd.f32 %v897, %v898
    %v900 = vsel %vm690, %v869, 0.0
    %v901 = vrot.slane %v900, 4
    %v902 = vadd.f32 %v900, %v901
    %v903 = vrot.slane %v902, 2
    %v904 = vadd.f32 %v902, %v903
    %v905 = vrot.slane %v904, 1
    %v906 = vadd.f32 %v904, %v905
    %v907 = vsel %vm690, %v871, 0.0
    %v908 = vrot.slane %v907, 4
    %v909 = vadd.f32 %v907, %v908
    %v910 = vrot.slane %v909, 2
    %v911 = vadd.f32 %v909, %v910
    %v912 = vrot.slane %v911, 1
    %v913 = vadd.f32 %v911, %v912
    %v914 = vsel %vm690, %v878, 0.0
    %v915 = vrot.slane %v914, 4
    %v916 = vadd.f32 %v914, %v915
    %v917 = vrot.slane %v916, 2
    %v918 = vadd.f32 %v916, %v917
    %v919 = vrot.slane %v918, 1
    %v920 = vadd.f32 %v918, %v919
    %v921 = vsel %vm726, %v879, 0.0
    %v922 = vrot.slane %v921, 4
    %v923 = vadd.f32 %v921, %v922
    %v924 = vrot.slane %v923, 2
    %v925 = vadd.f32 %v923, %v924
    %v926 = vrot.slane %v925, 1
    %v927 = vadd.f32 %v925, %v926
    %v928 = vmax.f32 %v892, %v743
    %v929 = vmax.f32 %v899, %v751
    %v930 = vmax.f32 %v906, %v750
    %v931 = vmax.f32 %v913, %v752
    %v932 = vmax.f32 %v920, %v759
    %v933 = vmax.f32 %v927, %v760
    %v934 = vsub.f32 0.0, %v928
    %v935 = vsub.f32 0.0, %v929
    %v936 = vsub.f32 0.0, %v930
    %v937 = vsub.f32 0.0, %v931
    %v938 = vsub.f32 0.0, %v932
    %v939 = vsub.f32 0.0, %v933
    %v940 = vmul.f32 %v934, 0.5
    %v941 = vmul.f32 %v935, 0.5
    %v942 = vmul.f32 %v936, 0.5
    %v943 = vmul.f32 %v937, 0.5
    %v944 = vmul.f32 %v938, 0.5
    %v945 = vmul.f32 %v939, 0.5
    %v946 = vmul.f32 %v940, 1.442695
    %v947 = vpow.pop %v946
    %v948 = vmul.f32 %v941, 1.442695
    %v949 = vpow.pop %v948
    %v950 = vmul.f32 %v942, 1.442695
    %v951 = vpow.pop %v950
    %v952 = vmul.f32 %v943, 1.442695
    %v953 = vpow.pop %v952
    %v954 = vmul.f32 %v944, 1.442695
    %v955 = vpow.pop %v954
    %v956 = vmul.f32 %v945, 1.442695
    %v957 = vpow.pop %v956
    %v958 = vsub.f32 %v536, %v847
    %v959 = vsub.f32 %v537, %v848
    %v960 = vand.u32 2147483647, %v958
    %v961 = vand.u32 2147483647, %v959
    %v964 = vcombine.high %v960, %v960
    %v966 = vunpack.c.l.s4 1983009808
    %v967 = vunpack.c.0.s8 %v966
    %v968 = vlaneseq
    %v969 = vshrl.u32 %v968, 7
    %v970 = vsub.s32 %v967, %v969
    %v971 = vrot.slane %v960, %v970
    %v973 = vunpack.c.l.s4 1983009808
    %v974 = vunpack.c.0.s8 %v973
    %v975 = vlaneseq
    %v976 = vshrl.u32 %v975, 7
    %v977 = vsub.s32 %v974, %v976
    %v978 = vrot.slane %v964, %v977
    %v979 = vcombine.high %v971, %v971
    %v980 = vcombine.high %v978, %v978
    %v982 = vunpack.c.l.s4 1983009808
    %v983 = vunpack.c.0.s8 %v982
    %v984 = vlaneseq
    %v985 = vshrl.u32 %v984, 7
    %v986 = vsub.s32 %v983, %v985
    %v987 = vrot.slane %v961, %v986
    %v988 = vcombine.high %v987, %v987
    %v995 = vmul.f32 %v947, %v971
    %v996 = vmul.f32 %v949, %v979
    %v997 = vmul.f32 %v951, %v978
    %v998 = vmul.f32 %v953, %v980
    %v999 = vmul.f32 %v955, %v987
    %v1000 = vmul.f32 %v957, %v988
    %v1001 = vadd.f32 %v840, %v995
    %v1002 = vadd.f32 %v841, %v996
    %v1003 = vadd.f32 %v842, %v997
    %v1004 = vadd.f32 %v843, %v998
    %v1005 = vadd.f32 %v844, %v999
    %v1006 = vadd.f32 %v845, %v1000
    %s1007 = scalar_lea.vmem [#allocation8], 312
    %v1008 = vld [vmem:[%s1007] sm:$0xff]
    %v1009 = vld [vmem:[%s1007 + $0x8] sm:$0xf]
    %v1010 = vsub.f32 %v533, %v560
    %v1011 = vsub.f32 %v534, %v561
    %v1012 = vmul.f32 %v1010, %v1010
    %v1013 = vmul.f32 %v1011, %v1011
    %v1016 = vcombine.high %v1012, %v1012
    %v1018 = vunpack.c.l.s4 1983009808
    %v1019 = vunpack.c.0.s8 %v1018
    %v1020 = vlaneseq
    %v1021 = vshrl.u32 %v1020, 7
    %v1022 = vsub.s32 %v1019, %v1021
    %v1023 = vrot.slane %v1012, %v1022
    %v1025 = vunpack.c.l.s4 1983009808
    %v1026 = vunpack.c.0.s8 %v1025
    %v1027 = vlaneseq
    %v1028 = vshrl.u32 %v1027, 7
    %v1029 = vsub.s32 %v1026, %v1028
    %v1030 = vrot.slane %v1016, %v1029
    %v1031 = vcombine.high %v1023, %v1023
    %v1032 = vcombine.high %v1030, %v1030
    %v1034 = vunpack.c.l.s4 1983009808
    %v1035 = vunpack.c.0.s8 %v1034
    %v1036 = vlaneseq
    %v1037 = vshrl.u32 %v1036, 7
    %v1038 = vsub.s32 %v1035, %v1037
    %v1039 = vrot.slane %v1013, %v1038
    %v1040 = vcombine.high %v1039, %v1039
    %v1047 = vsel %vm690, %v1023, 0.0
    %v1048 = vrot.slane %v1047, 4
    %v1049 = vadd.f32 %v1047, %v1048
    %v1050 = vrot.slane %v1049, 2
    %v1051 = vadd.f32 %v1049, %v1050
    %v1052 = vrot.slane %v1051, 1
    %v1053 = vadd.f32 %v1051, %v1052
    %v1054 = vsel %vm690, %v1031, 0.0
    %v1055 = vrot.slane %v1054, 4
    %v1056 = vadd.f32 %v1054, %v1055
    %v1057 = vrot.slane %v1056, 2
    %v1058 = vadd.f32 %v1056, %v1057
    %v1059 = vrot.slane %v1058, 1
    %v1060 = vadd.f32 %v1058, %v1059
    %v1061 = vsel %vm690, %v1030, 0.0
    %v1062 = vrot.slane %v1061, 4
    %v1063 = vadd.f32 %v1061, %v1062
    %v1064 = vrot.slane %v1063, 2
    %v1065 = vadd.f32 %v1063, %v1064
    %v1066 = vrot.slane %v1065, 1
    %v1067 = vadd.f32 %v1065, %v1066
    %v1068 = vsel %vm690, %v1032, 0.0
    %v1069 = vrot.slane %v1068, 4
    %v1070 = vadd.f32 %v1068, %v1069
    %v1071 = vrot.slane %v1070, 2
    %v1072 = vadd.f32 %v1070, %v1071
    %v1073 = vrot.slane %v1072, 1
    %v1074 = vadd.f32 %v1072, %v1073
    %v1075 = vsel %vm690, %v1039, 0.0
    %v1076 = vrot.slane %v1075, 4
    %v1077 = vadd.f32 %v1075, %v1076
    %v1078 = vrot.slane %v1077, 2
    %v1079 = vadd.f32 %v1077, %v1078
    %v1080 = vrot.slane %v1079, 1
    %v1081 = vadd.f32 %v1079, %v1080
    %v1082 = vsel %vm726, %v1040, 0.0
    %v1083 = vrot.slane %v1082, 4
    %v1084 = vadd.f32 %v1082, %v1083
    %v1085 = vrot.slane %v1084, 2
    %v1086 = vadd.f32 %v1084, %v1085
    %v1087 = vrot.slane %v1086, 1
    %v1088 = vadd.f32 %v1086, %v1087
    %v1089 = vmax.f32 %v1053, %v743
    %v1090 = vmax.f32 %v1060, %v751
    %v1091 = vmax.f32 %v1067, %v750
    %v1092 = vmax.f32 %v1074, %v752
    %v1093 = vmax.f32 %v1081, %v759
    %v1094 = vmax.f32 %v1088, %v760
    %v1095 = vsub.f32 0.0, %v1089
    %v1096 = vsub.f32 0.0, %v1090
    %v1097 = vsub.f32 0.0, %v1091
    %v1098 = vsub.f32 0.0, %v1092
    %v1099 = vsub.f32 0.0, %v1093
    %v1100 = vsub.f32 0.0, %v1094
    %v1101 = vmul.f32 %v1095, 0.5
    %v1102 = vmul.f32 %v1096, 0.5
    %v1103 = vmul.f32 %v1097, 0.5
    %v1104 = vmul.f32 %v1098, 0.5
    %v1105 = vmul.f32 %v1099, 0.5
    %v1106 = vmul.f32 %v1100, 0.5
    %v1107 = vmul.f32 %v1101, 1.442695
    %v1108 = vpow.pop %v1107
    %v1109 = vmul.f32 %v1102, 1.442695
    %v1110 = vpow.pop %v1109
    %v1111 = vmul.f32 %v1103, 1.442695
    %v1112 = vpow.pop %v1111
    %v1113 = vmul.f32 %v1104, 1.442695
    %v1114 = vpow.pop %v1113
    %v1115 = vmul.f32 %v1105, 1.442695
    %v1116 = vpow.pop %v1115
    %v1117 = vmul.f32 %v1106, 1.442695
    %v1118 = vpow.pop %v1117
    %v1119 = vsub.f32 %v536, %v1008
    %v1120 = vsub.f32 %v537, %v1009
    %v1121 = vand.u32 2147483647, %v1119
    %v1122 = vand.u32 2147483647, %v1120
    %v1125 = vcombine.high %v1121, %v1121
    %v1127 = vunpack.c.l.s4 1983009808
    %v1128 = vunpack.c.0.s8 %v1127
    %v1129 = vlaneseq
    %v1130 = vshrl.u32 %v1129, 7
    %v1131 = vsub.s32 %v1128, %v1130
    %v1132 = vrot.slane %v1121, %v1131
    %v1134 = vunpack.c.l.s4 1983009808
    %v1135 = vunpack.c.0.s8 %v1134
    %v1136 = vlaneseq
    %v1137 = vshrl.u32 %v1136, 7
    %v1138 = vsub.s32 %v1135, %v1137
    %v1139 = vrot.slane %v1125, %v1138
    %v1140 = vcombine.high %v1132, %v1132
    %v1141 = vcombine.high %v1139, %v1139
    %v1143 = vunpack.c.l.s4 1983009808
    %v1144 = vunpack.c.0.s8 %v1143
    %v1145 = vlaneseq
    %v1146 = vshrl.u32 %v1145, 7
    %v1147 = vsub.s32 %v1144, %v1146
    %v1148 = vrot.slane %v1122, %v1147
    %v1149 = vcombine.high %v1148, %v1148
    %v1156 = vmul.f32 %v1108, %v1132
    %v1157 = vmul.f32 %v1110, %v1140
    %v1158 = vmul.f32 %v1112, %v1139
    %v1159 = vmul.f32 %v1114, %v1141
    %v1160 = vmul.f32 %v1116, %v1148
    %v1161 = vmul.f32 %v1118, %v1149
    %v1162 = vadd.f32 %v1001, %v1156
    %v1163 = vadd.f32 %v1002, %v1157
    %v1164 = vadd.f32 %v1003, %v1158
    %v1165 = vadd.f32 %v1004, %v1159
    %v1166 = vadd.f32 %v1005, %v1160
    %v1167 = vadd.f32 %v1006, %v1161
    %s1168 = scalar_lea.vmem [#allocation8], 324
    %v1169 = vld [vmem:[%s1168] sm:$0xff]
    %v1170 = vld [vmem:[%s1168 + $0x8] sm:$0xf]
    %v1171 = vsub.f32 %v533, %v570
    %v1172 = vsub.f32 %v534, %v571
    %v1173 = vmul.f32 %v1171, %v1171
    %v1174 = vmul.f32 %v1172, %v1172
    %v1177 = vcombine.high %v1173, %v1173
    %v1179 = vunpack.c.l.s4 1983009808
    %v1180 = vunpack.c.0.s8 %v1179
    %v1181 = vlaneseq
    %v1182 = vshrl.u32 %v1181, 7
    %v1183 = vsub.s32 %v1180, %v1182
    %v1184 = vrot.slane %v1173, %v1183
    %v1186 = vunpack.c.l.s4 1983009808
    %v1187 = vunpack.c.0.s8 %v1186
    %v1188 = vlaneseq
    %v1189 = vshrl.u32 %v1188, 7
    %v1190 = vsub.s32 %v1187, %v1189
    %v1191 = vrot.slane %v1177, %v1190
    %v1192 = vcombine.high %v1184, %v1184
    %v1193 = vcombine.high %v1191, %v1191
    %v1195 = vunpack.c.l.s4 1983009808
    %v1196 = vunpack.c.0.s8 %v1195
    %v1197 = vlaneseq
    %v1198 = vshrl.u32 %v1197, 7
    %v1199 = vsub.s32 %v1196, %v1198
    %v1200 = vrot.slane %v1174, %v1199
    %v1201 = vcombine.high %v1200, %v1200
    %v1208 = vsel %vm690, %v1184, 0.0
    %v1209 = vrot.slane %v1208, 4
    %v1210 = vadd.f32 %v1208, %v1209
    %v1211 = vrot.slane %v1210, 2
    %v1212 = vadd.f32 %v1210, %v1211
    %v1213 = vrot.slane %v1212, 1
    %v1214 = vadd.f32 %v1212, %v1213
    %v1215 = vsel %vm690, %v1192, 0.0
    %v1216 = vrot.slane %v1215, 4
    %v1217 = vadd.f32 %v1215, %v1216
    %v1218 = vrot.slane %v1217, 2
    %v1219 = vadd.f32 %v1217, %v1218
    %v1220 = vrot.slane %v1219, 1
    %v1221 = vadd.f32 %v1219, %v1220
    %v1222 = vsel %vm690, %v1191, 0.0
    %v1223 = vrot.slane %v1222, 4
    %v1224 = vadd.f32 %v1222, %v1223
    %v1225 = vrot.slane %v1224, 2
    %v1226 = vadd.f32 %v1224, %v1225
    %v1227 = vrot.slane %v1226, 1
    %v1228 = vadd.f32 %v1226, %v1227
    %v1229 = vsel %vm690, %v1193, 0.0
    %v1230 = vrot.slane %v1229, 4
    %v1231 = vadd.f32 %v1229, %v1230
    %v1232 = vrot.slane %v1231, 2
    %v1233 = vadd.f32 %v1231, %v1232
    %v1234 = vrot.slane %v1233, 1
    %v1235 = vadd.f32 %v1233, %v1234
    %v1236 = vsel %vm690, %v1200, 0.0
    %v1237 = vrot.slane %v1236, 4
    %v1238 = vadd.f32 %v1236, %v1237
    %v1239 = vrot.slane %v1238, 2
    %v1240 = vadd.f32 %v1238, %v1239
    %v1241 = vrot.slane %v1240, 1
    %v1242 = vadd.f32 %v1240, %v1241
    %v1243 = vsel %vm726, %v1201, 0.0
    %v1244 = vrot.slane %v1243, 4
    %v1245 = vadd.f32 %v1243, %v1244
    %v1246 = vrot.slane %v1245, 2
    %v1247 = vadd.f32 %v1245, %v1246
    %v1248 = vrot.slane %v1247, 1
    %v1249 = vadd.f32 %v1247, %v1248
    %v1250 = vmax.f32 %v1214, %v743
    %v1251 = vmax.f32 %v1221, %v751
    %v1252 = vmax.f32 %v1228, %v750
    %v1253 = vmax.f32 %v1235, %v752
    %v1254 = vmax.f32 %v1242, %v759
    %v1255 = vmax.f32 %v1249, %v760
    %v1256 = vsub.f32 0.0, %v1250
    %v1257 = vsub.f32 0.0, %v1251
    %v1258 = vsub.f32 0.0, %v1252
    %v1259 = vsub.f32 0.0, %v1253
    %v1260 = vsub.f32 0.0, %v1254
    %v1261 = vsub.f32 0.0, %v1255
    %v1262 = vmul.f32 %v1256, 0.5
    %v1263 = vmul.f32 %v1257, 0.5
    %v1264 = vmul.f32 %v1258, 0.5
    %v1265 = vmul.f32 %v1259, 0.5
    %v1266 = vmul.f32 %v1260, 0.5
    %v1267 = vmul.f32 %v1261, 0.5
    %v1268 = vmul.f32 %v1262, 1.442695
    %v1269 = vpow.pop %v1268
    %v1270 = vmul.f32 %v1263, 1.442695
    %v1271 = vpow.pop %v1270
    %v1272 = vmul.f32 %v1264, 1.442695
    %v1273 = vpow.pop %v1272
    %v1274 = vmul.f32 %v1265, 1.442695
    %v1275 = vpow.pop %v1274
    %v1276 = vmul.f32 %v1266, 1.442695
    %v1277 = vpow.pop %v1276
    %v1278 = vmul.f32 %v1267, 1.442695
    %v1279 = vpow.pop %v1278
    %v1280 = vsub.f32 %v536, %v1169
    %v1281 = vsub.f32 %v537, %v1170
    %v1282 = vand.u32 2147483647, %v1280
    %v1283 = vand.u32 2147483647, %v1281
    %v1286 = vcombine.high %v1282, %v1282
    %v1288 = vunpack.c.l.s4 1983009808
    %v1289 = vunpack.c.0.s8 %v1288
    %v1290 = vlaneseq
    %v1291 = vshrl.u32 %v1290, 7
    %v1292 = vsub.s32 %v1289, %v1291
    %v1293 = vrot.slane %v1282, %v1292
    %v1295 = vunpack.c.l.s4 1983009808
    %v1296 = vunpack.c.0.s8 %v1295
    %v1297 = vlaneseq
    %v1298 = vshrl.u32 %v1297, 7
    %v1299 = vsub.s32 %v1296, %v1298
    %v1300 = vrot.slane %v1286, %v1299
    %v1301 = vcombine.high %v1293, %v1293
    %v1302 = vcombine.high %v1300, %v1300
    %v1304 = vunpack.c.l.s4 1983009808
    %v1305 = vunpack.c.0.s8 %v1304
    %v1306 = vlaneseq
    %v1307 = vshrl.u32 %v1306, 7
    %v1308 = vsub.s32 %v1305, %v1307
    %v1309 = vrot.slane %v1283, %v1308
    %v1310 = vcombine.high %v1309, %v1309
    %v1317 = vmul.f32 %v1269, %v1293
    %v1318 = vmul.f32 %v1271, %v1301
    %v1319 = vmul.f32 %v1273, %v1300
    %v1320 = vmul.f32 %v1275, %v1302
    %v1321 = vmul.f32 %v1277, %v1309
    %v1322 = vmul.f32 %v1279, %v1310
    %v1323 = vadd.f32 %v1162, %v1317
    %v1324 = vadd.f32 %v1163, %v1318
    %v1325 = vadd.f32 %v1164, %v1319
    %v1326 = vadd.f32 %v1165, %v1320
    %v1327 = vadd.f32 %v1166, %v1321
    %v1328 = vadd.f32 %v1167, %v1322
    %s1329 = scalar_lea.vmem [#allocation8], 336
    %v1330 = vld [vmem:[%s1329] sm:$0xff]
    %v1331 = vld [vmem:[%s1329 + $0x8] sm:$0xf]
    %v1332 = vsub.f32 %v533, %v580
    %v1333 = vsub.f32 %v534, %v581
    %v1334 = vmul.f32 %v1332, %v1332
    %v1335 = vmul.f32 %v1333, %v1333
    %v1338 = vcombine.high %v1334, %v1334
    %v1340 = vunpack.c.l.s4 1983009808
    %v1341 = vunpack.c.0.s8 %v1340
    %v1342 = vlaneseq
    %v1343 = vshrl.u32 %v1342, 7
    %v1344 = vsub.s32 %v1341, %v1343
    %v1345 = vrot.slane %v1334, %v1344
    %v1347 = vunpack.c.l.s4 1983009808
    %v1348 = vunpack.c.0.s8 %v1347
    %v1349 = vlaneseq
    %v1350 = vshrl.u32 %v1349, 7
    %v1351 = vsub.s32 %v1348, %v1350
    %v1352 = vrot.slane %v1338, %v1351
    %v1353 = vcombine.high %v1345, %v1345
    %v1354 = vcombine.high %v1352, %v1352
    %v1356 = vunpack.c.l.s4 1983009808
    %v1357 = vunpack.c.0.s8 %v1356
    %v1358 = vlaneseq
    %v1359 = vshrl.u32 %v1358, 7
    %v1360 = vsub.s32 %v1357, %v1359
    %v1361 = vrot.slane %v1335, %v1360
    %v1362 = vcombine.high %v1361, %v1361
    %v1369 = vsel %vm690, %v1345, 0.0
    %v1370 = vrot.slane %v1369, 4
    %v1371 = vadd.f32 %v1369, %v1370
    %v1372 = vrot.slane %v1371, 2
    %v1373 = vadd.f32 %v1371, %v1372
    %v1374 = vrot.slane %v1373, 1
    %v1375 = vadd.f32 %v1373, %v1374
    %v1376 = vsel %vm690, %v1353, 0.0
    %v1377 = vrot.slane %v1376, 4
    %v1378 = vadd.f32 %v1376, %v1377
    %v1379 = vrot.slane %v1378, 2
    %v1380 = vadd.f32 %v1378, %v1379
    %v1381 = vrot.slane %v1380, 1
    %v1382 = vadd.f32 %v1380, %v1381
    %v1383 = vsel %vm690, %v1352, 0.0
    %v1384 = vrot.slane %v1383, 4
    %v1385 = vadd.f32 %v1383, %v1384
    %v1386 = vrot.slane %v1385, 2
    %v1387 = vadd.f32 %v1385, %v1386
    %v1388 = vrot.slane %v1387, 1
    %v1389 = vadd.f32 %v1387, %v1388
    %v1390 = vsel %vm690, %v1354, 0.0
    %v1391 = vrot.slane %v1390, 4
    %v1392 = vadd.f32 %v1390, %v1391
    %v1393 = vrot.slane %v1392, 2
    %v1394 = vadd.f32 %v1392, %v1393
    %v1395 = vrot.slane %v1394, 1
    %v1396 = vadd.f32 %v1394, %v1395
    %v1397 = vsel %vm690, %v1361, 0.0
    %v1398 = vrot.slane %v1397, 4
    %v1399 = vadd.f32 %v1397, %v1398
    %v1400 = vrot.slane %v1399, 2
    %v1401 = vadd.f32 %v1399, %v1400
    %v1402 = vrot.slane %v1401, 1
    %v1403 = vadd.f32 %v1401, %v1402
    %v1404 = vsel %vm726, %v1362, 0.0
    %v1405 = vrot.slane %v1404, 4
    %v1406 = vadd.f32 %v1404, %v1405
    %v1407 = vrot.slane %v1406, 2
    %v1408 = vadd.f32 %v1406, %v1407
    %v1409 = vrot.slane %v1408, 1
    %v1410 = vadd.f32 %v1408, %v1409
    %v1411 = vmax.f32 %v1375, %v743
    %v1412 = vmax.f32 %v1382, %v751
    %v1413 = vmax.f32 %v1389, %v750
    %v1414 = vmax.f32 %v1396, %v752
    %v1415 = vmax.f32 %v1403, %v759
    %v1416 = vmax.f32 %v1410, %v760
    %v1417 = vsub.f32 0.0, %v1411
    %v1418 = vsub.f32 0.0, %v1412
    %v1419 = vsub.f32 0.0, %v1413
    %v1420 = vsub.f32 0.0, %v1414
    %v1421 = vsub.f32 0.0, %v1415
    %v1422 = vsub.f32 0.0, %v1416
    %v1423 = vmul.f32 %v1417, 0.5
    %v1424 = vmul.f32 %v1418, 0.5
    %v1425 = vmul.f32 %v1419, 0.5
    %v1426 = vmul.f32 %v1420, 0.5
    %v1427 = vmul.f32 %v1421, 0.5
    %v1428 = vmul.f32 %v1422, 0.5
    %v1429 = vmul.f32 %v1423, 1.442695
    %v1430 = vpow.pop %v1429
    %v1431 = vmul.f32 %v1424, 1.442695
    %v1432 = vpow.pop %v1431
    %v1433 = vmul.f32 %v1425, 1.442695
    %v1434 = vpow.pop %v1433
    %v1435 = vmul.f32 %v1426, 1.442695
    %v1436 = vpow.pop %v1435
    %v1437 = vmul.f32 %v1427, 1.442695
    %v1438 = vpow.pop %v1437
    %v1439 = vmul.f32 %v1428, 1.442695
    %v1440 = vpow.pop %v1439
    %v1441 = vsub.f32 %v536, %v1330
    %v1442 = vsub.f32 %v537, %v1331
    %v1443 = vand.u32 2147483647, %v1441
    %v1444 = vand.u32 2147483647, %v1442
    %v1447 = vcombine.high %v1443, %v1443
    %v1449 = vunpack.c.l.s4 1983009808
    %v1450 = vunpack.c.0.s8 %v1449
    %v1451 = vlaneseq
    %v1452 = vshrl.u32 %v1451, 7
    %v1453 = vsub.s32 %v1450, %v1452
    %v1454 = vrot.slane %v1443, %v1453
    %v1456 = vunpack.c.l.s4 1983009808
    %v1457 = vunpack.c.0.s8 %v1456
    %v1458 = vlaneseq
    %v1459 = vshrl.u32 %v1458, 7
    %v1460 = vsub.s32 %v1457, %v1459
    %v1461 = vrot.slane %v1447, %v1460
    %v1462 = vcombine.high %v1454, %v1454
    %v1463 = vcombine.high %v1461, %v1461
    %v1465 = vunpack.c.l.s4 1983009808
    %v1466 = vunpack.c.0.s8 %v1465
    %v1467 = vlaneseq
    %v1468 = vshrl.u32 %v1467, 7
    %v1469 = vsub.s32 %v1466, %v1468
    %v1470 = vrot.slane %v1444, %v1469
    %v1471 = vcombine.high %v1470, %v1470
    %v1478 = vmul.f32 %v1430, %v1454
    %v1479 = vmul.f32 %v1432, %v1462
    %v1480 = vmul.f32 %v1434, %v1461
    %v1481 = vmul.f32 %v1436, %v1463
    %v1482 = vmul.f32 %v1438, %v1470
    %v1483 = vmul.f32 %v1440, %v1471
    %v1484 = vadd.f32 %v1323, %v1478
    %v1485 = vadd.f32 %v1324, %v1479
    %v1486 = vadd.f32 %v1325, %v1480
    %v1487 = vadd.f32 %v1326, %v1481
    %v1488 = vadd.f32 %v1327, %v1482
    %v1489 = vadd.f32 %v1328, %v1483
    %s1490 = scalar_lea.vmem [#allocation8], 348
    %v1491 = vld [vmem:[%s1490] sm:$0xff]
    %v1492 = vld [vmem:[%s1490 + $0x8] sm:$0xf]
    %v1493 = vsub.f32 %v533, %v590
    %v1494 = vsub.f32 %v534, %v591
    %v1495 = vmul.f32 %v1493, %v1493
    %v1496 = vmul.f32 %v1494, %v1494
    %v1499 = vcombine.high %v1495, %v1495
    %v1501 = vunpack.c.l.s4 1983009808
    %v1502 = vunpack.c.0.s8 %v1501
    %v1503 = vlaneseq
    %v1504 = vshrl.u32 %v1503, 7
    %v1505 = vsub.s32 %v1502, %v1504
    %v1506 = vrot.slane %v1495, %v1505
    %v1508 = vunpack.c.l.s4 1983009808
    %v1509 = vunpack.c.0.s8 %v1508
    %v1510 = vlaneseq
    %v1511 = vshrl.u32 %v1510, 7
    %v1512 = vsub.s32 %v1509, %v1511
    %v1513 = vrot.slane %v1499, %v1512
    %v1514 = vcombine.high %v1506, %v1506
    %v1515 = vcombine.high %v1513, %v1513
    %v1517 = vunpack.c.l.s4 1983009808
    %v1518 = vunpack.c.0.s8 %v1517
    %v1519 = vlaneseq
    %v1520 = vshrl.u32 %v1519, 7
    %v1521 = vsub.s32 %v1518, %v1520
    %v1522 = vrot.slane %v1496, %v1521
    %v1523 = vcombine.high %v1522, %v1522
    %v1530 = vsel %vm690, %v1506, 0.0
    %v1531 = vrot.slane %v1530, 4
    %v1532 = vadd.f32 %v1530, %v1531
    %v1533 = vrot.slane %v1532, 2
    %v1534 = vadd.f32 %v1532, %v1533
    %v1535 = vrot.slane %v1534, 1
    %v1536 = vadd.f32 %v1534, %v1535
    %v1537 = vsel %vm690, %v1514, 0.0
    %v1538 = vrot.slane %v1537, 4
    %v1539 = vadd.f32 %v1537, %v1538
    %v1540 = vrot.slane %v1539, 2
    %v1541 = vadd.f32 %v1539, %v1540
    %v1542 = vrot.slane %v1541, 1
    %v1543 = vadd.f32 %v1541, %v1542
    %v1544 = vsel %vm690, %v1513, 0.0
    %v1545 = vrot.slane %v1544, 4
    %v1546 = vadd.f32 %v1544, %v1545
    %v1547 = vrot.slane %v1546, 2
    %v1548 = vadd.f32 %v1546, %v1547
    %v1549 = vrot.slane %v1548, 1
    %v1550 = vadd.f32 %v1548, %v1549
    %v1551 = vsel %vm690, %v1515, 0.0
    %v1552 = vrot.slane %v1551, 4
    %v1553 = vadd.f32 %v1551, %v1552
    %v1554 = vrot.slane %v1553, 2
    %v1555 = vadd.f32 %v1553, %v1554
    %v1556 = vrot.slane %v1555, 1
    %v1557 = vadd.f32 %v1555, %v1556
    %v1558 = vsel %vm690, %v1522, 0.0
    %v1559 = vrot.slane %v1558, 4
    %v1560 = vadd.f32 %v1558, %v1559
    %v1561 = vrot.slane %v1560, 2
    %v1562 = vadd.f32 %v1560, %v1561
    %v1563 = vrot.slane %v1562, 1
    %v1564 = vadd.f32 %v1562, %v1563
    %v1565 = vsel %vm726, %v1523, 0.0
    %v1566 = vrot.slane %v1565, 4
    %v1567 = vadd.f32 %v1565, %v1566
    %v1568 = vrot.slane %v1567, 2
    %v1569 = vadd.f32 %v1567, %v1568
    %v1570 = vrot.slane %v1569, 1
    %v1571 = vadd.f32 %v1569, %v1570
    %v1572 = vmax.f32 %v1536, %v743
    %v1573 = vmax.f32 %v1543, %v751
    %v1574 = vmax.f32 %v1550, %v750
    %v1575 = vmax.f32 %v1557, %v752
    %v1576 = vmax.f32 %v1564, %v759
    %v1577 = vmax.f32 %v1571, %v760
    %v1578 = vsub.f32 0.0, %v1572
    %v1579 = vsub.f32 0.0, %v1573
    %v1580 = vsub.f32 0.0, %v1574
    %v1581 = vsub.f32 0.0, %v1575
    %v1582 = vsub.f32 0.0, %v1576
    %v1583 = vsub.f32 0.0, %v1577
    %v1584 = vmul.f32 %v1578, 0.5
    %v1585 = vmul.f32 %v1579, 0.5
    %v1586 = vmul.f32 %v1580, 0.5
    %v1587 = vmul.f32 %v1581, 0.5
    %v1588 = vmul.f32 %v1582, 0.5
    %v1589 = vmul.f32 %v1583, 0.5
    %v1590 = vmul.f32 %v1584, 1.442695
    %v1591 = vpow.pop %v1590
    %v1592 = vmul.f32 %v1585, 1.442695
    %v1593 = vpow.pop %v1592
    %v1594 = vmul.f32 %v1586, 1.442695
    %v1595 = vpow.pop %v1594
    %v1596 = vmul.f32 %v1587, 1.442695
    %v1597 = vpow.pop %v1596
    %v1598 = vmul.f32 %v1588, 1.442695
    %v1599 = vpow.pop %v1598
    %v1600 = vmul.f32 %v1589, 1.442695
    %v1601 = vpow.pop %v1600
    %v1602 = vsub.f32 %v536, %v1491
    %v1603 = vsub.f32 %v537, %v1492
    %v1604 = vand.u32 2147483647, %v1602
    %v1605 = vand.u32 2147483647, %v1603
    %v1608 = vcombine.high %v1604, %v1604
    %v1610 = vunpack.c.l.s4 1983009808
    %v1611 = vunpack.c.0.s8 %v1610
    %v1612 = vlaneseq
    %v1613 = vshrl.u32 %v1612, 7
    %v1614 = vsub.s32 %v1611, %v1613
    %v1615 = vrot.slane %v1604, %v1614
    %v1617 = vunpack.c.l.s4 1983009808
    %v1618 = vunpack.c.0.s8 %v1617
    %v1619 = vlaneseq
    %v1620 = vshrl.u32 %v1619, 7
    %v1621 = vsub.s32 %v1618, %v1620
    %v1622 = vrot.slane %v1608, %v1621
    %v1623 = vcombine.high %v1615, %v1615
    %v1624 = vcombine.high %v1622, %v1622
    %v1626 = vunpack.c.l.s4 1983009808
    %v1627 = vunpack.c.0.s8 %v1626
    %v1628 = vlaneseq
    %v1629 = vshrl.u32 %v1628, 7
    %v1630 = vsub.s32 %v1627, %v1629
    %v1631 = vrot.slane %v1605, %v1630
    %v1632 = vcombine.high %v1631, %v1631
    %v1639 = vmul.f32 %v1591, %v1615
    %v1640 = vmul.f32 %v1593, %v1623
    %v1641 = vmul.f32 %v1595, %v1622
    %v1642 = vmul.f32 %v1597, %v1624
    %v1643 = vmul.f32 %v1599, %v1631
    %v1644 = vmul.f32 %v1601, %v1632
    %v1645 = vadd.f32 %v1484, %v1639
    %v1646 = vadd.f32 %v1485, %v1640
    %v1647 = vadd.f32 %v1486, %v1641
    %v1648 = vadd.f32 %v1487, %v1642
    %v1649 = vadd.f32 %v1488, %v1643
    %v1650 = vadd.f32 %v1489, %v1644
    %s1651 = scalar_lea.vmem [#allocation8], 360
    %v1652 = vld [vmem:[%s1651] sm:$0xff]
    %v1653 = vld [vmem:[%s1651 + $0x8] sm:$0xf]
    %v1654 = vsub.f32 %v533, %v600
    %v1655 = vsub.f32 %v534, %v601
    %v1656 = vmul.f32 %v1654, %v1654
    %v1657 = vmul.f32 %v1655, %v1655
    %v1660 = vcombine.high %v1656, %v1656
    %v1662 = vunpack.c.l.s4 1983009808
    %v1663 = vunpack.c.0.s8 %v1662
    %v1664 = vlaneseq
    %v1665 = vshrl.u32 %v1664, 7
    %v1666 = vsub.s32 %v1663, %v1665
    %v1667 = vrot.slane %v1656, %v1666
    %v1669 = vunpack.c.l.s4 1983009808
    %v1670 = vunpack.c.0.s8 %v1669
    %v1671 = vlaneseq
    %v1672 = vshrl.u32 %v1671, 7
    %v1673 = vsub.s32 %v1670, %v1672
    %v1674 = vrot.slane %v1660, %v1673
    %v1675 = vcombine.high %v1667, %v1667
    %v1676 = vcombine.high %v1674, %v1674
    %v1678 = vunpack.c.l.s4 1983009808
    %v1679 = vunpack.c.0.s8 %v1678
    %v1680 = vlaneseq
    %v1681 = vshrl.u32 %v1680, 7
    %v1682 = vsub.s32 %v1679, %v1681
    %v1683 = vrot.slane %v1657, %v1682
    %v1684 = vcombine.high %v1683, %v1683
    %v1691 = vsel %vm690, %v1667, 0.0
    %v1692 = vrot.slane %v1691, 4
    %v1693 = vadd.f32 %v1691, %v1692
    %v1694 = vrot.slane %v1693, 2
    %v1695 = vadd.f32 %v1693, %v1694
    %v1696 = vrot.slane %v1695, 1
    %v1697 = vadd.f32 %v1695, %v1696
    %v1698 = vsel %vm690, %v1675, 0.0
    %v1699 = vrot.slane %v1698, 4
    %v1700 = vadd.f32 %v1698, %v1699
    %v1701 = vrot.slane %v1700, 2
    %v1702 = vadd.f32 %v1700, %v1701
    %v1703 = vrot.slane %v1702, 1
    %v1704 = vadd.f32 %v1702, %v1703
    %v1705 = vsel %vm690, %v1674, 0.0
    %v1706 = vrot.slane %v1705, 4
    %v1707 = vadd.f32 %v1705, %v1706
    %v1708 = vrot.slane %v1707, 2
    %v1709 = vadd.f32 %v1707, %v1708
    %v1710 = vrot.slane %v1709, 1
    %v1711 = vadd.f32 %v1709, %v1710
    %v1712 = vsel %vm690, %v1676, 0.0
    %v1713 = vrot.slane %v1712, 4
    %v1714 = vadd.f32 %v1712, %v1713
    %v1715 = vrot.slane %v1714, 2
    %v1716 = vadd.f32 %v1714, %v1715
    %v1717 = vrot.slane %v1716, 1
    %v1718 = vadd.f32 %v1716, %v1717
    %v1719 = vsel %vm690, %v1683, 0.0
    %v1720 = vrot.slane %v1719, 4
    %v1721 = vadd.f32 %v1719, %v1720
    %v1722 = vrot.slane %v1721, 2
    %v1723 = vadd.f32 %v1721, %v1722
    %v1724 = vrot.slane %v1723, 1
    %v1725 = vadd.f32 %v1723, %v1724
    %v1726 = vsel %vm726, %v1684, 0.0
    %v1727 = vrot.slane %v1726, 4
    %v1728 = vadd.f32 %v1726, %v1727
    %v1729 = vrot.slane %v1728, 2
    %v1730 = vadd.f32 %v1728, %v1729
    %v1731 = vrot.slane %v1730, 1
    %v1732 = vadd.f32 %v1730, %v1731
    %v1733 = vmax.f32 %v1697, %v743
    %v1734 = vmax.f32 %v1704, %v751
    %v1735 = vmax.f32 %v1711, %v750
    %v1736 = vmax.f32 %v1718, %v752
    %v1737 = vmax.f32 %v1725, %v759
    %v1738 = vmax.f32 %v1732, %v760
    %v1739 = vsub.f32 0.0, %v1733
    %v1740 = vsub.f32 0.0, %v1734
    %v1741 = vsub.f32 0.0, %v1735
    %v1742 = vsub.f32 0.0, %v1736
    %v1743 = vsub.f32 0.0, %v1737
    %v1744 = vsub.f32 0.0, %v1738
    %v1745 = vmul.f32 %v1739, 0.5
    %v1746 = vmul.f32 %v1740, 0.5
    %v1747 = vmul.f32 %v1741, 0.5
    %v1748 = vmul.f32 %v1742, 0.5
    %v1749 = vmul.f32 %v1743, 0.5
    %v1750 = vmul.f32 %v1744, 0.5
    %v1751 = vmul.f32 %v1745, 1.442695
    %v1752 = vpow.pop %v1751
    %v1753 = vmul.f32 %v1746, 1.442695
    %v1754 = vpow.pop %v1753
    %v1755 = vmul.f32 %v1747, 1.442695
    %v1756 = vpow.pop %v1755
    %v1757 = vmul.f32 %v1748, 1.442695
    %v1758 = vpow.pop %v1757
    %v1759 = vmul.f32 %v1749, 1.442695
    %v1760 = vpow.pop %v1759
    %v1761 = vmul.f32 %v1750, 1.442695
    %v1762 = vpow.pop %v1761
    %v1763 = vsub.f32 %v536, %v1652
    %v1764 = vsub.f32 %v537, %v1653
    %v1765 = vand.u32 2147483647, %v1763
    %v1766 = vand.u32 2147483647, %v1764
    %v1769 = vcombine.high %v1765, %v1765
    %v1771 = vunpack.c.l.s4 1983009808
    %v1772 = vunpack.c.0.s8 %v1771
    %v1773 = vlaneseq
    %v1774 = vshrl.u32 %v1773, 7
    %v1775 = vsub.s32 %v1772, %v1774
    %v1776 = vrot.slane %v1765, %v1775
    %v1778 = vunpack.c.l.s4 1983009808
    %v1779 = vunpack.c.0.s8 %v1778
    %v1780 = vlaneseq
    %v1781 = vshrl.u32 %v1780, 7
    %v1782 = vsub.s32 %v1779, %v1781
    %v1783 = vrot.slane %v1769, %v1782
    %v1784 = vcombine.high %v1776, %v1776
    %v1785 = vcombine.high %v1783, %v1783
    %v1787 = vunpack.c.l.s4 1983009808
    %v1788 = vunpack.c.0.s8 %v1787
    %v1789 = vlaneseq
    %v1790 = vshrl.u32 %v1789, 7
    %v1791 = vsub.s32 %v1788, %v1790
    %v1792 = vrot.slane %v1766, %v1791
    %v1793 = vcombine.high %v1792, %v1792
    %v1800 = vmul.f32 %v1752, %v1776
    %v1801 = vmul.f32 %v1754, %v1784
    %v1802 = vmul.f32 %v1756, %v1783
    %v1803 = vmul.f32 %v1758, %v1785
    %v1804 = vmul.f32 %v1760, %v1792
    %v1805 = vmul.f32 %v1762, %v1793
    %v1806 = vadd.f32 %v1645, %v1800
    %v1807 = vadd.f32 %v1646, %v1801
    %v1808 = vadd.f32 %v1647, %v1802
    %v1809 = vadd.f32 %v1648, %v1803
    %v1810 = vadd.f32 %v1649, %v1804
    %v1811 = vadd.f32 %v1650, %v1805
    %s1812 = scalar_lea.vmem [#allocation8], 372
    %v1813 = vld [vmem:[%s1812] sm:$0xff]
    %v1814 = vld [vmem:[%s1812 + $0x8] sm:$0xf]
    %v1815 = vsub.f32 %v533, %v610
    %v1816 = vsub.f32 %v534, %v611
    %v1817 = vmul.f32 %v1815, %v1815
    %v1818 = vmul.f32 %v1816, %v1816
    %v1821 = vcombine.high %v1817, %v1817
    %v1823 = vunpack.c.l.s4 1983009808
    %v1824 = vunpack.c.0.s8 %v1823
    %v1825 = vlaneseq
    %v1826 = vshrl.u32 %v1825, 7
    %v1827 = vsub.s32 %v1824, %v1826
    %v1828 = vrot.slane %v1817, %v1827
    %v1830 = vunpack.c.l.s4 1983009808
    %v1831 = vunpack.c.0.s8 %v1830
    %v1832 = vlaneseq
    %v1833 = vshrl.u32 %v1832, 7
    %v1834 = vsub.s32 %v1831, %v1833
    %v1835 = vrot.slane %v1821, %v1834
    %v1836 = vcombine.high %v1828, %v1828
    %v1837 = vcombine.high %v1835, %v1835
    %v1839 = vunpack.c.l.s4 1983009808
    %v1840 = vunpack.c.0.s8 %v1839
    %v1841 = vlaneseq
    %v1842 = vshrl.u32 %v1841, 7
    %v1843 = vsub.s32 %v1840, %v1842
    %v1844 = vrot.slane %v1818, %v1843
    %v1845 = vcombine.high %v1844, %v1844
    %v1852 = vsel %vm690, %v1828, 0.0
    %v1853 = vrot.slane %v1852, 4
    %v1854 = vadd.f32 %v1852, %v1853
    %v1855 = vrot.slane %v1854, 2
    %v1856 = vadd.f32 %v1854, %v1855
    %v1857 = vrot.slane %v1856, 1
    %v1858 = vadd.f32 %v1856, %v1857
    %v1859 = vsel %vm690, %v1836, 0.0
    %v1860 = vrot.slane %v1859, 4
    %v1861 = vadd.f32 %v1859, %v1860
    %v1862 = vrot.slane %v1861, 2
    %v1863 = vadd.f32 %v1861, %v1862
    %v1864 = vrot.slane %v1863, 1
    %v1865 = vadd.f32 %v1863, %v1864
    %v1866 = vsel %vm690, %v1835, 0.0
    %v1867 = vrot.slane %v1866, 4
    %v1868 = vadd.f32 %v1866, %v1867
    %v1869 = vrot.slane %v1868, 2
    %v1870 = vadd.f32 %v1868, %v1869
    %v1871 = vrot.slane %v1870, 1
    %v1872 = vadd.f32 %v1870, %v1871
    %v1873 = vsel %vm690, %v1837, 0.0
    %v1874 = vrot.slane %v1873, 4
    %v1875 = vadd.f32 %v1873, %v1874
    %v1876 = vrot.slane %v1875, 2
    %v1877 = vadd.f32 %v1875, %v1876
    %v1878 = vrot.slane %v1877, 1
    %v1879 = vadd.f32 %v1877, %v1878
    %v1880 = vsel %vm690, %v1844, 0.0
    %v1881 = vrot.slane %v1880, 4
    %v1882 = vadd.f32 %v1880, %v1881
    %v1883 = vrot.slane %v1882, 2
    %v1884 = vadd.f32 %v1882, %v1883
    %v1885 = vrot.slane %v1884, 1
    %v1886 = vadd.f32 %v1884, %v1885
    %v1887 = vsel %vm726, %v1845, 0.0
    %v1888 = vrot.slane %v1887, 4
    %v1889 = vadd.f32 %v1887, %v1888
    %v1890 = vrot.slane %v1889, 2
    %v1891 = vadd.f32 %v1889, %v1890
    %v1892 = vrot.slane %v1891, 1
    %v1893 = vadd.f32 %v1891, %v1892
    %v1894 = vmax.f32 %v1858, %v743
    %v1895 = vmax.f32 %v1865, %v751
    %v1896 = vmax.f32 %v1872, %v750
    %v1897 = vmax.f32 %v1879, %v752
    %v1898 = vmax.f32 %v1886, %v759
    %v1899 = vmax.f32 %v1893, %v760
    %v1900 = vsub.f32 0.0, %v1894
    %v1901 = vsub.f32 0.0, %v1895
    %v1902 = vsub.f32 0.0, %v1896
    %v1903 = vsub.f32 0.0, %v1897
    %v1904 = vsub.f32 0.0, %v1898
    %v1905 = vsub.f32 0.0, %v1899
    %v1906 = vmul.f32 %v1900, 0.5
    %v1907 = vmul.f32 %v1901, 0.5
    %v1908 = vmul.f32 %v1902, 0.5
    %v1909 = vmul.f32 %v1903, 0.5
    %v1910 = vmul.f32 %v1904, 0.5
    %v1911 = vmul.f32 %v1905, 0.5
    %v1912 = vmul.f32 %v1906, 1.442695
    %v1913 = vpow.pop %v1912
    %v1914 = vmul.f32 %v1907, 1.442695
    %v1915 = vpow.pop %v1914
    %v1916 = vmul.f32 %v1908, 1.442695
    %v1917 = vpow.pop %v1916
    %v1918 = vmul.f32 %v1909, 1.442695
    %v1919 = vpow.pop %v1918
    %v1920 = vmul.f32 %v1910, 1.442695
    %v1921 = vpow.pop %v1920
    %v1922 = vmul.f32 %v1911, 1.442695
    %v1923 = vpow.pop %v1922
    %v1924 = vsub.f32 %v536, %v1813
    %v1925 = vsub.f32 %v537, %v1814
    %v1926 = vand.u32 2147483647, %v1924
    %v1927 = vand.u32 2147483647, %v1925
    %v1930 = vcombine.high %v1926, %v1926
    %v1932 = vunpack.c.l.s4 1983009808
    %v1933 = vunpack.c.0.s8 %v1932
    %v1934 = vlaneseq
    %v1935 = vshrl.u32 %v1934, 7
    %v1936 = vsub.s32 %v1933, %v1935
    %v1937 = vrot.slane %v1926, %v1936
    %v1939 = vunpack.c.l.s4 1983009808
    %v1940 = vunpack.c.0.s8 %v1939
    %v1941 = vlaneseq
    %v1942 = vshrl.u32 %v1941, 7
    %v1943 = vsub.s32 %v1940, %v1942
    %v1944 = vrot.slane %v1930, %v1943
    %v1945 = vcombine.high %v1937, %v1937
    %v1946 = vcombine.high %v1944, %v1944
    %v1948 = vunpack.c.l.s4 1983009808
    %v1949 = vunpack.c.0.s8 %v1948
    %v1950 = vlaneseq
    %v1951 = vshrl.u32 %v1950, 7
    %v1952 = vsub.s32 %v1949, %v1951
    %v1953 = vrot.slane %v1927, %v1952
    %v1954 = vcombine.high %v1953, %v1953
    %v1961 = vmul.f32 %v1913, %v1937
    %v1962 = vmul.f32 %v1915, %v1945
    %v1963 = vmul.f32 %v1917, %v1944
    %v1964 = vmul.f32 %v1919, %v1946
    %v1965 = vmul.f32 %v1921, %v1953
    %v1966 = vmul.f32 %v1923, %v1954
    %v1967 = vadd.f32 %v1806, %v1961
    %v1968 = vadd.f32 %v1807, %v1962
    %v1969 = vadd.f32 %v1808, %v1963
    %v1970 = vadd.f32 %v1809, %v1964
    %v1971 = vadd.f32 %v1810, %v1965
    %v1972 = vadd.f32 %v1811, %v1966
    %s1973 = scalar_lea.vmem [#allocation8], 384
    %v1974 = vld [vmem:[%s1973] sm:$0xff]
    %v1975 = vld [vmem:[%s1973 + $0x8] sm:$0xf]
    %v1976 = vsub.f32 %v533, %v620
    %v1977 = vsub.f32 %v534, %v621
    %v1978 = vmul.f32 %v1976, %v1976
    %v1979 = vmul.f32 %v1977, %v1977
    %v1982 = vcombine.high %v1978, %v1978
    %v1984 = vunpack.c.l.s4 1983009808
    %v1985 = vunpack.c.0.s8 %v1984
    %v1986 = vlaneseq
    %v1987 = vshrl.u32 %v1986, 7
    %v1988 = vsub.s32 %v1985, %v1987
    %v1989 = vrot.slane %v1978, %v1988
    %v1991 = vunpack.c.l.s4 1983009808
    %v1992 = vunpack.c.0.s8 %v1991
    %v1993 = vlaneseq
    %v1994 = vshrl.u32 %v1993, 7
    %v1995 = vsub.s32 %v1992, %v1994
    %v1996 = vrot.slane %v1982, %v1995
    %v1997 = vcombine.high %v1989, %v1989
    %v1998 = vcombine.high %v1996, %v1996
    %v2000 = vunpack.c.l.s4 1983009808
    %v2001 = vunpack.c.0.s8 %v2000
    %v2002 = vlaneseq
    %v2003 = vshrl.u32 %v2002, 7
    %v2004 = vsub.s32 %v2001, %v2003
    %v2005 = vrot.slane %v1979, %v2004
    %v2006 = vcombine.high %v2005, %v2005
    %v2013 = vsel %vm690, %v1989, 0.0
    %v2014 = vrot.slane %v2013, 4
    %v2015 = vadd.f32 %v2013, %v2014
    %v2016 = vrot.slane %v2015, 2
    %v2017 = vadd.f32 %v2015, %v2016
    %v2018 = vrot.slane %v2017, 1
    %v2019 = vadd.f32 %v2017, %v2018
    %v2020 = vsel %vm690, %v1997, 0.0
    %v2021 = vrot.slane %v2020, 4
    %v2022 = vadd.f32 %v2020, %v2021
    %v2023 = vrot.slane %v2022, 2
    %v2024 = vadd.f32 %v2022, %v2023
    %v2025 = vrot.slane %v2024, 1
    %v2026 = vadd.f32 %v2024, %v2025
    %v2027 = vsel %vm690, %v1996, 0.0
    %v2028 = vrot.slane %v2027, 4
    %v2029 = vadd.f32 %v2027, %v2028
    %v2030 = vrot.slane %v2029, 2
    %v2031 = vadd.f32 %v2029, %v2030
    %v2032 = vrot.slane %v2031, 1
    %v2033 = vadd.f32 %v2031, %v2032
    %v2034 = vsel %vm690, %v1998, 0.0
    %v2035 = vrot.slane %v2034, 4
    %v2036 = vadd.f32 %v2034, %v2035
    %v2037 = vrot.slane %v2036, 2
    %v2038 = vadd.f32 %v2036, %v2037
    %v2039 = vrot.slane %v2038, 1
    %v2040 = vadd.f32 %v2038, %v2039
    %v2041 = vsel %vm690, %v2005, 0.0
    %v2042 = vrot.slane %v2041, 4
    %v2043 = vadd.f32 %v2041, %v2042
    %v2044 = vrot.slane %v2043, 2
    %v2045 = vadd.f32 %v2043, %v2044
    %v2046 = vrot.slane %v2045, 1
    %v2047 = vadd.f32 %v2045, %v2046
    %v2048 = vsel %vm726, %v2006, 0.0
    %v2049 = vrot.slane %v2048, 4
    %v2050 = vadd.f32 %v2048, %v2049
    %v2051 = vrot.slane %v2050, 2
    %v2052 = vadd.f32 %v2050, %v2051
    %v2053 = vrot.slane %v2052, 1
    %v2054 = vadd.f32 %v2052, %v2053
    %v2055 = vmax.f32 %v2019, %v743
    %v2056 = vmax.f32 %v2026, %v751
    %v2057 = vmax.f32 %v2033, %v750
    %v2058 = vmax.f32 %v2040, %v752
    %v2059 = vmax.f32 %v2047, %v759
    %v2060 = vmax.f32 %v2054, %v760
    %v2061 = vsub.f32 0.0, %v2055
    %v2062 = vsub.f32 0.0, %v2056
    %v2063 = vsub.f32 0.0, %v2057
    %v2064 = vsub.f32 0.0, %v2058
    %v2065 = vsub.f32 0.0, %v2059
    %v2066 = vsub.f32 0.0, %v2060
    %v2067 = vmul.f32 %v2061, 0.5
    %v2068 = vmul.f32 %v2062, 0.5
    %v2069 = vmul.f32 %v2063, 0.5
    %v2070 = vmul.f32 %v2064, 0.5
    %v2071 = vmul.f32 %v2065, 0.5
    %v2072 = vmul.f32 %v2066, 0.5
    %v2073 = vmul.f32 %v2067, 1.442695
    %v2074 = vpow.pop %v2073
    %v2075 = vmul.f32 %v2068, 1.442695
    %v2076 = vpow.pop %v2075
    %v2077 = vmul.f32 %v2069, 1.442695
    %v2078 = vpow.pop %v2077
    %v2079 = vmul.f32 %v2070, 1.442695
    %v2080 = vpow.pop %v2079
    %v2081 = vmul.f32 %v2071, 1.442695
    %v2082 = vpow.pop %v2081
    %v2083 = vmul.f32 %v2072, 1.442695
    %v2084 = vpow.pop %v2083
    %v2085 = vsub.f32 %v536, %v1974
    %v2086 = vsub.f32 %v537, %v1975
    %v2087 = vand.u32 2147483647, %v2085
    %v2088 = vand.u32 2147483647, %v2086
    %v2091 = vcombine.high %v2087, %v2087
    %v2093 = vunpack.c.l.s4 1983009808
    %v2094 = vunpack.c.0.s8 %v2093
    %v2095 = vlaneseq
    %v2096 = vshrl.u32 %v2095, 7
    %v2097 = vsub.s32 %v2094, %v2096
    %v2098 = vrot.slane %v2087, %v2097
    %v2100 = vunpack.c.l.s4 1983009808
    %v2101 = vunpack.c.0.s8 %v2100
    %v2102 = vlaneseq
    %v2103 = vshrl.u32 %v2102, 7
    %v2104 = vsub.s32 %v2101, %v2103
    %v2105 = vrot.slane %v2091, %v2104
    %v2106 = vcombine.high %v2098, %v2098
    %v2107 = vcombine.high %v2105, %v2105
    %v2109 = vunpack.c.l.s4 1983009808
    %v2110 = vunpack.c.0.s8 %v2109
    %v2111 = vlaneseq
    %v2112 = vshrl.u32 %v2111, 7
    %v2113 = vsub.s32 %v2110, %v2112
    %v2114 = vrot.slane %v2088, %v2113
    %v2115 = vcombine.high %v2114, %v2114
    %v2122 = vmul.f32 %v2074, %v2098
    %v2123 = vmul.f32 %v2076, %v2106
    %v2124 = vmul.f32 %v2078, %v2105
    %v2125 = vmul.f32 %v2080, %v2107
    %v2126 = vmul.f32 %v2082, %v2114
    %v2127 = vmul.f32 %v2084, %v2115
    %v2128 = vadd.f32 %v1967, %v2122
    %v2129 = vadd.f32 %v1968, %v2123
    %v2130 = vadd.f32 %v1969, %v2124
    %v2131 = vadd.f32 %v1970, %v2125
    %v2132 = vadd.f32 %v1971, %v2126
    %v2133 = vadd.f32 %v1972, %v2127
    %s2134 = scalar_lea.vmem [#allocation8], 396
    %v2135 = vld [vmem:[%s2134] sm:$0xff]
    %v2136 = vld [vmem:[%s2134 + $0x8] sm:$0xf]
    %v2137 = vsub.f32 %v533, %v630
    %v2138 = vsub.f32 %v534, %v631
    %v2139 = vmul.f32 %v2137, %v2137
    %v2140 = vmul.f32 %v2138, %v2138
    %v2143 = vcombine.high %v2139, %v2139
    %v2145 = vunpack.c.l.s4 1983009808
    %v2146 = vunpack.c.0.s8 %v2145
    %v2147 = vlaneseq
    %v2148 = vshrl.u32 %v2147, 7
    %v2149 = vsub.s32 %v2146, %v2148
    %v2150 = vrot.slane %v2139, %v2149
    %v2152 = vunpack.c.l.s4 1983009808
    %v2153 = vunpack.c.0.s8 %v2152
    %v2154 = vlaneseq
    %v2155 = vshrl.u32 %v2154, 7
    %v2156 = vsub.s32 %v2153, %v2155
    %v2157 = vrot.slane %v2143, %v2156
    %v2158 = vcombine.high %v2150, %v2150
    %v2159 = vcombine.high %v2157, %v2157
    %v2161 = vunpack.c.l.s4 1983009808
    %v2162 = vunpack.c.0.s8 %v2161
    %v2163 = vlaneseq
    %v2164 = vshrl.u32 %v2163, 7
    %v2165 = vsub.s32 %v2162, %v2164
    %v2166 = vrot.slane %v2140, %v2165
    %v2167 = vcombine.high %v2166, %v2166
    %v2174 = vsel %vm690, %v2150, 0.0
    %v2175 = vrot.slane %v2174, 4
    %v2176 = vadd.f32 %v2174, %v2175
    %v2177 = vrot.slane %v2176, 2
    %v2178 = vadd.f32 %v2176, %v2177
    %v2179 = vrot.slane %v2178, 1
    %v2180 = vadd.f32 %v2178, %v2179
    %v2181 = vsel %vm690, %v2158, 0.0
    %v2182 = vrot.slane %v2181, 4
    %v2183 = vadd.f32 %v2181, %v2182
    %v2184 = vrot.slane %v2183, 2
    %v2185 = vadd.f32 %v2183, %v2184
    %v2186 = vrot.slane %v2185, 1
    %v2187 = vadd.f32 %v2185, %v2186
    %v2188 = vsel %vm690, %v2157, 0.0
    %v2189 = vrot.slane %v2188, 4
    %v2190 = vadd.f32 %v2188, %v2189
    %v2191 = vrot.slane %v2190, 2
    %v2192 = vadd.f32 %v2190, %v2191
    %v2193 = vrot.slane %v2192, 1
    %v2194 = vadd.f32 %v2192, %v2193
    %v2195 = vsel %vm690, %v2159, 0.0
    %v2196 = vrot.slane %v2195, 4
    %v2197 = vadd.f32 %v2195, %v2196
    %v2198 = vrot.slane %v2197, 2
    %v2199 = vadd.f32 %v2197, %v2198
    %v2200 = vrot.slane %v2199, 1
    %v2201 = vadd.f32 %v2199, %v2200
    %v2202 = vsel %vm690, %v2166, 0.0
    %v2203 = vrot.slane %v2202, 4
    %v2204 = vadd.f32 %v2202, %v2203
    %v2205 = vrot.slane %v2204, 2
    %v2206 = vadd.f32 %v2204, %v2205
    %v2207 = vrot.slane %v2206, 1
    %v2208 = vadd.f32 %v2206, %v2207
    %v2209 = vsel %vm726, %v2167, 0.0
    %v2210 = vrot.slane %v2209, 4
    %v2211 = vadd.f32 %v2209, %v2210
    %v2212 = vrot.slane %v2211, 2
    %v2213 = vadd.f32 %v2211, %v2212
    %v2214 = vrot.slane %v2213, 1
    %v2215 = vadd.f32 %v2213, %v2214
    %v2216 = vmax.f32 %v2180, %v743
    %v2217 = vmax.f32 %v2187, %v751
    %v2218 = vmax.f32 %v2194, %v750
    %v2219 = vmax.f32 %v2201, %v752
    %v2220 = vmax.f32 %v2208, %v759
    %v2221 = vmax.f32 %v2215, %v760
    %v2222 = vsub.f32 0.0, %v2216
    %v2223 = vsub.f32 0.0, %v2217
    %v2224 = vsub.f32 0.0, %v2218
    %v2225 = vsub.f32 0.0, %v2219
    %v2226 = vsub.f32 0.0, %v2220
    %v2227 = vsub.f32 0.0, %v2221
    %v2228 = vmul.f32 %v2222, 0.5
    %v2229 = vmul.f32 %v2223, 0.5
    %v2230 = vmul.f32 %v2224, 0.5
    %v2231 = vmul.f32 %v2225, 0.5
    %v2232 = vmul.f32 %v2226, 0.5
    %v2233 = vmul.f32 %v2227, 0.5
    %v2234 = vmul.f32 %v2228, 1.442695
    %v2235 = vpow.pop %v2234
    %v2236 = vmul.f32 %v2229, 1.442695
    %v2237 = vpow.pop %v2236
    %v2238 = vmul.f32 %v2230, 1.442695
    %v2239 = vpow.pop %v2238
    %v2240 = vmul.f32 %v2231, 1.442695
    %v2241 = vpow.pop %v2240
    %v2242 = vmul.f32 %v2232, 1.442695
    %v2243 = vpow.pop %v2242
    %v2244 = vmul.f32 %v2233, 1.442695
    %v2245 = vpow.pop %v2244
    %v2246 = vsub.f32 %v536, %v2135
    %v2247 = vsub.f32 %v537, %v2136
    %v2248 = vand.u32 2147483647, %v2246
    %v2249 = vand.u32 2147483647, %v2247
    %v2252 = vcombine.high %v2248, %v2248
    %v2254 = vunpack.c.l.s4 1983009808
    %v2255 = vunpack.c.0.s8 %v2254
    %v2256 = vlaneseq
    %v2257 = vshrl.u32 %v2256, 7
    %v2258 = vsub.s32 %v2255, %v2257
    %v2259 = vrot.slane %v2248, %v2258
    %v2261 = vunpack.c.l.s4 1983009808
    %v2262 = vunpack.c.0.s8 %v2261
    %v2263 = vlaneseq
    %v2264 = vshrl.u32 %v2263, 7
    %v2265 = vsub.s32 %v2262, %v2264
    %v2266 = vrot.slane %v2252, %v2265
    %v2267 = vcombine.high %v2259, %v2259
    %v2268 = vcombine.high %v2266, %v2266
    %v2270 = vunpack.c.l.s4 1983009808
    %v2271 = vunpack.c.0.s8 %v2270
    %v2272 = vlaneseq
    %v2273 = vshrl.u32 %v2272, 7
    %v2274 = vsub.s32 %v2271, %v2273
    %v2275 = vrot.slane %v2249, %v2274
    %v2276 = vcombine.high %v2275, %v2275
    %v2283 = vmul.f32 %v2235, %v2259
    %v2284 = vmul.f32 %v2237, %v2267
    %v2285 = vmul.f32 %v2239, %v2266
    %v2286 = vmul.f32 %v2241, %v2268
    %v2287 = vmul.f32 %v2243, %v2275
    %v2288 = vmul.f32 %v2245, %v2276
    %v2289 = vadd.f32 %v2128, %v2283
    %v2290 = vadd.f32 %v2129, %v2284
    %v2291 = vadd.f32 %v2130, %v2285
    %v2292 = vadd.f32 %v2131, %v2286
    %v2293 = vadd.f32 %v2132, %v2287
    %v2294 = vadd.f32 %v2133, %v2288
    %s2295 = scalar_lea.vmem [#allocation8], 408
    %v2296 = vld [vmem:[%s2295] sm:$0xff]
    %v2297 = vld [vmem:[%s2295 + $0x8] sm:$0xf]
    %v2298 = vsub.f32 %v533, %v640
    %v2299 = vsub.f32 %v534, %v641
    %v2300 = vmul.f32 %v2298, %v2298
    %v2301 = vmul.f32 %v2299, %v2299
    %v2304 = vcombine.high %v2300, %v2300
    %v2306 = vunpack.c.l.s4 1983009808
    %v2307 = vunpack.c.0.s8 %v2306
    %v2308 = vlaneseq
    %v2309 = vshrl.u32 %v2308, 7
    %v2310 = vsub.s32 %v2307, %v2309
    %v2311 = vrot.slane %v2300, %v2310
    %v2313 = vunpack.c.l.s4 1983009808
    %v2314 = vunpack.c.0.s8 %v2313
    %v2315 = vlaneseq
    %v2316 = vshrl.u32 %v2315, 7
    %v2317 = vsub.s32 %v2314, %v2316
    %v2318 = vrot.slane %v2304, %v2317
    %v2319 = vcombine.high %v2311, %v2311
    %v2320 = vcombine.high %v2318, %v2318
    %v2322 = vunpack.c.l.s4 1983009808
    %v2323 = vunpack.c.0.s8 %v2322
    %v2324 = vlaneseq
    %v2325 = vshrl.u32 %v2324, 7
    %v2326 = vsub.s32 %v2323, %v2325
    %v2327 = vrot.slane %v2301, %v2326
    %v2328 = vcombine.high %v2327, %v2327
    %v2335 = vsel %vm690, %v2311, 0.0
    %v2336 = vrot.slane %v2335, 4
    %v2337 = vadd.f32 %v2335, %v2336
    %v2338 = vrot.slane %v2337, 2
    %v2339 = vadd.f32 %v2337, %v2338
    %v2340 = vrot.slane %v2339, 1
    %v2341 = vadd.f32 %v2339, %v2340
    %v2342 = vsel %vm690, %v2319, 0.0
    %v2343 = vrot.slane %v2342, 4
    %v2344 = vadd.f32 %v2342, %v2343
    %v2345 = vrot.slane %v2344, 2
    %v2346 = vadd.f32 %v2344, %v2345
    %v2347 = vrot.slane %v2346, 1
    %v2348 = vadd.f32 %v2346, %v2347
    %v2349 = vsel %vm690, %v2318, 0.0
    %v2350 = vrot.slane %v2349, 4
    %v2351 = vadd.f32 %v2349, %v2350
    %v2352 = vrot.slane %v2351, 2
    %v2353 = vadd.f32 %v2351, %v2352
    %v2354 = vrot.slane %v2353, 1
    %v2355 = vadd.f32 %v2353, %v2354
    %v2356 = vsel %vm690, %v2320, 0.0
    %v2357 = vrot.slane %v2356, 4
    %v2358 = vadd.f32 %v2356, %v2357
    %v2359 = vrot.slane %v2358, 2
    %v2360 = vadd.f32 %v2358, %v2359
    %v2361 = vrot.slane %v2360, 1
    %v2362 = vadd.f32 %v2360, %v2361
    %v2363 = vsel %vm690, %v2327, 0.0
    %v2364 = vrot.slane %v2363, 4
    %v2365 = vadd.f32 %v2363, %v2364
    %v2366 = vrot.slane %v2365, 2
    %v2367 = vadd.f32 %v2365, %v2366
    %v2368 = vrot.slane %v2367, 1
    %v2369 = vadd.f32 %v2367, %v2368
    %v2370 = vsel %vm726, %v2328, 0.0
    %v2371 = vrot.slane %v2370, 4
    %v2372 = vadd.f32 %v2370, %v2371
    %v2373 = vrot.slane %v2372, 2
    %v2374 = vadd.f32 %v2372, %v2373
    %v2375 = vrot.slane %v2374, 1
    %v2376 = vadd.f32 %v2374, %v2375
    %v2377 = vmax.f32 %v2341, %v743
    %v2378 = vmax.f32 %v2348, %v751
    %v2379 = vmax.f32 %v2355, %v750
    %v2380 = vmax.f32 %v2362, %v752
    %v2381 = vmax.f32 %v2369, %v759
    %v2382 = vmax.f32 %v2376, %v760
    %v2383 = vsub.f32 0.0, %v2377
    %v2384 = vsub.f32 0.0, %v2378
    %v2385 = vsub.f32 0.0, %v2379
    %v2386 = vsub.f32 0.0, %v2380
    %v2387 = vsub.f32 0.0, %v2381
    %v2388 = vsub.f32 0.0, %v2382
    %v2389 = vmul.f32 %v2383, 0.5
    %v2390 = vmul.f32 %v2384, 0.5
    %v2391 = vmul.f32 %v2385, 0.5
    %v2392 = vmul.f32 %v2386, 0.5
    %v2393 = vmul.f32 %v2387, 0.5
    %v2394 = vmul.f32 %v2388, 0.5
    %v2395 = vmul.f32 %v2389, 1.442695
    %v2396 = vpow.pop %v2395
    %v2397 = vmul.f32 %v2390, 1.442695
    %v2398 = vpow.pop %v2397
    %v2399 = vmul.f32 %v2391, 1.442695
    %v2400 = vpow.pop %v2399
    %v2401 = vmul.f32 %v2392, 1.442695
    %v2402 = vpow.pop %v2401
    %v2403 = vmul.f32 %v2393, 1.442695
    %v2404 = vpow.pop %v2403
    %v2405 = vmul.f32 %v2394, 1.442695
    %v2406 = vpow.pop %v2405
    %v2407 = vsub.f32 %v536, %v2296
    %v2408 = vsub.f32 %v537, %v2297
    %v2409 = vand.u32 2147483647, %v2407
    %v2410 = vand.u32 2147483647, %v2408
    %v2413 = vcombine.high %v2409, %v2409
    %v2415 = vunpack.c.l.s4 1983009808
    %v2416 = vunpack.c.0.s8 %v2415
    %v2417 = vlaneseq
    %v2418 = vshrl.u32 %v2417, 7
    %v2419 = vsub.s32 %v2416, %v2418
    %v2420 = vrot.slane %v2409, %v2419
    %v2422 = vunpack.c.l.s4 1983009808
    %v2423 = vunpack.c.0.s8 %v2422
    %v2424 = vlaneseq
    %v2425 = vshrl.u32 %v2424, 7
    %v2426 = vsub.s32 %v2423, %v2425
    %v2427 = vrot.slane %v2413, %v2426
    %v2428 = vcombine.high %v2420, %v2420
    %v2429 = vcombine.high %v2427, %v2427
    %v2431 = vunpack.c.l.s4 1983009808
    %v2432 = vunpack.c.0.s8 %v2431
    %v2433 = vlaneseq
    %v2434 = vshrl.u32 %v2433, 7
    %v2435 = vsub.s32 %v2432, %v2434
    %v2436 = vrot.slane %v2410, %v2435
    %v2437 = vcombine.high %v2436, %v2436
    %v2444 = vmul.f32 %v2396, %v2420
    %v2445 = vmul.f32 %v2398, %v2428
    %v2446 = vmul.f32 %v2400, %v2427
    %v2447 = vmul.f32 %v2402, %v2429
    %v2448 = vmul.f32 %v2404, %v2436
    %v2449 = vmul.f32 %v2406, %v2437
    %v2450 = vadd.f32 %v2289, %v2444
    %v2451 = vadd.f32 %v2290, %v2445
    %v2452 = vadd.f32 %v2291, %v2446
    %v2453 = vadd.f32 %v2292, %v2447
    %v2454 = vadd.f32 %v2293, %v2448
    %v2455 = vadd.f32 %v2294, %v2449
    %v2456 = vsel %vm690, %v2450, 0.0
    %v2457 = vsel %vm690, %v2451, 0.0
    %v2458 = vadd.f32 %v2456, %v2457
    %v2459 = vsel %vm690, %v2452, 0.0
    %v2460 = vadd.f32 %v2458, %v2459
    %v2461 = vsel %vm690, %v2453, 0.0
    %v2462 = vadd.f32 %v2460, %v2461
    %v2463 = vsel %vm690, %v2454, 0.0
    %v2464 = vadd.f32 %v2462, %v2463
    %v2465 = vsel %vm726, %v2455, 0.0
    %v2466 = vadd.f32 %v2464, %v2465
    %2467 = vadd.xlane.f32.xlu0 %v2466
    %v2468 = vpop.xlane.xlu0 %2467
    %v2469 = vrot.slane %v2468, 4
    %v2470 = vadd.f32 %v2468, %v2469
    %v2471 = vrot.slane %v2470, 2
    %v2472 = vadd.f32 %v2470, %v2471
    %v2473 = vrot.slane %v2472, 1
    %v2474 = vadd.f32 %v2472, %v2473
    %s2475 = vtos %v2474
    %v2476 = vrcp.pop 2.0
    %s2477 = vtos %v2476
    %s2478 = smul.f32 %s2475, %s2477
    %v2479 = vsub.f32 %v533, %v536
    %v2480 = vsub.f32 %v534, %v537
    %v2481 = vmul.f32 %v2479, %v2479
    %v2482 = vmul.f32 %v2480, %v2480
    %v2485 = vcombine.high %v2481, %v2481
    %v2487 = vunpack.c.l.s4 1983009808
    %v2488 = vunpack.c.0.s8 %v2487
    %v2489 = vlaneseq
    %v2490 = vshrl.u32 %v2489, 7
    %v2491 = vsub.s32 %v2488, %v2490
    %v2492 = vrot.slane %v2481, %v2491
    %v2494 = vunpack.c.l.s4 1983009808
    %v2495 = vunpack.c.0.s8 %v2494
    %v2496 = vlaneseq
    %v2497 = vshrl.u32 %v2496, 7
    %v2498 = vsub.s32 %v2495, %v2497
    %v2499 = vrot.slane %v2485, %v2498
    %v2500 = vcombine.high %v2492, %v2492
    %v2501 = vcombine.high %v2499, %v2499
    %v2503 = vunpack.c.l.s4 1983009808
    %v2504 = vunpack.c.0.s8 %v2503
    %v2505 = vlaneseq
    %v2506 = vshrl.u32 %v2505, 7
    %v2507 = vsub.s32 %v2504, %v2506
    %v2508 = vrot.slane %v2482, %v2507
    %v2509 = vcombine.high %v2508, %v2508
    %v2516 = vsel %vm690, %v2492, 0.0
    %v2517 = vsel %vm690, %v2500, 0.0
    %v2518 = vadd.f32 %v2516, %v2517
    %v2519 = vsel %vm690, %v2499, 0.0
    %v2520 = vadd.f32 %v2518, %v2519
    %v2521 = vsel %vm690, %v2501, 0.0
    %v2522 = vadd.f32 %v2520, %v2521
    %v2523 = vsel %vm690, %v2508, 0.0
    %v2524 = vadd.f32 %v2522, %v2523
    %v2525 = vsel %vm726, %v2509, 0.0
    %v2526 = vadd.f32 %v2524, %v2525
    %2527 = vadd.xlane.f32.xlu0 %v2526
    %v2528 = vpop.xlane.xlu0 %2527
    %v2529 = vrot.slane %v2528, 4
    %v2530 = vadd.f32 %v2528, %v2529
    %v2531 = vrot.slane %v2530, 2
    %v2532 = vadd.f32 %v2530, %v2531
    %v2533 = vrot.slane %v2532, 1
    %v2534 = vadd.f32 %v2532, %v2533
    %s2535 = vtos %v2534
    %v2536 = vrcp.pop 2.0
    %s2537 = vtos %v2536
    %s2538 = smul.f32 %s2535, %s2537
    %s2539 = smul.f32 %s2538, 0.1
    %s2540 = sadd.f32 %s2478, %s2539
    %s2541 = smul.f32 %s2540, 0.0005
    %s2542 = scalar_lea.smem [#allocation10], 0
    %2543 = sst [smem:[%s2542]] %s105
    %s2544 = scalar_lea.smem [#allocation10], 1
    %2545 = sst [smem:[%s2544]] %s490
    %s2546 = scalar_lea.smem [#allocation10], 2
    %2547 = sst [smem:[%s2546]] %s2541
    %s2548 = scalar_lea.smem [#allocation10], 3
    %2549 = sst [smem:[%s2548]] %s532
    %s2550 = smul.f32 %s490, 0.01
    %s2551 = sadd.f32 %s105, %s2550
    %s2552 = sadd.f32 %s2551, %s2541
    %s2553 = smul.f32 %s532, 0.1
    %s2554 = sadd.f32 %s2552, %s2553
    %s2555 = scalar_lea.smem [#allocation10], 4
    %2556 = sst [smem:[%s2555]] %s2554
    // Predicated region
    $region34: #{tpu_custom_call.1} parent=1 // pred_check
      _
    $region35: #{tpu_custom_call.1} parent=1 // pred_check_branch
      %2558 = sbr.rel (0) target = $region37
    $region36: #{tpu_custom_call.1} parent=1 // pred_region
      %s2560 = ssub.s32 16, 16
      %2561 = vsyncadd [#allocation4], %s2560
      %2564 = dma.smem_to_hbm [#allocation10], 16, %s4, [#allocation4]
    $region37: #{tpu_custom_call.1} parent=1 // pred_fallthru
      _
    // Predicated region
    $region38: #{tpu_custom_call.1} parent=1 // pred_check
      _
    $region39: #{tpu_custom_call.1} parent=1 // pred_check_branch
      %2566 = sbr.rel (0) target = $region41
    $region40: #{tpu_custom_call.1} parent=1 // pred_region
      %2567 = dma.done [#allocation4], 16
    $region41: #{tpu_custom_call.1} parent=1 // pred_fallthru
      _
    %2568 = sfence
    %2569 = vsyncpa [#allocation3], 1
    %2570 = vsyncpa [#allocation6], 1
    %2571 = vsyncpa [#allocation9], 1
    %2572 = vsyncpa [#allocation4], 1

</llo_original>
